<compile_context>
chip_gen: v6e
topology: v6e:2x2x1
jax: 0.10.0
libtpu: 0.0.40
codegen_flags: <defaults>
</compile_context>

<pallas_src>
import functools

import jax
import jax.numpy as jnp
from jax.experimental import pallas as pl
from jax.experimental.pallas import tpu as pltpu

EXPANSION = 4
LANE = 128


def bottleneck_kernel(x_ref, w1_ref, w2_ref, w3_ref,
                      s1_ref, b1_ref, s2_ref, b2_ref, s3_ref, b3_ref,
                      out_ref, *, W, Ht):
    """Grid = (batch, H-tile). One Ht-row strip of one image per step.

    x_ref  : (H*W, Cin_p)    bf16  whole image (constant index across the tile
                                    axis -> DMA'd from HBM once per image)
    w1_ref : (Cin_p, Cm_p)   bf16  1x1 conv1 weights
    w2_ref : (9*Cm_p, Cm_p)  bf16  3x3 conv2 weights, im2col rows (kh, kw, cin)
    w3_ref : (Cm_p, Cexp_p)  bf16  1x1 conv3 weights
    s*/b*  : (1, C)          f32   folded eval-mode BatchNorm scale / shift
    out_ref: (Ht*W, Cexp_p)  bf16  output strip
    """
    HW = x_ref.shape[0]
    H = HW // W
    Cm = w1_ref.shape[1]
    HtW = Ht * W
    SW = HtW + 2 * W                       # strip + one halo row above/below

    t = pl.program_id(1)
    nT = pl.num_programs(1)

    # ---- gather the input strip with a 1-row halo (clamped at image edges) --
    i_start = t * HtW
    if HtW % 8 == 0:
        i_start = pl.multiple_of(i_start, 8)
    r_above = jnp.maximum(t * Ht - 1, 0) * W            # always a valid read
    r_below = jnp.minimum(t * Ht + Ht, H - 1) * W
    xs = jnp.concatenate(
        [x_ref[pl.ds(r_above, W), :],
         x_ref[pl.ds(i_start, HtW), :],
         x_ref[pl.ds(r_below, W), :]], axis=0)           # (SW, Cin_p) bf16

    # ---- conv1 (1x1) -> bn1 -> relu on the strip (halo rows recomputed) -----
    y1 = jnp.dot(xs, w1_ref[...], preferred_element_type=jnp.float32)
    y1 = jnp.maximum(y1 * s1_ref[0] + b1_ref[0], 0.0).astype(jnp.bfloat16)
    # Halo rows that fall outside the image must be conv2's zero padding,
    # i.e. zeros of y1 (NOT conv1(0)+bn, which is relu(b1) != 0).
    row = jax.lax.broadcasted_iota(jnp.int32, (SW, 1), 0)
    valid = jnp.logical_and(jnp.logical_or(t > 0, row >= W),
                            jnp.logical_or(t < nT - 1, row < SW - W))
    y1 = jnp.where(valid, y1, 0)

    # ---- conv2 (3x3, stride 1, pad 1) as ONE im2col matmul ------------------
    # Only 2 column masks: build the left/right column-shifted variants of the
    # whole strip once; every (kh, kw) tap is then a pure row-offset slice.
    zrow = jnp.zeros((1, Cm), jnp.bfloat16)
    w_idx = jax.lax.broadcasted_iota(jnp.int32, (SW, 1), 0) % W
    left = jnp.where(w_idx >= 1,
                     jnp.concatenate([zrow, y1[:-1, :]], axis=0), 0)
    right = jnp.where(w_idx <= W - 2,
                      jnp.concatenate([y1[1:, :], zrow], axis=0), 0)
    taps = []
    for kh in range(3):                                  # rows: (kh, kw, cin)
        sl = slice(kh * W, kh * W + HtW)
        taps += [left[sl, :], y1[sl, :], right[sl, :]]
    patches = jnp.concatenate(taps, axis=1)              # (HtW, 9*Cm) bf16

    y2 = jnp.dot(patches, w2_ref[...], preferred_element_type=jnp.float32)
    y2 = jnp.maximum(y2 * s2_ref[0] + b2_ref[0], 0.0).astype(jnp.bfloat16)

    # ---- conv3 (1x1) -> bn3 -> +identity -> relu -----------------------------
    y3 = jnp.dot(y2, w3_ref[...], preferred_element_type=jnp.float32)
    resid = x_ref[pl.ds(i_start, HtW), :].astype(jnp.float32)   # re-read here
    y3 = y3 * s3_ref[0] + b3_ref[0] + resid
    out_ref[...] = jnp.maximum(y3, 0.0).astype(out_ref.dtype)


# ----------------------------- wrapper ---------------------------------------

def _round_up(x, m):
    return (x + m - 1) // m * m


def _pad_to(a, shape):
    return jnp.pad(a, [(0, t - s) for s, t in zip(a.shape, shape)])


def _fold_bn(gamma, beta, mean, var, eps):
    s = gamma / jnp.sqrt(var + eps)
    return s, beta - mean * s


def _pick_h_tile(H, W, max_rows=1024):
    """Largest divisor of H whose strip (Ht*W rows) fits the row budget and
    keeps output blocks sublane-aligned; whole image if it already fits."""
    if H * W <= max_rows:
        return H
    best = H
    for d in range(1, H + 1):
        if H % d == 0 and d * W <= max_rows and (d * W) % 8 == 0:
            best = d
    return best


def _vmem_limit_bytes():
    # ~3/4 of physical VMEM, capped at 96 MiB (128 MiB on v5e/v6e, 64 on v7x).
    try:
        cap = int(pltpu.get_tpu_info().vmem_capacity_bytes)
    except Exception:
        cap = 128 * 1024 * 1024
    return int(min(cap * 3 // 4, 96 * 1024 * 1024))


def bottleneck_forward_nhwc(x_nhwc, w1_oihw, w2_oihw, w3_oihw,
                            bn1, bn2, bn3, eps=1e-5, h_tile=None):
    """x_nhwc: (N,H,W,Cin); weights PyTorch OIHW; bn* = (gamma,beta,mean,var).

    Returns bf16 NHWC output (callers wanting f32 cast outside)."""
    N, H, W, Cin = x_nhwc.shape
    Cm = w1_oihw.shape[0]
    Cexp = w3_oihw.shape[0]
    assert Cexp == EXPANSION * Cm
    assert Cin == Cexp, "downsample=None path needs in_channel == expansion*out_channel"

    Ht = _pick_h_tile(H, W) if h_tile is None else h_tile
    assert H % Ht == 0, "h_tile must divide H"
    assert (Ht * W) % 8 == 0 or Ht == H, "strip rows must be sublane aligned"
    nT = H // Ht
    HW, HtW = H * W, Ht * W

    Cin_p = _round_up(Cin, LANE)
    Cm_p = _round_up(Cm, LANE)
    Cexp_p = _round_up(Cexp, LANE)

    # Fold eval-mode BatchNorm into per-channel scale/shift (padded channels
    # get scale=0 / shift=0, so they stay exactly zero through the block).
    s1, b1 = _fold_bn(*bn1, eps)
    s2, b2 = _fold_bn(*bn2, eps)
    s3, b3 = _fold_bn(*bn3, eps)

    # Weights -> lane-dense matmul form (bf16).
    w1_mat = _pad_to(w1_oihw[:, :, 0, 0].T, (Cin_p, Cm_p)).astype(jnp.bfloat16)
    w2_hwio = _pad_to(jnp.transpose(w2_oihw, (2, 3, 1, 0)), (3, 3, Cm_p, Cm_p))
    w2_mat = w2_hwio.reshape(9 * Cm_p, Cm_p).astype(jnp.bfloat16)  # (kh,kw,cin) rows
    w3_mat = _pad_to(w3_oihw[:, :, 0, 0].T, (Cm_p, Cexp_p)).astype(jnp.bfloat16)

    def vec(v, c):
        return _pad_to(v.astype(jnp.float32), (c,)).reshape(1, c)

    s1p, b1p = vec(s1, Cm_p), vec(b1, Cm_p)
    s2p, b2p = vec(s2, Cm_p), vec(b2, Cm_p)
    s3p, b3p = vec(s3, Cexp_p), vec(b3, Cexp_p)

    # bf16 activation streaming + pre-flattened spatial dims (no in-kernel
    # reshape of a VMEM block).
    xp = _pad_to(x_nhwc.astype(jnp.bfloat16),
                 (N, H, W, Cin_p)).reshape(N, HW, Cin_p)

    def const_spec(shape):
        zeros = tuple(0 for _ in shape)
        # TODO(synk): pipeline_mode=pl.Buffered(1) to single-buffer these
        # constant-index operands (saves ~9 MB VMEM at the Cm=512 stage).
        def idx(n, t):
            return zeros
        return pl.BlockSpec(shape, idx)

    kernel = functools.partial(bottleneck_kernel, W=W, Ht=Ht)

    out = pl.pallas_call(
        kernel,
        out_shape=jax.ShapeDtypeStruct((N, HW, Cexp_p), jnp.bfloat16),
        grid_spec=pltpu.PrefetchScalarGridSpec(
            num_scalar_prefetch=0,
            grid=(N, nT),
            in_specs=[
                pl.BlockSpec((None, HW, Cin_p), lambda n, t: (n, 0, 0)),
                const_spec((Cin_p, Cm_p)),
                const_spec((9 * Cm_p, Cm_p)),
                const_spec((Cm_p, Cexp_p)),
                const_spec((1, Cm_p)), const_spec((1, Cm_p)),
                const_spec((1, Cm_p)), const_spec((1, Cm_p)),
                const_spec((1, Cexp_p)), const_spec((1, Cexp_p)),
            ],
            out_specs=pl.BlockSpec((None, HtW, Cexp_p), lambda n, t: (n, t, 0)),
        ),
        compiler_params=pltpu.CompilerParams(
            dimension_semantics=("parallel", "parallel"),
            vmem_limit_bytes=_vmem_limit_bytes(),
        ),
    )(xp, w1_mat, w2_mat, w3_mat, s1p, b1p, s2p, b2p, s3p, b3p)

    return out[:, :, :Cexp].reshape(N, H, W, Cexp)


def bottleneck_forward(x_nchw, w1, w2, w3, bn1, bn2, bn3, eps=1e-5, h_tile=None):
    # NOTE: NCHW<->NHWC boundary transposes are two extra HBM passes; callers
    # that already hold NHWC activations should use bottleneck_forward_nhwc.
    x = jnp.transpose(x_nchw, (0, 2, 3, 1))
    y = bottleneck_forward_nhwc(x, w1, w2, w3, bn1, bn2, bn3, eps, h_tile)
    return jnp.transpose(y, (0, 3, 1, 2))


# ----------------------------- reference -------------------------------------

def _reference_forward(x_nchw, w1, w2, w3, bn1, bn2, bn3, eps=1e-5):
    """Pure-JAX reference with the kernel's precision policy: bf16 activation
    streaming, bf16 matmuls with f32 accumulation, f32 BN / residual."""
    x = jnp.transpose(x_nchw, (0, 2, 3, 1)).astype(jnp.bfloat16).astype(jnp.float32)

    def conv(inp, w_oihw, pad):
        w = jnp.transpose(w_oihw, (2, 3, 1, 0)).astype(jnp.bfloat16)
        return jax.lax.conv_general_dilated(
            inp.astype(jnp.bfloat16), w, (1, 1), ((pad, pad), (pad, pad)),
            dimension_numbers=("NHWC", "HWIO", "NHWC"),
            preferred_element_type=jnp.float32)

    def bn(y, p):
        g, be, m, v = p
        return (y - m) / jnp.sqrt(v + eps) * g + be

    y = jnp.maximum(bn(conv(x, w1, 0), bn1), 0.0)
    y = jnp.maximum(bn(conv(y, w2, 1), bn2), 0.0)
    y = bn(conv(y, w3, 0), bn3)
    y = jnp.maximum(y + x, 0.0)
    return jnp.transpose(y, (0, 3, 1, 2))


if __name__ == "__main__":
    key = jax.random.PRNGKey(0)

    def mk_bn(c, shift):
        a = jnp.arange(c, dtype=jnp.float32)
        return (1.0 + 0.05 * a, 0.02 * a + shift, 0.01 * a, 1.0 + 0.03 * a)

    def run_case(k, N, Cmid, H, W, h_tile):
        Cin = Cmid * EXPANSION
        kx, k1, k2, k3 = jax.random.split(k, 4)
        x = jax.random.normal(kx, (N, Cin, H, W), jnp.float32)
        w1 = jax.random.normal(k1, (Cmid, Cin, 1, 1), jnp.float32) * 0.2   # OIHW
        w2 = jax.random.normal(k2, (Cmid, Cmid, 3, 3), jnp.float32) * 0.2  # OIHW
        w3 = jax.random.normal(k3, (Cin, Cmid, 1, 1), jnp.float32) * 0.2   # OIHW
        bn1, bn2, bn3 = mk_bn(Cmid, 0.0), mk_bn(Cmid, 0.01), mk_bn(Cin, -0.01)

        out = bottleneck_forward(x, w1, w2, w3, bn1, bn2, bn3, h_tile=h_tile)
        out = jax.block_until_ready(out)
        ref = _reference_forward(x, w1, w2, w3, bn1, bn2, bn3)
        assert out.shape == (N, Cin, H, W)
        outf = out.astype(jnp.float32)
        err = float(jnp.max(jnp.abs(outf - ref)))
        assert jnp.allclose(outf, ref, atol=2e-2, rtol=2e-2), (
            "mismatch (N=%d H=%d W=%d h_tile=%s), max abs err=%g"
            % (N, H, W, str(h_tile), err))

    ka, kb, kc = jax.random.split(key, 3)
    run_case(ka, N=2, Cmid=4, H=16, W=16, h_tile=8)     # 2 H-tiles per image
    run_case(kb, N=1, Cmid=4, H=8, W=16, h_tile=2)      # 4 H-tiles, batch = 1
    run_case(kc, N=2, Cmid=4, H=16, W=16, h_tile=None)  # whole-image path
    print("KERNEL_OK")
</pallas_src>

<mosaic_0001>
module attributes {stable_mosaic.version = 11 : i64} {
  func.func @bottleneck_kernel(%arg0: i32, %arg1: i32, %arg2: memref<1x256x128xbf16, #tpu.memory_space<vmem>>, %arg3: memref<128x128xbf16, #tpu.memory_space<vmem>>, %arg4: memref<1152x128xbf16, #tpu.memory_space<vmem>>, %arg5: memref<128x128xbf16, #tpu.memory_space<vmem>>, %arg6: memref<1x128xf32, #tpu.memory_space<vmem>>, %arg7: memref<1x128xf32, #tpu.memory_space<vmem>>, %arg8: memref<1x128xf32, #tpu.memory_space<vmem>>, %arg9: memref<1x128xf32, #tpu.memory_space<vmem>>, %arg10: memref<1x128xf32, #tpu.memory_space<vmem>>, %arg11: memref<1x128xf32, #tpu.memory_space<vmem>>, %arg12: memref<1x128x128xbf16, #tpu.memory_space<vmem>>) attributes {dimension_semantics = [#tpu.dimension_semantics<parallel>, #tpu.dimension_semantics<parallel>], iteration_bounds = array<i64: 2, 2>, scalar_prefetch = 0 : i64, scratch_operands = 0 : i64, tpu.core_type = #tpu.core_type<tc>, window_params = [{transform_indices = @transform_0, window_bounds = array<i64: 1, 256, 128>}, {pipeline_mode = #tpu.pipeline_mode<synchronous>, transform_indices = @transform_1, window_bounds = array<i64: 128, 128>}, {pipeline_mode = #tpu.pipeline_mode<synchronous>, transform_indices = @transform_2, window_bounds = array<i64: 1152, 128>}, {pipeline_mode = #tpu.pipeline_mode<synchronous>, transform_indices = @transform_3, window_bounds = array<i64: 128, 128>}, {pipeline_mode = #tpu.pipeline_mode<synchronous>, transform_indices = @transform_4, window_bounds = array<i64: 1, 128>}, {pipeline_mode = #tpu.pipeline_mode<synchronous>, transform_indices = @transform_5, window_bounds = array<i64: 1, 128>}, {pipeline_mode = #tpu.pipeline_mode<synchronous>, transform_indices = @transform_6, window_bounds = array<i64: 1, 128>}, {pipeline_mode = #tpu.pipeline_mode<synchronous>, transform_indices = @transform_7, window_bounds = array<i64: 1, 128>}, {pipeline_mode = #tpu.pipeline_mode<synchronous>, transform_indices = @transform_8, window_bounds = array<i64: 1, 128>}, {pipeline_mode = #tpu.pipeline_mode<synchronous>, transform_indices = @transform_9, window_bounds = array<i64: 1, 128>}, {transform_indices = @transform_10, window_bounds = array<i64: 1, 128, 128>}]} {
    %c128_i32 = arith.constant 128 : i32
    %0 = arith.muli %arg1, %c128_i32 : i32
    %1 = tpu.assume_multiple %0, 8 : i32
    %c8_i32 = arith.constant 8 : i32
    %2 = arith.muli %arg1, %c8_i32 : i32
    %c1_i32 = arith.constant 1 : i32
    %3 = arith.subi %2, %c1_i32 : i32
    %c0_i32 = arith.constant 0 : i32
    %4 = arith.maxsi %3, %c0_i32 : i32
    %c16_i32 = arith.constant 16 : i32
    %5 = arith.muli %4, %c16_i32 : i32
    %c8_i32_0 = arith.constant 8 : i32
    %6 = arith.muli %arg1, %c8_i32_0 : i32
    %c8_i32_1 = arith.constant 8 : i32
    %7 = arith.addi %6, %c8_i32_1 : i32
    %c15_i32 = arith.constant 15 : i32
    %8 = arith.minsi %7, %c15_i32 : i32
    %c16_i32_2 = arith.constant 16 : i32
    %9 = arith.muli %8, %c16_i32_2 : i32
    %c0 = arith.constant 0 : index
    %10 = arith.index_cast %5 : i32 to index
    %c0_3 = arith.constant 0 : index
    %11 = vector.load %arg2[%c0, %10, %c0_3] : memref<1x256x128xbf16, #tpu.memory_space<vmem>>, vector<1x16x128xbf16>
    %12 = vector.shape_cast %11 : vector<1x16x128xbf16> to vector<16x128xbf16>
    %c0_4 = arith.constant 0 : index
    %13 = arith.index_cast %1 : i32 to index
    %c0_5 = arith.constant 0 : index
    %14 = vector.load %arg2[%c0_4, %13, %c0_5] : memref<1x256x128xbf16, #tpu.memory_space<vmem>>, vector<1x128x128xbf16>
    %15 = vector.shape_cast %14 : vector<1x128x128xbf16> to vector<128x128xbf16>
    %c0_6 = arith.constant 0 : index
    %16 = arith.index_cast %9 : i32 to index
    %c0_7 = arith.constant 0 : index
    %17 = vector.load %arg2[%c0_6, %16, %c0_7] : memref<1x256x128xbf16, #tpu.memory_space<vmem>>, vector<1x16x128xbf16>
    %18 = vector.shape_cast %17 : vector<1x16x128xbf16> to vector<16x128xbf16>
    %19 = tpu.concatenate %12, %15, %18 in 0 : vector<16x128xbf16>, vector<128x128xbf16>, vector<16x128xbf16> -> vector<160x128xbf16>
    %c0_8 = arith.constant 0 : index
    %c0_9 = arith.constant 0 : index
    %20 = vector.load %arg3[%c0_8, %c0_9] : memref<128x128xbf16, #tpu.memory_space<vmem>>, vector<128x128xbf16>
    %cst = arith.constant dense<0.000000e+00> : vector<160x128xf32>
    %21 = tpu.matmul %19, %20, %cst {dimension_numbers = #tpu.dot_dimension_numbers<[1], [0], [0], [1], [0, 0, 1, 1], [], []>} : vector<160x128xbf16>, vector<128x128xbf16>, vector<160x128xf32> -> vector<160x128xf32>
    %c0_10 = arith.constant 0 : index
    %c0_11 = arith.constant 0 : index
    %22 = vector.load %arg6[%c0_10, %c0_11] : memref<1x128xf32, #tpu.memory_space<vmem>>, vector<1x128xf32>
    %23 = vector.shape_cast %22 : vector<1x128xf32> to vector<128xf32>
    %24 = vector.shape_cast %23 : vector<128xf32> to vector<1x128xf32>
    %25 = vector.broadcast %24 : vector<1x128xf32> to vector<160x128xf32>
    %26 = arith.mulf %21, %25 : vector<160x128xf32>
    %c0_12 = arith.constant 0 : index
    %c0_13 = arith.constant 0 : index
    %27 = vector.load %arg7[%c0_12, %c0_13] : memref<1x128xf32, #tpu.memory_space<vmem>>, vector<1x128xf32>
    %28 = vector.shape_cast %27 : vector<1x128xf32> to vector<128xf32>
    %29 = vector.shape_cast %28 : vector<128xf32> to vector<1x128xf32>
    %30 = vector.broadcast %29 : vector<1x128xf32> to vector<160x128xf32>
    %31 = arith.addf %26, %30 : vector<160x128xf32>
    %cst_14 = arith.constant 0.000000e+00 : f32
    %32 = vector.broadcast %cst_14 : f32 to vector<160x128xf32>
    %33 = arith.maximumf %31, %32 : vector<160x128xf32>
    %34 = arith.truncf %33 : vector<160x128xf32> to vector<160x128xbf16>
    %35 = tpu.iota {dimensions = array<i32: 0>} : vector<160x1xi32>
    %c0_i32_15 = arith.constant 0 : i32
    %36 = arith.cmpi sgt, %arg1, %c0_i32_15 : i32
    %c16_i32_16 = arith.constant 16 : i32
    %37 = vector.broadcast %c16_i32_16 : i32 to vector<160x1xi32>
    %38 = arith.cmpi sge, %35, %37 : vector<160x1xi32>
    %39 = vector.broadcast %36 : i1 to vector<160x1xi1>
    %40 = arith.ori %39, %38 : vector<160x1xi1>
    %c1_i32_17 = arith.constant 1 : i32
    %41 = arith.cmpi slt, %arg1, %c1_i32_17 : i32
    %c144_i32 = arith.constant 144 : i32
    %42 = vector.broadcast %c144_i32 : i32 to vector<160x1xi32>
    %43 = arith.cmpi slt, %35, %42 : vector<160x1xi32>
    %44 = vector.broadcast %41 : i1 to vector<160x1xi1>
    %45 = arith.ori %44, %43 : vector<160x1xi1>
    %46 = arith.andi %40, %45 : vector<160x1xi1>
    %c0_i32_18 = arith.constant 0 : i32
    %47 = arith.sitofp %c0_i32_18 : i32 to bf16
    %48 = vector.shape_cast %46 : vector<160x1xi1> to vector<160x1xi1>
    %49 = vector.broadcast %48 : vector<160x1xi1> to vector<160x128xi1>
    %50 = vector.broadcast %47 : bf16 to vector<160x128xbf16>
    %51 = arith.select %49, %34, %50 : vector<160x128xi1>, vector<160x128xbf16>
    %cst_19 = arith.constant 0.000000e+00 : bf16
    %52 = vector.broadcast %cst_19 : bf16 to vector<1x128xbf16>
    %53 = tpu.iota {dimensions = array<i32: 0>} : vector<160x1xi32>
    %c16_i32_20 = arith.constant 16 : i32
    %c0_i32_21 = arith.constant 0 : i32
    %54 = arith.cmpi eq, %c16_i32_20, %c0_i32_21 : i32
    %c1_i32_22 = arith.constant 1 : i32
    %55 = arith.select %54, %c1_i32_22, %c16_i32_20 : i32
    %56 = vector.broadcast %55 : i32 to vector<160x1xi32>
    %57 = arith.remsi %53, %56 : vector<160x1xi32>
    %c0_i32_23 = arith.constant 0 : i32
    %58 = vector.broadcast %c0_i32_23 : i32 to vector<160x1xi32>
    %59 = arith.cmpi ne, %57, %58 : vector<160x1xi32>
    %c0_i32_24 = arith.constant 0 : i32
    %60 = vector.broadcast %c0_i32_24 : i32 to vector<160x1xi32>
    %61 = arith.cmpi slt, %57, %60 : vector<160x1xi32>
    %c0_i32_25 = arith.constant 0 : i32
    %62 = arith.cmpi slt, %55, %c0_i32_25 : i32
    %63 = vector.broadcast %62 : i1 to vector<160x1xi1>
    %64 = vector.broadcast %63 : vector<160x1xi1> to vector<160x1xi1>
    %65 = arith.xori %61, %64 : vector<160x1xi1>
    %66 = arith.andi %65, %59 : vector<160x1xi1>
    %67 = vector.broadcast %55 : i32 to vector<160x1xi32>
    %68 = arith.addi %57, %67 : vector<160x1xi32>
    %69 = arith.select %66, %68, %57 : vector<160x1xi1>, vector<160x1xi32>
    %c1_i32_26 = arith.constant 1 : i32
    %70 = vector.broadcast %c1_i32_26 : i32 to vector<160x1xi32>
    %71 = arith.cmpi sge, %69, %70 : vector<160x1xi32>
    %72 = vector.extract_strided_slice %51 {offsets = [0, 0], sizes = [159, 128], strides = [1, 1]} : vector<160x128xbf16> to vector<159x128xbf16>
    %73 = tpu.concatenate %52, %72 in 0 : vector<1x128xbf16>, vector<159x128xbf16> -> vector<160x128xbf16>
    %c0_i32_27 = arith.constant 0 : i32
    %74 = arith.sitofp %c0_i32_27 : i32 to bf16
    %75 = vector.shape_cast %71 : vector<160x1xi1> to vector<160x1xi1>
    %76 = vector.broadcast %75 : vector<160x1xi1> to vector<160x128xi1>
    %77 = vector.broadcast %74 : bf16 to vector<160x128xbf16>
    %78 = arith.select %76, %73, %77 : vector<160x128xi1>, vector<160x128xbf16>
    %c14_i32 = arith.constant 14 : i32
    %79 = vector.broadcast %c14_i32 : i32 to vector<160x1xi32>
    %80 = arith.cmpi sle, %69, %79 : vector<160x1xi32>
    %81 = vector.extract_strided_slice %51 {offsets = [1, 0], sizes = [159, 128], strides = [1, 1]} : vector<160x128xbf16> to vector<159x128xbf16>
    %82 = tpu.concatenate %81, %52 in 0 : vector<159x128xbf16>, vector<1x128xbf16> -> vector<160x128xbf16>
    %c0_i32_28 = arith.constant 0 : i32
    %83 = arith.sitofp %c0_i32_28 : i32 to bf16
    %84 = vector.shape_cast %80 : vector<160x1xi1> to vector<160x1xi1>
    %85 = vector.broadcast %84 : vector<160x1xi1> to vector<160x128xi1>
    %86 = vector.broadcast %83 : bf16 to vector<160x128xbf16>
    %87 = arith.select %85, %82, %86 : vector<160x128xi1>, vector<160x128xbf16>
    %88 = vector.extract_strided_slice %78 {offsets = [0, 0], sizes = [128, 128], strides = [1, 1]} : vector<160x128xbf16> to vector<128x128xbf16>
    %89 = vector.extract_strided_slice %51 {offsets = [0, 0], sizes = [128, 128], strides = [1, 1]} : vector<160x128xbf16> to vector<128x128xbf16>
    %90 = vector.extract_strided_slice %87 {offsets = [0, 0], sizes = [128, 128], strides = [1, 1]} : vector<160x128xbf16> to vector<128x128xbf16>
    %91 = vector.extract_strided_slice %78 {offsets = [16, 0], sizes = [128, 128], strides = [1, 1]} : vector<160x128xbf16> to vector<128x128xbf16>
    %92 = vector.extract_strided_slice %51 {offsets = [16, 0], sizes = [128, 128], strides = [1, 1]} : vector<160x128xbf16> to vector<128x128xbf16>
    %93 = vector.extract_strided_slice %87 {offsets = [16, 0], sizes = [128, 128], strides = [1, 1]} : vector<160x128xbf16> to vector<128x128xbf16>
    %94 = vector.extract_strided_slice %78 {offsets = [32, 0], sizes = [128, 128], strides = [1, 1]} : vector<160x128xbf16> to vector<128x128xbf16>
    %95 = vector.extract_strided_slice %51 {offsets = [32, 0], sizes = [128, 128], strides = [1, 1]} : vector<160x128xbf16> to vector<128x128xbf16>
    %96 = vector.extract_strided_slice %87 {offsets = [32, 0], sizes = [128, 128], strides = [1, 1]} : vector<160x128xbf16> to vector<128x128xbf16>
    %97 = tpu.concatenate %88, %89, %90, %91, %92, %93, %94, %95, %96 in 1 : vector<128x128xbf16>, vector<128x128xbf16>, vector<128x128xbf16>, vector<128x128xbf16>, vector<128x128xbf16>, vector<128x128xbf16>, vector<128x128xbf16>, vector<128x128xbf16>, vector<128x128xbf16> -> vector<128x1152xbf16>
    %c0_29 = arith.constant 0 : index
    %c0_30 = arith.constant 0 : index
    %98 = vector.load %arg4[%c0_29, %c0_30] : memref<1152x128xbf16, #tpu.memory_space<vmem>>, vector<1152x128xbf16>
    %cst_31 = arith.constant dense<0.000000e+00> : vector<128x128xf32>
    %99 = tpu.matmul %97, %98, %cst_31 {dimension_numbers = #tpu.dot_dimension_numbers<[1], [0], [0], [1], [0, 0, 1, 1], [], []>} : vector<128x1152xbf16>, vector<1152x128xbf16>, vector<128x128xf32> -> vector<128x128xf32>
    %c0_32 = arith.constant 0 : index
    %c0_33 = arith.constant 0 : index
    %100 = vector.load %arg8[%c0_32, %c0_33] : memref<1x128xf32, #tpu.memory_space<vmem>>, vector<1x128xf32>
    %101 = vector.shape_cast %100 : vector<1x128xf32> to vector<128xf32>
    %102 = vector.shape_cast %101 : vector<128xf32> to vector<1x128xf32>
    %103 = vector.broadcast %102 : vector<1x128xf32> to vector<128x128xf32>
    %104 = arith.mulf %99, %103 : vector<128x128xf32>
    %c0_34 = arith.constant 0 : index
    %c0_35 = arith.constant 0 : index
    %105 = vector.load %arg9[%c0_34, %c0_35] : memref<1x128xf32, #tpu.memory_space<vmem>>, vector<1x128xf32>
    %106 = vector.shape_cast %105 : vector<1x128xf32> to vector<128xf32>
    %107 = vector.shape_cast %106 : vector<128xf32> to vector<1x128xf32>
    %108 = vector.broadcast %107 : vector<1x128xf32> to vector<128x128xf32>
    %109 = arith.addf %104, %108 : vector<128x128xf32>
    %cst_36 = arith.constant 0.000000e+00 : f32
    %110 = vector.broadcast %cst_36 : f32 to vector<128x128xf32>
    %111 = arith.maximumf %109, %110 : vector<128x128xf32>
    %112 = arith.truncf %111 : vector<128x128xf32> to vector<128x128xbf16>
    %c0_37 = arith.constant 0 : index
    %c0_38 = arith.constant 0 : index
    %113 = vector.load %arg5[%c0_37, %c0_38] : memref<128x128xbf16, #tpu.memory_space<vmem>>, vector<128x128xbf16>
    %cst_39 = arith.constant dense<0.000000e+00> : vector<128x128xf32>
    %114 = tpu.matmul %112, %113, %cst_39 {dimension_numbers = #tpu.dot_dimension_numbers<[1], [0], [0], [1], [0, 0, 1, 1], [], []>} : vector<128x128xbf16>, vector<128x128xbf16>, vector<128x128xf32> -> vector<128x128xf32>
    %c0_40 = arith.constant 0 : index
    %115 = arith.index_cast %1 : i32 to index
    %c0_41 = arith.constant 0 : index
    %116 = vector.load %arg2[%c0_40, %115, %c0_41] : memref<1x256x128xbf16, #tpu.memory_space<vmem>>, vector<1x128x128xbf16>
    %117 = vector.shape_cast %116 : vector<1x128x128xbf16> to vector<128x128xbf16>
    %118 = arith.extf %117 : vector<128x128xbf16> to vector<128x128xf32>
    %c0_42 = arith.constant 0 : index
    %c0_43 = arith.constant 0 : index
    %119 = vector.load %arg10[%c0_42, %c0_43] : memref<1x128xf32, #tpu.memory_space<vmem>>, vector<1x128xf32>
    %120 = vector.shape_cast %119 : vector<1x128xf32> to vector<128xf32>
    %121 = vector.shape_cast %120 : vector<128xf32> to vector<1x128xf32>
    %122 = vector.broadcast %121 : vector<1x128xf32> to vector<128x128xf32>
    %123 = arith.mulf %114, %122 : vector<128x128xf32>
    %c0_44 = arith.constant 0 : index
    %c0_45 = arith.constant 0 : index
    %124 = vector.load %arg11[%c0_44, %c0_45] : memref<1x128xf32, #tpu.memory_space<vmem>>, vector<1x128xf32>
    %125 = vector.shape_cast %124 : vector<1x128xf32> to vector<128xf32>
    %126 = vector.shape_cast %125 : vector<128xf32> to vector<1x128xf32>
    %127 = vector.broadcast %126 : vector<1x128xf32> to vector<128x128xf32>
    %128 = arith.addf %123, %127 : vector<128x128xf32>
    %129 = arith.addf %128, %118 : vector<128x128xf32>
    %cst_46 = arith.constant 0.000000e+00 : f32
    %130 = vector.broadcast %cst_46 : f32 to vector<128x128xf32>
    %131 = arith.maximumf %129, %130 : vector<128x128xf32>
    %132 = arith.truncf %131 : vector<128x128xf32> to vector<128x128xbf16>
    %c0_47 = arith.constant 0 : index
    %c0_48 = arith.constant 0 : index
    %c0_49 = arith.constant 0 : index
    %133 = vector.load %arg12[%c0_47, %c0_48, %c0_49] : memref<1x128x128xbf16, #tpu.memory_space<vmem>>, vector<1x128x128xbf16>
    %134 = vector.shape_cast %133 : vector<1x128x128xbf16> to vector<128x128xbf16>
    %135 = vector.shape_cast %132 : vector<128x128xbf16> to vector<1x128x128xbf16>
    tpu.vector_store %arg12[%c0_47, %c0_48, %c0_49], %135 {strides = array<i32>} : memref<1x128x128xbf16, #tpu.memory_space<vmem>>, vector<1x128x128xbf16>,
    return
  }
  func.func @transform_0(%arg0: i32, %arg1: i32) -> (i32, i32, i32) {
    %c0_i32 = arith.constant 0 : i32
    %c0_i32_0 = arith.constant 0 : i32
    %c0_i32_1 = arith.constant 0 : i32
    return %arg0, %c0_i32, %c0_i32_0 : i32, i32, i32
  }
  func.func @transform_1(%arg0: i32, %arg1: i32) -> (i32, i32) {
    %c0_i32 = arith.constant 0 : i32
    %c0_i32_0 = arith.constant 0 : i32
    %c0_i32_1 = arith.constant 0 : i32
    return %c0_i32, %c0_i32_0 : i32, i32
  }
  func.func @transform_2(%arg0: i32, %arg1: i32) -> (i32, i32) {
    %c0_i32 = arith.constant 0 : i32
    %c0_i32_0 = arith.constant 0 : i32
    %c0_i32_1 = arith.constant 0 : i32
    return %c0_i32, %c0_i32_0 : i32, i32
  }
  func.func @transform_3(%arg0: i32, %arg1: i32) -> (i32, i32) {
    %c0_i32 = arith.constant 0 : i32
    %c0_i32_0 = arith.constant 0 : i32
    %c0_i32_1 = arith.constant 0 : i32
    return %c0_i32, %c0_i32_0 : i32, i32
  }
  func.func @transform_4(%arg0: i32, %arg1: i32) -> (i32, i32) {
    %c0_i32 = arith.constant 0 : i32
    %c0_i32_0 = arith.constant 0 : i32
    %c0_i32_1 = arith.constant 0 : i32
    return %c0_i32, %c0_i32_0 : i32, i32
  }
  func.func @transform_5(%arg0: i32, %arg1: i32) -> (i32, i32) {
    %c0_i32 = arith.constant 0 : i32
    %c0_i32_0 = arith.constant 0 : i32
    %c0_i32_1 = arith.constant 0 : i32
    return %c0_i32, %c0_i32_0 : i32, i32
  }
  func.func @transform_6(%arg0: i32, %arg1: i32) -> (i32, i32) {
    %c0_i32 = arith.constant 0 : i32
    %c0_i32_0 = arith.constant 0 : i32
    %c0_i32_1 = arith.constant 0 : i32
    return %c0_i32, %c0_i32_0 : i32, i32
  }
  func.func @transform_7(%arg0: i32, %arg1: i32) -> (i32, i32) {
    %c0_i32 = arith.constant 0 : i32
    %c0_i32_0 = arith.constant 0 : i32
    %c0_i32_1 = arith.constant 0 : i32
    return %c0_i32, %c0_i32_0 : i32, i32
  }
  func.func @transform_8(%arg0: i32, %arg1: i32) -> (i32, i32) {
    %c0_i32 = arith.constant 0 : i32
    %c0_i32_0 = arith.constant 0 : i32
    %c0_i32_1 = arith.constant 0 : i32
    return %c0_i32, %c0_i32_0 : i32, i32
  }
  func.func @transform_9(%arg0: i32, %arg1: i32) -> (i32, i32) {
    %c0_i32 = arith.constant 0 : i32
    %c0_i32_0 = arith.constant 0 : i32
    %c0_i32_1 = arith.constant 0 : i32
    return %c0_i32, %c0_i32_0 : i32, i32
  }
  func.func @transform_10(%arg0: i32, %arg1: i32) -> (i32, i32, i32) {
    %c0_i32 = arith.constant 0 : i32
    %c0_i32_0 = arith.constant 0 : i32
    return %arg0, %arg1, %c0_i32 : i32, i32, i32
  }
}

</mosaic_0001>

<llo_original>
// kernel: tpu_custom_call.1
$region0: #{tpu_custom_call.1}
  #allocation0 [shape = 'u32[]', space=smem, size = 0x4, offset = 0x4, fixed_abs, tag = 'smem constant byte address 0x4 - core index']
  #allocation1 [shape = 'u32[144,128]{1,0:T(1,128)}', space=vmem, size = 0x12000, scoped, tag = 'internal scratch']
  %s0 = inlined_call_operand.hbm [shape: bf16[2,256,128], index: 0, kind: input, shape index: {}]
  %s1 = inlined_call_operand.hbm [shape: bf16[128,128], index: 1, kind: input, shape index: {}]
  %s2 = inlined_call_operand.hbm [shape: bf16[1152,128], index: 2, kind: input, shape index: {}]
  %s3 = inlined_call_operand.hbm [shape: bf16[128,128], index: 3, kind: input, shape index: {}]
  %s4 = inlined_call_operand.vmem [shape: f32[1,128], index: 4, kind: input, shape index: {}]
  %s5 = inlined_call_operand.vmem [shape: f32[1,128], index: 5, kind: input, shape index: {}]
  %s6 = inlined_call_operand.vmem [shape: f32[1,128], index: 6, kind: input, shape index: {}]
  %s7 = inlined_call_operand.vmem [shape: f32[1,128], index: 7, kind: input, shape index: {}]
  %s8 = inlined_call_operand.vmem [shape: f32[1,128], index: 8, kind: input, shape index: {}]
  %s9 = inlined_call_operand.vmem [shape: f32[1,128], index: 9, kind: input, shape index: {}]
  %s10 = inlined_call_operand.hbm [shape: bf16[2,256,128], index: 10, kind: output, shape index: {}]
  %s11 = sld [smem:[#allocation0]]
  $region89: #{tpu_custom_call.1} parent=0
    _
  %s13 = ssub.s32 1, %s11
  %s14 = scalar_select 0, %s13, %s11
  $region1: #{tpu_custom_call.1} parent=0
    #allocation2 [shape = 'u8[131072]{0}', space=vmem, size = 0x20000, scoped, tag = 'input window, operand 0']
    #allocation3 [shape = 's32[2]{0}', space=sflag, size = 0x8, scoped, tag = 'scoped memory for tpu_custom_call.1']
    #allocation4 [shape = 's32[2]{0}', space=sflag, size = 0x8, scoped, tag = 'scoped memory for tpu_custom_call.1']
    #allocation5 [shape = 'u8[32768]{0}', space=vmem, size = 0x8000, scoped, tag = 'input window, operand 1, single buffered']
    #allocation6 [shape = 's32[1]{0}', space=sflag, size = 0x4, scoped, tag = 'scoped memory for tpu_custom_call.1']
    #allocation7 [shape = 'u8[294912]{0}', space=vmem, size = 0x48000, scoped, tag = 'input window, operand 2, single buffered']
    #allocation8 [shape = 'u8[32768]{0}', space=vmem, size = 0x8000, scoped, tag = 'input window, operand 3, single buffered']
    #allocation9 [shape = 's32[1]{0}', space=sflag, size = 0x4, scoped, tag = 'scoped memory for tpu_custom_call.1']
    #allocation10 [shape = 'u8[65536]{0}', space=vmem, size = 0x10000, scoped, tag = 'output window, operand 0']
    %15 = vsyncpa [#allocation3], 0
    %s16 = scalar_lea.sflag [#allocation3], 1
    %17 = vsyncpa %s16, 0
    %18 = vsyncpa [#allocation6], 0
    %19 = vsyncpa [#allocation9], 0
    %20 = vsyncpa [#allocation4], 0
    %s21 = scalar_lea.sflag [#allocation4], 1
    %22 = vsyncpa %s21, 0
    loop: start=0, step=1, limit=6
    $region2: #{tpu_custom_call.1} parent=1 // loop_pre_header
      _
    $region3: #{tpu_custom_call.1} parent=1 // loop_header
      %s24 = sphi 0, %s28
      %p25 = scmp.ge.s32.totalorder %s24, 6
      %s31 = sphi 0, %s43
      %s32 = sphi 0, %s39
      %s33 = sphi 0, %s31
      %s34 = sphi 0, %s32
      %s35 = sphi 0, %s33
      %s36 = sphi 0, %s34
      %s46 = sphi 0, %s48
      %s49 = sphi 0, %s46
      %s50 = sphi 0, %s49
      %s66 = sphi 0, %s50
      %s70 = sphi 0, %s70
      %s72 = sphi 0, %s70
      %s73 = sphi 0, %s72
      %s87 = sphi 0, %s73
      %s91 = sphi 0, %s91
      %s93 = sphi 0, %s91
      %s94 = sphi 0, %s93
      %s108 = sphi 0, %s94
      %s112 = sphi 0, %s112
      %s114 = sphi 0, %s112
      %s115 = sphi 0, %s114
      %s129 = sphi 0, %s115
      %s133 = sphi 0, %s133
      %s135 = sphi 0, %s133
      %s136 = sphi 0, %s135
      %s150 = sphi 0, %s136
      %s154 = sphi 0, %s154
      %s156 = sphi 0, %s154
      %s157 = sphi 0, %s156
      %s171 = sphi 0, %s157
      %s175 = sphi 0, %s175
      %s177 = sphi 0, %s175
      %s178 = sphi 0, %s177
      %s192 = sphi 0, %s178
      %s196 = sphi 0, %s196
      %s198 = sphi 0, %s196
      %s199 = sphi 0, %s198
      %s213 = sphi 0, %s199
      %s217 = sphi 0, %s217
      %s219 = sphi 0, %s217
      %s220 = sphi 0, %s219
      %s234 = sphi 0, %s220
      %s238 = sphi 0, %s238
      %s240 = sphi 0, %s238
      %s241 = sphi 0, %s240
      %s255 = sphi 0, %s241
      %s263 = sphi 0, %s265
      %s266 = sphi 0, %s263
      %s267 = sphi 0, %s266
      %s283 = sphi 0, %s267
    $region4: #{tpu_custom_call.1} parent=1 // loop_header_branch
      %27 = sbr.rel (%p25) target = $region8
    $region5: #{tpu_custom_call.1} parent=1 // loop_body
      %s29 = ssub.s32 %s24, 1
      %s30 = ssub.s32 %s24, 2
      %s37 = sadd.s32 1, %s32
      %p38 = scmp.ge.s32.totalorder %s37, 2
      %s39 = scalar_select %p38, 0, %s37
      %s40 = sadd.s32 1, %s31
      %s41 = scalar_select %p38, %s40, %s31
      %p42 = scmp.ge.s32.totalorder %s41, 2
      %s43 = scalar_select %p42, 0, %s41
      %s44 = ssub.s32 %s31, %s43
      %p45 = scmp.eq.s32.totalorder %s44, 0
      %s47 = sadd.s32 %s46, 1
      %s48 = scalar_select %p45, %s46, %s47
      %p51 = pneg %p45
      %p52 = scmp.eq.s32.totalorder %s24, 3
      %p53 = por %p51, %p52
      %p54 = scmp.ne.s32.totalorder %s46, %s49
      %p55 = scmp.eq.s32.totalorder %s24, 0
      %p56 = por %p54, %p55
      %p57 = scmp.ne.s32.totalorder %s46, %s49
      %p58 = scmp.eq.s32.totalorder %s29, 3
      %p59 = por %p57, %p58
      %p60 = scmp.ne.s32.totalorder %s49, %s50
      %p61 = scmp.eq.s32.totalorder %s29, 0
      %p62 = por %p60, %p61
      %p63 = scmp.ne.s32.totalorder %s49, %s50
      %p64 = scmp.eq.s32.totalorder %s30, 3
      %p65 = por %p63, %p64
      %p67 = scmp.ne.s32.totalorder %s50, %s66
      %p68 = scmp.eq.s32.totalorder %s30, 0
      %p69 = por %p67, %p68
      %s71 = sadd.s32 %s70, 1
      %p74 = scmp.eq.s32.totalorder %s24, 3
      %p75 = scmp.ne.s32.totalorder %s70, %s72
      %p76 = scmp.eq.s32.totalorder %s24, 0
      %p77 = por %p75, %p76
      %p78 = scmp.ne.s32.totalorder %s70, %s72
      %p79 = scmp.eq.s32.totalorder %s29, 3
      %p80 = por %p78, %p79
      %p81 = scmp.ne.s32.totalorder %s72, %s73
      %p82 = scmp.eq.s32.totalorder %s29, 0
      %p83 = por %p81, %p82
      %p84 = scmp.ne.s32.totalorder %s72, %s73
      %p85 = scmp.eq.s32.totalorder %s30, 3
      %p86 = por %p84, %p85
      %p88 = scmp.ne.s32.totalorder %s73, %s87
      %p89 = scmp.eq.s32.totalorder %s30, 0
      %p90 = por %p88, %p89
      %s92 = sadd.s32 %s91, 1
      %p95 = scmp.eq.s32.totalorder %s24, 3
      %p96 = scmp.ne.s32.totalorder %s91, %s93
      %p97 = scmp.eq.s32.totalorder %s24, 0
      %p98 = por %p96, %p97
      %p99 = scmp.ne.s32.totalorder %s91, %s93
      %p100 = scmp.eq.s32.totalorder %s29, 3
      %p101 = por %p99, %p100
      %p102 = scmp.ne.s32.totalorder %s93, %s94
      %p103 = scmp.eq.s32.totalorder %s29, 0
      %p104 = por %p102, %p103
      %p105 = scmp.ne.s32.totalorder %s93, %s94
      %p106 = scmp.eq.s32.totalorder %s30, 3
      %p107 = por %p105, %p106
      %p109 = scmp.ne.s32.totalorder %s94, %s108
      %p110 = scmp.eq.s32.totalorder %s30, 0
      %p111 = por %p109, %p110
      %s113 = sadd.s32 %s112, 1
      %p116 = scmp.eq.s32.totalorder %s24, 3
      %p117 = scmp.ne.s32.totalorder %s112, %s114
      %p118 = scmp.eq.s32.totalorder %s24, 0
      %p119 = por %p117, %p118
      %p120 = scmp.ne.s32.totalorder %s112, %s114
      %p121 = scmp.eq.s32.totalorder %s29, 3
      %p122 = por %p120, %p121
      %p123 = scmp.ne.s32.totalorder %s114, %s115
      %p124 = scmp.eq.s32.totalorder %s29, 0
      %p125 = por %p123, %p124
      %p126 = scmp.ne.s32.totalorder %s114, %s115
      %p127 = scmp.eq.s32.totalorder %s30, 3
      %p128 = por %p126, %p127
      %p130 = scmp.ne.s32.totalorder %s115, %s129
      %p131 = scmp.eq.s32.totalorder %s30, 0
      %p132 = por %p130, %p131
      %s134 = sadd.s32 %s133, 1
      %p137 = scmp.eq.s32.totalorder %s24, 3
      %p138 = scmp.ne.s32.totalorder %s133, %s135
      %p139 = scmp.eq.s32.totalorder %s24, 0
      %p140 = por %p138, %p139
      %p141 = scmp.ne.s32.totalorder %s133, %s135
      %p142 = scmp.eq.s32.totalorder %s29, 3
      %p143 = por %p141, %p142
      %p144 = scmp.ne.s32.totalorder %s135, %s136
      %p145 = scmp.eq.s32.totalorder %s29, 0
      %p146 = por %p144, %p145
      %p147 = scmp.ne.s32.totalorder %s135, %s136
      %p148 = scmp.eq.s32.totalorder %s30, 3
      %p149 = por %p147, %p148
      %p151 = scmp.ne.s32.totalorder %s136, %s150
      %p152 = scmp.eq.s32.totalorder %s30, 0
      %p153 = por %p151, %p152
      %s155 = sadd.s32 %s154, 1
      %p158 = scmp.eq.s32.totalorder %s24, 3
      %p159 = scmp.ne.s32.totalorder %s154, %s156
      %p160 = scmp.eq.s32.totalorder %s24, 0
      %p161 = por %p159, %p160
      %p162 = scmp.ne.s32.totalorder %s154, %s156
      %p163 = scmp.eq.s32.totalorder %s29, 3
      %p164 = por %p162, %p163
      %p165 = scmp.ne.s32.totalorder %s156, %s157
      %p166 = scmp.eq.s32.totalorder %s29, 0
      %p167 = por %p165, %p166
      %p168 = scmp.ne.s32.totalorder %s156, %s157
      %p169 = scmp.eq.s32.totalorder %s30, 3
      %p170 = por %p168, %p169
      %p172 = scmp.ne.s32.totalorder %s157, %s171
      %p173 = scmp.eq.s32.totalorder %s30, 0
      %p174 = por %p172, %p173
      %s176 = sadd.s32 %s175, 1
      %p179 = scmp.eq.s32.totalorder %s24, 3
      %p180 = scmp.ne.s32.totalorder %s175, %s177
      %p181 = scmp.eq.s32.totalorder %s24, 0
      %p182 = por %p180, %p181
      %p183 = scmp.ne.s32.totalorder %s175, %s177
      %p184 = scmp.eq.s32.totalorder %s29, 3
      %p185 = por %p183, %p184
      %p186 = scmp.ne.s32.totalorder %s177, %s178
      %p187 = scmp.eq.s32.totalorder %s29, 0
      %p188 = por %p186, %p187
      %p189 = scmp.ne.s32.totalorder %s177, %s178
      %p190 = scmp.eq.s32.totalorder %s30, 3
      %p191 = por %p189, %p190
      %p193 = scmp.ne.s32.totalorder %s178, %s192
      %p194 = scmp.eq.s32.totalorder %s30, 0
      %p195 = por %p193, %p194
      %s197 = sadd.s32 %s196, 1
      %p200 = scmp.eq.s32.totalorder %s24, 3
      %p201 = scmp.ne.s32.totalorder %s196, %s198
      %p202 = scmp.eq.s32.totalorder %s24, 0
      %p203 = por %p201, %p202
      %p204 = scmp.ne.s32.totalorder %s196, %s198
      %p205 = scmp.eq.s32.totalorder %s29, 3
      %p206 = por %p204, %p205
      %p207 = scmp.ne.s32.totalorder %s198, %s199
      %p208 = scmp.eq.s32.totalorder %s29, 0
      %p209 = por %p207, %p208
      %p210 = scmp.ne.s32.totalorder %s198, %s199
      %p211 = scmp.eq.s32.totalorder %s30, 3
      %p212 = por %p210, %p211
      %p214 = scmp.ne.s32.totalorder %s199, %s213
      %p215 = scmp.eq.s32.totalorder %s30, 0
      %p216 = por %p214, %p215
      %s218 = sadd.s32 %s217, 1
      %p221 = scmp.eq.s32.totalorder %s24, 3
      %p222 = scmp.ne.s32.totalorder %s217, %s219
      %p223 = scmp.eq.s32.totalorder %s24, 0
      %p224 = por %p222, %p223
      %p225 = scmp.ne.s32.totalorder %s217, %s219
      %p226 = scmp.eq.s32.totalorder %s29, 3
      %p227 = por %p225, %p226
      %p228 = scmp.ne.s32.totalorder %s219, %s220
      %p229 = scmp.eq.s32.totalorder %s29, 0
      %p230 = por %p228, %p229
      %p231 = scmp.ne.s32.totalorder %s219, %s220
      %p232 = scmp.eq.s32.totalorder %s30, 3
      %p233 = por %p231, %p232
      %p235 = scmp.ne.s32.totalorder %s220, %s234
      %p236 = scmp.eq.s32.totalorder %s30, 0
      %p237 = por %p235, %p236
      %s239 = sadd.s32 %s238, 1
      %p242 = scmp.eq.s32.totalorder %s24, 3
      %p243 = scmp.ne.s32.totalorder %s238, %s240
      %p244 = scmp.eq.s32.totalorder %s24, 0
      %p245 = por %p243, %p244
      %p246 = scmp.ne.s32.totalorder %s238, %s240
      %p247 = scmp.eq.s32.totalorder %s29, 3
      %p248 = por %p246, %p247
      %p249 = scmp.ne.s32.totalorder %s240, %s241
      %p250 = scmp.eq.s32.totalorder %s29, 0
      %p251 = por %p249, %p250
      %p252 = scmp.ne.s32.totalorder %s240, %s241
      %p253 = scmp.eq.s32.totalorder %s30, 3
      %p254 = por %p252, %p253
      %p256 = scmp.ne.s32.totalorder %s241, %s255
      %p257 = scmp.eq.s32.totalorder %s30, 0
      %p258 = por %p256, %p257
      %s259 = ssub.s32 %s31, %s43
      %s260 = ssub.s32 %s32, %s39
      %s261 = sor.u32 %s259, %s260
      %p262 = scmp.eq.s32.totalorder %s261, 0
      %s264 = sadd.s32 %s263, 1
      %s265 = scalar_select %p262, %s263, %s264
      %p268 = pneg %p262
      %p269 = scmp.eq.s32.totalorder %s24, 3
      %p270 = por %p268, %p269
      %p271 = scmp.ne.s32.totalorder %s263, %s266
      %p272 = scmp.eq.s32.totalorder %s24, 0
      %p273 = por %p271, %p272
      %p274 = scmp.ne.s32.totalorder %s263, %s266
      %p275 = scmp.eq.s32.totalorder %s29, 3
      %p276 = por %p274, %p275
      %p277 = scmp.ne.s32.totalorder %s266, %s267
      %p278 = scmp.eq.s32.totalorder %s29, 0
      %p279 = por %p277, %p278
      %p280 = scmp.ne.s32.totalorder %s266, %s267
      %p281 = scmp.eq.s32.totalorder %s30, 3
      %p282 = por %p280, %p281
      %p284 = scmp.ne.s32.totalorder %s267, %s283
      %p285 = scmp.eq.s32.totalorder %s30, 0
      %p286 = por %p284, %p285
      %p287 = scmp.le.s32.totalorder 1, %s24
      %p288 = scmp.lt.s32.totalorder %s24, 5
      %p289 = pnand %p287, %p288
      %p290 = pneg %p289
      // Predicated region
      $region9: #{tpu_custom_call.1} parent=5 // pred_check
        _
      $region10: #{tpu_custom_call.1} parent=5 // pred_check_branch
        %292 = sbr.rel (%p289) target = $region12
      $region11: #{tpu_custom_call.1} parent=5 // pred_region
        %s293 = ssub.s32 %s24, 1
        // Predicated region
        $region13: #{tpu_custom_call.1} parent=11 // pred_check
          %p294 = pneg %p83
        $region14: #{tpu_custom_call.1} parent=11 // pred_check_branch
          %296 = sbr.rel (%p294) target = $region16
        $region15: #{tpu_custom_call.1} parent=11 // pred_region
          %s298 = ssub.s32 1024, 1024
          %299 = vsyncadd [#allocation6], %s298
          %s300 = sshll.u32 [#allocation5], 4
          %s301 = int_to_ptr.vmem [resolvable:$true] %s300
          %306 = dma.hbm_to_vmem [thread:$0]  %s1, 1024, %s301, [#allocation6], 64, 64, 4
        $region16: #{tpu_custom_call.1} parent=11 // pred_fallthru
          _
        // Predicated region
        $region17: #{tpu_custom_call.1} parent=11 // pred_check
          %p307 = pneg %p104
        $region18: #{tpu_custom_call.1} parent=11 // pred_check_branch
          %309 = sbr.rel (%p307) target = $region20
        $region19: #{tpu_custom_call.1} parent=11 // pred_region
          %s311 = ssub.s32 9216, 9216
          %312 = vsyncadd [#allocation6], %s311
          %s313 = sshll.u32 [#allocation7], 4
          %s314 = int_to_ptr.vmem [resolvable:$true] %s313
          %319 = dma.hbm_to_vmem [thread:$0]  %s2, 9216, %s314, [#allocation6], 64, 64, 4
        $region20: #{tpu_custom_call.1} parent=11 // pred_fallthru
          _
        // Predicated region
        $region21: #{tpu_custom_call.1} parent=11 // pred_check
          %p320 = pneg %p125
        $region22: #{tpu_custom_call.1} parent=11 // pred_check_branch
          %322 = sbr.rel (%p320) target = $region24
        $region23: #{tpu_custom_call.1} parent=11 // pred_region
          %s324 = ssub.s32 1024, 1024
          %325 = vsyncadd [#allocation9], %s324
          %s326 = sshll.u32 [#allocation8], 4
          %s327 = int_to_ptr.vmem [resolvable:$true] %s326
          %332 = dma.hbm_to_vmem [thread:$0]  %s3, 1024, %s327, [#allocation9], 64, 64, 4
        $region24: #{tpu_custom_call.1} parent=11 // pred_fallthru
          _
        // Predicated region
        $region25: #{tpu_custom_call.1} parent=11 // pred_check
          %p333 = pneg %p146
        $region26: #{tpu_custom_call.1} parent=11 // pred_check_branch
          %335 = sbr.rel (%p333) target = $region28
        $region27: #{tpu_custom_call.1} parent=11 // pred_region
          _
        $region28: #{tpu_custom_call.1} parent=11 // pred_fallthru
          _
        // Predicated region
        $region29: #{tpu_custom_call.1} parent=11 // pred_check
          %p336 = pneg %p167
        $region30: #{tpu_custom_call.1} parent=11 // pred_check_branch
          %338 = sbr.rel (%p336) target = $region32
        $region31: #{tpu_custom_call.1} parent=11 // pred_region
          _
        $region32: #{tpu_custom_call.1} parent=11 // pred_fallthru
          _
        // Predicated region
        $region33: #{tpu_custom_call.1} parent=11 // pred_check
          %p339 = pneg %p188
        $region34: #{tpu_custom_call.1} parent=11 // pred_check_branch
          %341 = sbr.rel (%p339) target = $region36
        $region35: #{tpu_custom_call.1} parent=11 // pred_region
          _
        $region36: #{tpu_custom_call.1} parent=11 // pred_fallthru
          _
        // Predicated region
        $region37: #{tpu_custom_call.1} parent=11 // pred_check
          %p342 = pneg %p209
        $region38: #{tpu_custom_call.1} parent=11 // pred_check_branch
          %344 = sbr.rel (%p342) target = $region40
        $region39: #{tpu_custom_call.1} parent=11 // pred_region
          _
        $region40: #{tpu_custom_call.1} parent=11 // pred_fallthru
          _
        // Predicated region
        $region41: #{tpu_custom_call.1} parent=11 // pred_check
          %p345 = pneg %p230
        $region42: #{tpu_custom_call.1} parent=11 // pred_check_branch
          %347 = sbr.rel (%p345) target = $region44
        $region43: #{tpu_custom_call.1} parent=11 // pred_region
          _
        $region44: #{tpu_custom_call.1} parent=11 // pred_fallthru
          _
        // Predicated region
        $region45: #{tpu_custom_call.1} parent=11 // pred_check
          %p348 = pneg %p251
        $region46: #{tpu_custom_call.1} parent=11 // pred_check_branch
          %350 = sbr.rel (%p348) target = $region48
        $region47: #{tpu_custom_call.1} parent=11 // pred_region
          _
        $region48: #{tpu_custom_call.1} parent=11 // pred_fallthru
          _
      $region12: #{tpu_custom_call.1} parent=5 // pred_fallthru
        _
      %p351 = scmp.lt.s32.totalorder %s24, 4
      // Predicated region
      $region49: #{tpu_custom_call.1} parent=5 // pred_check
        %p352 = pneg %p351
      $region50: #{tpu_custom_call.1} parent=5 // pred_check_branch
        %354 = sbr.rel (%p352) target = $region52
      $region51: #{tpu_custom_call.1} parent=5 // pred_region
        // Predicated region
        $region53: #{tpu_custom_call.1} parent=51 // pred_check
          %p355 = pneg %p56
        $region54: #{tpu_custom_call.1} parent=51 // pred_check_branch
          %357 = sbr.rel (%p355) target = $region56
        $region55: #{tpu_custom_call.1} parent=51 // pred_region
          %s358 = sand.u32 %s46, 1
          %s359 = scalar_lea.sflag [#allocation3], %s358
          %s360 = sand.u32 %s46, 1
          %s361 = smul.addr %s360, 128
          %s362 = scalar_lea.vmem [#allocation2], %s361
          %s364 = ssub.s32 2048, 2048
          %365 = vsyncadd %s359, %s364
          %s366 = smul.addr %s31, 32
          %s367 = smul.addr %s366, 64
          %s368 = scalar_lea.hbm %s0, %s367
          %s369 = sshll.u32 %s362, 4
          %s370 = int_to_ptr.vmem [resolvable:$true] %s369
          %375 = dma.hbm_to_vmem [thread:$0]  %s368, 2048, %s370, %s359, 64, 64, 4
        $region56: #{tpu_custom_call.1} parent=51 // pred_fallthru
          _
      $region52: #{tpu_custom_call.1} parent=5 // pred_fallthru
        _
      %p376 = scmp.le.s32.totalorder 1, %s24
      %p377 = scmp.lt.s32.totalorder %s24, 5
      %p378 = pnand %p376, %p377
      %p379 = pneg %p378
      // Predicated region
      $region57: #{tpu_custom_call.1} parent=5 // pred_check
        _
      $region58: #{tpu_custom_call.1} parent=5 // pred_check_branch
        %381 = sbr.rel (%p378) target = $region60
      $region59: #{tpu_custom_call.1} parent=5 // pred_region
        %s382 = ssub.s32 %s24, 1
        %s383 = sand.u32 %s49, 1
        %s384 = scalar_lea.sflag [#allocation3], %s383
        %s385 = sand.u32 %s49, 1
        %s386 = smul.addr %s385, 128
        %s387 = scalar_lea.vmem [#allocation2], %s386
        // Predicated region
        $region61: #{tpu_custom_call.1} parent=59 // pred_check
          %p388 = pneg %p62
        $region62: #{tpu_custom_call.1} parent=59 // pred_check_branch
          %390 = sbr.rel (%p388) target = $region64
        $region63: #{tpu_custom_call.1} parent=59 // pred_region
          %391 = dma.done %s384, 2048
        $region64: #{tpu_custom_call.1} parent=59 // pred_fallthru
          _
        // Predicated region
        $region65: #{tpu_custom_call.1} parent=59 // pred_check
          %p392 = pneg %p83
        $region66: #{tpu_custom_call.1} parent=59 // pred_check_branch
          %394 = sbr.rel (%p392) target = $region68
        $region67: #{tpu_custom_call.1} parent=59 // pred_region
          %395 = dma.done [#allocation6], 1024
        $region68: #{tpu_custom_call.1} parent=59 // pred_fallthru
          _
        // Predicated region
        $region69: #{tpu_custom_call.1} parent=59 // pred_check
          %p396 = pneg %p104
        $region70: #{tpu_custom_call.1} parent=59 // pred_check_branch
          %398 = sbr.rel (%p396) target = $region72
        $region71: #{tpu_custom_call.1} parent=59 // pred_region
          %399 = dma.done [#allocation6], 9216
        $region72: #{tpu_custom_call.1} parent=59 // pred_fallthru
          _
        // Predicated region
        $region73: #{tpu_custom_call.1} parent=59 // pred_check
          %p400 = pneg %p125
        $region74: #{tpu_custom_call.1} parent=59 // pred_check_branch
          %402 = sbr.rel (%p400) target = $region76
        $region75: #{tpu_custom_call.1} parent=59 // pred_region
          %403 = dma.done [#allocation9], 1024
        $region76: #{tpu_custom_call.1} parent=59 // pred_fallthru
          _
        %s404 = sand.u32 %s49, 1
        %s405 = scalar_lea.sflag [#allocation3], %s404
        %s406 = sand.u32 %s49, 1
        %s407 = smul.addr %s406, 128
        %s408 = scalar_lea.vmem [#allocation2], %s407
        %p409 = pneg %p62
        %p410 = pneg %p59
        %p411 = pneg %p83
        %p412 = pneg %p80
        %p413 = pneg %p104
        %p414 = pneg %p101
        %p415 = pneg %p125
        %p416 = pneg %p122
        %p417 = pneg %p146
        %p418 = pneg %p143
        %p419 = pneg %p167
        %p420 = pneg %p164
        %p421 = pneg %p188
        %p422 = pneg %p185
        %p423 = pneg %p209
        %p424 = pneg %p206
        %p425 = pneg %p230
        %p426 = pneg %p227
        %p427 = pneg %p251
        %p428 = pneg %p248
        %p429 = pneg %p279
        %p430 = pneg %p276
        %s431 = sand.u32 %s266, 1
        %s432 = scalar_lea.sflag [#allocation4], %s431
        %s433 = sand.u32 %s266, 1
        %s434 = smul.addr %s433, 64
        %s435 = scalar_lea.vmem [#allocation10], %s434
        %s436 = smul.u32 16, %s34
        %s440 = smul.u32 %s34, 128
        %s441 = smul.u32 %s34, 8
        %s442 = ssub.s32 %s441, 1
        %p443 = scmp.gt.s32.totalorder %s442, 0
        %s444 = scalar_select %p443, %s442, 0
        %s445 = smul.u32 %s444, 16
        %s446 = sadd.s32 %s441, 8
        %p447 = scmp.lt.s32.totalorder %s446, 15
        %s448 = scalar_select %p447, %s446, 15
        %s449 = smul.u32 %s448, 16
        %s450 = sshra.s32 %s445, 3
        %s451 = sand.u32 %s445, 7
        %s452 = smul.addr %s450, 4
        %s453 = scalar_lea.vmem %s387, %s452 [#allocation2]
        %v454 = vld [vmem:[%s453] sm:$0xf]
        %v455 = vld [vmem:[%s453 + $0x4] sm:$0xf]
        %s456 = sshra.s32 %s440, 3
        %s457 = sand.u32 %s440, 7
        %s458 = smul.addr %s456, 4
        %s459 = scalar_lea.vmem %s387, %s458 [#allocation2]
        %v460 = vld [vmem:[%s459] sm:$0xf]
        %v461 = vld [vmem:[%s459 + $0x4] sm:$0xf]
        %v462 = vld [vmem:[%s459 + $0x8] sm:$0xf]
        %v463 = vld [vmem:[%s459 + $0xc] sm:$0xf]
        %v464 = vld [vmem:[%s459 + $0x10] sm:$0xf]
        %v465 = vld [vmem:[%s459 + $0x14] sm:$0xf]
        %v466 = vld [vmem:[%s459 + $0x18] sm:$0xf]
        %v467 = vld [vmem:[%s459 + $0x1c] sm:$0xf]
        %v468 = vld [vmem:[%s459 + $0x20] sm:$0xf]
        %v469 = vld [vmem:[%s459 + $0x24] sm:$0xf]
        %v470 = vld [vmem:[%s459 + $0x28] sm:$0xf]
        %v471 = vld [vmem:[%s459 + $0x2c] sm:$0xf]
        %v472 = vld [vmem:[%s459 + $0x30] sm:$0xf]
        %v473 = vld [vmem:[%s459 + $0x34] sm:$0xf]
        %v474 = vld [vmem:[%s459 + $0x38] sm:$0xf]
        %v475 = vld [vmem:[%s459 + $0x3c] sm:$0xf]
        %s476 = sshra.s32 %s449, 3
        %s477 = sand.u32 %s449, 7
        %s478 = smul.addr %s476, 4
        %s479 = scalar_lea.vmem %s387, %s478 [#allocation2]
        %v480 = vld [vmem:[%s479] sm:$0xf]
        %v481 = vld [vmem:[%s479 + $0x4] sm:$0xf]
        %v484 = vunpack.c.l.b16 %v454
        %v485 = vunpack.c.l.b16 %v455
        %v486 = vpack.c.b16 %v485, %v484
        %v504 = vunpack.c.l.b16 %v460
        %v505 = vunpack.c.l.b16 %v461
        %v506 = vunpack.c.l.b16 %v462
        %v507 = vunpack.c.l.b16 %v463
        %v508 = vunpack.c.l.b16 %v464
        %v509 = vunpack.c.l.b16 %v465
        %v510 = vunpack.c.l.b16 %v466
        %v511 = vunpack.c.l.b16 %v467
        %v512 = vunpack.c.l.b16 %v468
        %v513 = vunpack.c.l.b16 %v469
        %v514 = vunpack.c.l.b16 %v470
        %v515 = vunpack.c.l.b16 %v471
        %v516 = vunpack.c.l.b16 %v472
        %v517 = vunpack.c.l.b16 %v473
        %v518 = vunpack.c.l.b16 %v474
        %v519 = vunpack.c.l.b16 %v475
        %v520 = vpack.c.b16 %v505, %v504
        %v521 = vpack.c.b16 %v507, %v506
        %v522 = vpack.c.b16 %v509, %v508
        %v523 = vpack.c.b16 %v511, %v510
        %v524 = vpack.c.b16 %v513, %v512
        %v525 = vpack.c.b16 %v515, %v514
        %v526 = vpack.c.b16 %v517, %v516
        %v527 = vpack.c.b16 %v519, %v518
        %v538 = vunpack.c.l.b16 %v480
        %v539 = vunpack.c.l.b16 %v481
        %v540 = vpack.c.b16 %v539, %v538
        %v542 = vld [vmem:[#allocation5] sm:$0xf]
        %v543 = vld [vmem:[#allocation5 + $0x4] sm:$0xf]
        %v544 = vld [vmem:[#allocation5 + $0x8] sm:$0xf]
        %v545 = vld [vmem:[#allocation5 + $0xc] sm:$0xf]
        %v546 = vld [vmem:[#allocation5 + $0x10] sm:$0xf]
        %v547 = vld [vmem:[#allocation5 + $0x14] sm:$0xf]
        %v548 = vld [vmem:[#allocation5 + $0x18] sm:$0xf]
        %v549 = vld [vmem:[#allocation5 + $0x1c] sm:$0xf]
        %v550 = vld [vmem:[#allocation5 + $0x20] sm:$0xf]
        %v551 = vld [vmem:[#allocation5 + $0x24] sm:$0xf]
        %v552 = vld [vmem:[#allocation5 + $0x28] sm:$0xf]
        %v553 = vld [vmem:[#allocation5 + $0x2c] sm:$0xf]
        %v554 = vld [vmem:[#allocation5 + $0x30] sm:$0xf]
        %v555 = vld [vmem:[#allocation5 + $0x34] sm:$0xf]
        %v556 = vld [vmem:[#allocation5 + $0x38] sm:$0xf]
        %v557 = vld [vmem:[#allocation5 + $0x3c] sm:$0xf]
        %v574 = vunpack.c.l.b16 %v542
        %v575 = vunpack.c.l.b16 %v543
        %v576 = vunpack.c.l.b16 %v544
        %v577 = vunpack.c.l.b16 %v545
        %v578 = vunpack.c.l.b16 %v546
        %v579 = vunpack.c.l.b16 %v547
        %v580 = vunpack.c.l.b16 %v548
        %v581 = vunpack.c.l.b16 %v549
        %v582 = vunpack.c.l.b16 %v550
        %v583 = vunpack.c.l.b16 %v551
        %v584 = vunpack.c.l.b16 %v552
        %v585 = vunpack.c.l.b16 %v553
        %v586 = vunpack.c.l.b16 %v554
        %v587 = vunpack.c.l.b16 %v555
        %v588 = vunpack.c.l.b16 %v556
        %v589 = vunpack.c.l.b16 %v557
        %v590 = vpack.c.b16 %v575, %v574
        %v591 = vpack.c.b16 %v577, %v576
        %v592 = vpack.c.b16 %v579, %v578
        %v593 = vpack.c.b16 %v581, %v580
        %v594 = vpack.c.b16 %v583, %v582
        %v595 = vpack.c.b16 %v585, %v584
        %v596 = vpack.c.b16 %v587, %v586
        %v597 = vpack.c.b16 %v589, %v588
        %606 = vmatprep.subr.bf16.mxu0 0
        %607 = vmatpush1.bf16.msra.mxu0 %v597
        %608 = vmatprep.subr.bf16.mxu0 0
        %609 = vmatpush1.bf16.msra.mxu0 %v596
        %610 = vmatprep.subr.bf16.mxu0 0
        %611 = vmatpush1.bf16.msra.mxu0 %v595
        %612 = vmatprep.subr.bf16.mxu0 0
        %613 = vmatpush1.bf16.msra.mxu0 %v594
        %614 = vmatprep.subr.bf16.mxu0 0
        %615 = vmatpush1.bf16.msra.mxu0 %v593
        %616 = vmatprep.subr.bf16.mxu0 0
        %617 = vmatpush1.bf16.msra.mxu0 %v592
        %618 = vmatprep.subr.bf16.mxu0 0
        %619 = vmatpush1.bf16.msra.mxu0 %v591
        %620 = vmatprep.subr.bf16.mxu0 0
        %621 = vmatpush1.bf16.msra.mxu0 %v590
        %622 = vmatprep.subr.bf16.mxu0 0
        %623 = vmatpush2.bf16.msra.mxu0 0
        %624 = vmatprep.subr.bf16.mxu0 0
        %625 = vmatpush2.bf16.msra.mxu0 0
        %626 = vmatprep.subr.bf16.mxu0 0
        %627 = vmatpush2.bf16.msra.mxu0 0
        %628 = vmatprep.subr.bf16.mxu0 0
        %629 = vmatpush2.bf16.msra.mxu0 0
        %630 = vmatprep.subr.bf16.mxu0 0
        %631 = vmatpush2.bf16.msra.mxu0 0
        %632 = vmatprep.subr.bf16.mxu0 0
        %633 = vmatpush2.bf16.msra.mxu0 0
        %634 = vmatprep.subr.bf16.mxu0 0
        %635 = vmatpush2.bf16.msra.mxu0 0
        %636 = vmatprep.subr.bf16.mxu0 0
        %637 = vmatpush2.bf16.msra.mxu0 0
        %638 = vmatprep.mubr.bf16.mxu0 0
        %639 = vmatmul.mubr.bf16.gmra.mxu0 %v486
        %v640 = vpop.f32.mrf.mxu0
        %v641 = vadd.f32 0.0, %v640
        %v642 = vpop.f32.mrf.mxu0
        %v643 = vpop.f32.mrf.mxu0
        %v644 = vadd.f32 0.0, %v643
        %v645 = vpop.f32.mrf.mxu0
        %646 = vmatprep.mubr.bf16.mxu0 0
        %647 = vmatmul.mubr.bf16.gmra.mxu0 %v520
        %v648 = vpop.f32.mrf.mxu0
        %v649 = vadd.f32 0.0, %v648
        %v650 = vpop.f32.mrf.mxu0
        %v651 = vpop.f32.mrf.mxu0
        %v652 = vadd.f32 0.0, %v651
        %v653 = vpop.f32.mrf.mxu0
        %654 = vmatprep.mubr.bf16.mxu0 0
        %655 = vmatmul.mubr.bf16.gmra.mxu0 %v521
        %v656 = vpop.f32.mrf.mxu0
        %v657 = vadd.f32 0.0, %v656
        %v658 = vpop.f32.mrf.mxu0
        %v659 = vpop.f32.mrf.mxu0
        %v660 = vadd.f32 0.0, %v659
        %v661 = vpop.f32.mrf.mxu0
        %662 = vmatprep.mubr.bf16.mxu0 0
        %663 = vmatmul.mubr.bf16.gmra.mxu0 %v522
        %v664 = vpop.f32.mrf.mxu0
        %v665 = vadd.f32 0.0, %v664
        %v666 = vpop.f32.mrf.mxu0
        %v667 = vpop.f32.mrf.mxu0
        %v668 = vadd.f32 0.0, %v667
        %v669 = vpop.f32.mrf.mxu0
        %670 = vmatprep.mubr.bf16.mxu0 0
        %671 = vmatmul.mubr.bf16.gmra.mxu0 %v523
        %v672 = vpop.f32.mrf.mxu0
        %v673 = vadd.f32 0.0, %v672
        %v674 = vpop.f32.mrf.mxu0
        %v675 = vpop.f32.mrf.mxu0
        %v676 = vadd.f32 0.0, %v675
        %v677 = vpop.f32.mrf.mxu0
        %678 = vmatprep.mubr.bf16.mxu0 0
        %679 = vmatmul.mubr.bf16.gmra.mxu0 %v524
        %v680 = vpop.f32.mrf.mxu0
        %v681 = vadd.f32 0.0, %v680
        %v682 = vpop.f32.mrf.mxu0
        %v683 = vpop.f32.mrf.mxu0
        %v684 = vadd.f32 0.0, %v683
        %v685 = vpop.f32.mrf.mxu0
        %686 = vmatprep.mubr.bf16.mxu0 0
        %687 = vmatmul.mubr.bf16.gmra.mxu0 %v525
        %v688 = vpop.f32.mrf.mxu0
        %v689 = vadd.f32 0.0, %v688
        %v690 = vpop.f32.mrf.mxu0
        %v691 = vpop.f32.mrf.mxu0
        %v692 = vadd.f32 0.0, %v691
        %v693 = vpop.f32.mrf.mxu0
        %694 = vmatprep.mubr.bf16.mxu0 0
        %695 = vmatmul.mubr.bf16.gmra.mxu0 %v526
        %v696 = vpop.f32.mrf.mxu0
        %v697 = vadd.f32 0.0, %v696
        %v698 = vpop.f32.mrf.mxu0
        %v699 = vpop.f32.mrf.mxu0
        %v700 = vadd.f32 0.0, %v699
        %v701 = vpop.f32.mrf.mxu0
        %702 = vmatprep.mubr.bf16.mxu0 0
        %703 = vmatmul.mubr.bf16.gmra.mxu0 %v527
        %v704 = vpop.f32.mrf.mxu0
        %v705 = vadd.f32 0.0, %v704
        %v706 = vpop.f32.mrf.mxu0
        %v707 = vpop.f32.mrf.mxu0
        %v708 = vadd.f32 0.0, %v707
        %v709 = vpop.f32.mrf.mxu0
        %710 = vmatprep.mubr.bf16.mxu0 0
        %711 = vmatmul.mubr.bf16.gmra.mxu0 %v540
        %v712 = vpop.f32.mrf.mxu0
        %v713 = vadd.f32 0.0, %v712
        %v714 = vpop.f32.mrf.mxu0
        %v715 = vpop.f32.mrf.mxu0
        %v716 = vadd.f32 0.0, %v715
        %v717 = vpop.f32.mrf.mxu0
        %718 = vdwg.mxu0
        %v719 = vld [vmem:[%s4] sm:$0x1]
        %v721 = vlaneseq
        %v722 = vshrl.u32 %v721, 7
        %v723 = vsub.s32 0, %v722
        %v724 = vrot.slane %v719, %v723
        %v726 = vmul.f32 %v641, %v724
        %v727 = vmul.f32 %v644, %v724
        %v728 = vmul.f32 %v649, %v724
        %v729 = vmul.f32 %v652, %v724
        %v730 = vmul.f32 %v657, %v724
        %v731 = vmul.f32 %v660, %v724
        %v732 = vmul.f32 %v665, %v724
        %v733 = vmul.f32 %v668, %v724
        %v734 = vmul.f32 %v673, %v724
        %v735 = vmul.f32 %v676, %v724
        %v736 = vmul.f32 %v681, %v724
        %v737 = vmul.f32 %v684, %v724
        %v738 = vmul.f32 %v689, %v724
        %v739 = vmul.f32 %v692, %v724
        %v740 = vmul.f32 %v697, %v724
        %v741 = vmul.f32 %v700, %v724
        %v742 = vmul.f32 %v705, %v724
        %v743 = vmul.f32 %v708, %v724
        %v744 = vmul.f32 %v713, %v724
        %v745 = vmul.f32 %v716, %v724
        %v746 = vld [vmem:[%s5] sm:$0x1]
        %v748 = vlaneseq
        %v749 = vshrl.u32 %v748, 7
        %v750 = vsub.s32 0, %v749
        %v751 = vrot.slane %v746, %v750
        %v753 = vadd.f32 %v726, %v751
        %v754 = vadd.f32 %v727, %v751
        %v755 = vadd.f32 %v728, %v751
        %v756 = vadd.f32 %v729, %v751
        %v757 = vadd.f32 %v730, %v751
        %v758 = vadd.f32 %v731, %v751
        %v759 = vadd.f32 %v732, %v751
        %v760 = vadd.f32 %v733, %v751
        %v761 = vadd.f32 %v734, %v751
        %v762 = vadd.f32 %v735, %v751
        %v763 = vadd.f32 %v736, %v751
        %v764 = vadd.f32 %v737, %v751
        %v765 = vadd.f32 %v738, %v751
        %v766 = vadd.f32 %v739, %v751
        %v767 = vadd.f32 %v740, %v751
        %v768 = vadd.f32 %v741, %v751
        %v769 = vadd.f32 %v742, %v751
        %v770 = vadd.f32 %v743, %v751
        %v771 = vadd.f32 %v744, %v751
        %v772 = vadd.f32 %v745, %v751
        %v773 = vmax.f32 %v753, 0.0
        %v774 = vmax.f32 %v754, 0.0
        %v775 = vmax.f32 %v755, 0.0
        %v776 = vmax.f32 %v756, 0.0
        %v777 = vmax.f32 %v757, 0.0
        %v778 = vmax.f32 %v758, 0.0
        %v779 = vmax.f32 %v759, 0.0
        %v780 = vmax.f32 %v760, 0.0
        %v781 = vmax.f32 %v761, 0.0
        %v782 = vmax.f32 %v762, 0.0
        %v783 = vmax.f32 %v763, 0.0
        %v784 = vmax.f32 %v764, 0.0
        %v785 = vmax.f32 %v765, 0.0
        %v786 = vmax.f32 %v766, 0.0
        %v787 = vmax.f32 %v767, 0.0
        %v788 = vmax.f32 %v768, 0.0
        %v789 = vmax.f32 %v769, 0.0
        %v790 = vmax.f32 %v770, 0.0
        %v791 = vmax.f32 %v771, 0.0
        %v792 = vmax.f32 %v772, 0.0
        %v793 = vpack.c.bf16 %v774, %v773
        %v794 = vpack.c.bf16 %v776, %v775
        %v795 = vpack.c.bf16 %v778, %v777
        %v796 = vpack.c.bf16 %v780, %v779
        %v797 = vpack.c.bf16 %v782, %v781
        %v798 = vpack.c.bf16 %v784, %v783
        %v799 = vpack.c.bf16 %v786, %v785
        %v800 = vpack.c.bf16 %v788, %v787
        %v801 = vpack.c.bf16 %v790, %v789
        %v802 = vpack.c.bf16 %v792, %v791
        %v803 = vlaneseq
        %v804 = vshrl.u32 %v803, 7
        %v805 = vadd.s32 %v804, 8
        %v806 = vadd.s32 %v804, 16
        %v807 = vadd.s32 %v804, 24
        %v808 = vadd.s32 %v804, 32
        %v809 = vadd.s32 %v804, 40
        %v810 = vadd.s32 %v804, 48
        %v811 = vadd.s32 %v804, 56
        %v812 = vadd.s32 %v804, 64
        %v813 = vadd.s32 %v804, 72
        %v814 = vadd.s32 %v804, 80
        %v815 = vadd.s32 %v804, 88
        %v816 = vadd.s32 %v804, 96
        %v817 = vadd.s32 %v804, 104
        %v818 = vadd.s32 %v804, 112
        %v819 = vadd.s32 %v804, 120
        %v820 = vadd.s32 %v804, 128
        %v821 = vadd.s32 %v804, 136
        %v822 = vadd.s32 %v804, 144
        %v823 = vadd.s32 %v804, 152
        %p824 = scmp.gt.s32.totalorder %s34, 0
        %vm825 = vcmp.ge.s32.totalorder %v804, 16
        %vm826 = vcmp.ge.s32.totalorder %v805, 16
        %vm827 = vcmp.ge.s32.totalorder %v806, 16
        %vm828 = vcmp.ge.s32.totalorder %v807, 16
        %vm829 = vcmp.ge.s32.totalorder %v808, 16
        %vm830 = vcmp.ge.s32.totalorder %v809, 16
        %vm831 = vcmp.ge.s32.totalorder %v810, 16
        %vm832 = vcmp.ge.s32.totalorder %v811, 16
        %vm833 = vcmp.ge.s32.totalorder %v812, 16
        %vm834 = vcmp.ge.s32.totalorder %v813, 16
        %vm835 = vcmp.ge.s32.totalorder %v814, 16
        %vm836 = vcmp.ge.s32.totalorder %v815, 16
        %vm837 = vcmp.ge.s32.totalorder %v816, 16
        %vm838 = vcmp.ge.s32.totalorder %v817, 16
        %vm839 = vcmp.ge.s32.totalorder %v818, 16
        %vm840 = vcmp.ge.s32.totalorder %v819, 16
        %vm841 = vcmp.ge.s32.totalorder %v820, 16
        %vm842 = vcmp.ge.s32.totalorder %v821, 16
        %vm843 = vcmp.ge.s32.totalorder %v822, 16
        %vm844 = vcmp.ge.s32.totalorder %v823, 16
        %s845 = scalar_select %p824, 1, 0
        %v846 = vstv %s845
        %vm847 = vcmp.eq.s32.totalorder %v846, 1
        %vm848 = vmor %vm847, %vm825
        %vm849 = vmor %vm847, %vm826
        %vm850 = vmor %vm847, %vm827
        %vm851 = vmor %vm847, %vm828
        %vm852 = vmor %vm847, %vm829
        %vm853 = vmor %vm847, %vm830
        %vm854 = vmor %vm847, %vm831
        %vm855 = vmor %vm847, %vm832
        %vm856 = vmor %vm847, %vm833
        %vm857 = vmor %vm847, %vm834
        %vm858 = vmor %vm847, %vm835
        %vm859 = vmor %vm847, %vm836
        %vm860 = vmor %vm847, %vm837
        %vm861 = vmor %vm847, %vm838
        %vm862 = vmor %vm847, %vm839
        %vm863 = vmor %vm847, %vm840
        %vm864 = vmor %vm847, %vm841
        %vm865 = vmor %vm847, %vm842
        %vm866 = vmor %vm847, %vm843
        %vm867 = vmor %vm847, %vm844
        %p868 = scmp.lt.s32.totalorder %s34, 1
        %vm869 = vcmp.lt.s32.totalorder %v804, 144
        %vm870 = vcmp.lt.s32.totalorder %v805, 144
        %vm871 = vcmp.lt.s32.totalorder %v806, 144
        %vm872 = vcmp.lt.s32.totalorder %v807, 144
        %vm873 = vcmp.lt.s32.totalorder %v808, 144
        %vm874 = vcmp.lt.s32.totalorder %v809, 144
        %vm875 = vcmp.lt.s32.totalorder %v810, 144
        %vm876 = vcmp.lt.s32.totalorder %v811, 144
        %vm877 = vcmp.lt.s32.totalorder %v812, 144
        %vm878 = vcmp.lt.s32.totalorder %v813, 144
        %vm879 = vcmp.lt.s32.totalorder %v814, 144
        %vm880 = vcmp.lt.s32.totalorder %v815, 144
        %vm881 = vcmp.lt.s32.totalorder %v816, 144
        %vm882 = vcmp.lt.s32.totalorder %v817, 144
        %vm883 = vcmp.lt.s32.totalorder %v818, 144
        %vm884 = vcmp.lt.s32.totalorder %v819, 144
        %vm885 = vcmp.lt.s32.totalorder %v820, 144
        %vm886 = vcmp.lt.s32.totalorder %v821, 144
        %vm887 = vcmp.lt.s32.totalorder %v822, 144
        %vm888 = vcmp.lt.s32.totalorder %v823, 144
        %s889 = scalar_select %p868, 1, 0
        %v890 = vstv %s889
        %vm891 = vcmp.eq.s32.totalorder %v890, 1
        %vm892 = vmor %vm891, %vm869
        %vm893 = vmor %vm891, %vm870
        %vm894 = vmor %vm891, %vm871
        %vm895 = vmor %vm891, %vm872
        %vm896 = vmor %vm891, %vm873
        %vm897 = vmor %vm891, %vm874
        %vm898 = vmor %vm891, %vm875
        %vm899 = vmor %vm891, %vm876
        %vm900 = vmor %vm891, %vm877
        %vm901 = vmor %vm891, %vm878
        %vm902 = vmor %vm891, %vm879
        %vm903 = vmor %vm891, %vm880
        %vm904 = vmor %vm891, %vm881
        %vm905 = vmor %vm891, %vm882
        %vm906 = vmor %vm891, %vm883
        %vm907 = vmor %vm891, %vm884
        %vm908 = vmor %vm891, %vm885
        %vm909 = vmor %vm891, %vm886
        %vm910 = vmor %vm891, %vm887
        %vm911 = vmor %vm891, %vm888
        %vm912 = vmand %vm848, %vm892
        %vm913 = vmand %vm849, %vm893
        %vm914 = vmand %vm850, %vm894
        %vm915 = vmand %vm851, %vm895
        %vm916 = vmand %vm852, %vm896
        %vm917 = vmand %vm853, %vm897
        %vm918 = vmand %vm854, %vm898
        %vm919 = vmand %vm855, %vm899
        %vm920 = vmand %vm856, %vm900
        %vm921 = vmand %vm857, %vm901
        %vm922 = vmand %vm858, %vm902
        %vm923 = vmand %vm859, %vm903
        %vm924 = vmand %vm860, %vm904
        %vm925 = vmand %vm861, %vm905
        %vm926 = vmand %vm862, %vm906
        %vm927 = vmand %vm863, %vm907
        %vm928 = vmand %vm864, %vm908
        %vm929 = vmand %vm865, %vm909
        %vm930 = vmand %vm866, %vm910
        %vm931 = vmand %vm867, %vm911
        %v932 = vsel %vm912, 1, 0
        %v933 = vsel %vm913, 1, 0
        %v934 = vsel %vm914, 1, 0
        %v935 = vsel %vm915, 1, 0
        %v936 = vsel %vm916, 1, 0
        %v937 = vsel %vm917, 1, 0
        %v938 = vsel %vm918, 1, 0
        %v939 = vsel %vm919, 1, 0
        %v940 = vsel %vm920, 1, 0
        %v941 = vsel %vm921, 1, 0
        %v942 = vsel %vm922, 1, 0
        %v943 = vsel %vm923, 1, 0
        %v944 = vsel %vm924, 1, 0
        %v945 = vsel %vm925, 1, 0
        %v946 = vsel %vm926, 1, 0
        %v947 = vsel %vm927, 1, 0
        %v948 = vsel %vm928, 1, 0
        %v949 = vsel %vm929, 1, 0
        %v950 = vsel %vm930, 1, 0
        %v951 = vsel %vm931, 1, 0
        %vm952 = vcmp.eq.s32.totalorder %v932, 1
        %vm953 = vcmp.eq.s32.totalorder %v933, 1
        %vm954 = vcmp.eq.s32.totalorder %v934, 1
        %vm955 = vcmp.eq.s32.totalorder %v935, 1
        %vm956 = vcmp.eq.s32.totalorder %v936, 1
        %vm957 = vcmp.eq.s32.totalorder %v937, 1
        %vm958 = vcmp.eq.s32.totalorder %v938, 1
        %vm959 = vcmp.eq.s32.totalorder %v939, 1
        %vm960 = vcmp.eq.s32.totalorder %v940, 1
        %vm961 = vcmp.eq.s32.totalorder %v941, 1
        %vm962 = vcmp.eq.s32.totalorder %v942, 1
        %vm963 = vcmp.eq.s32.totalorder %v943, 1
        %vm964 = vcmp.eq.s32.totalorder %v944, 1
        %vm965 = vcmp.eq.s32.totalorder %v945, 1
        %vm966 = vcmp.eq.s32.totalorder %v946, 1
        %vm967 = vcmp.eq.s32.totalorder %v947, 1
        %vm968 = vcmp.eq.s32.totalorder %v948, 1
        %vm969 = vcmp.eq.s32.totalorder %v949, 1
        %vm970 = vcmp.eq.s32.totalorder %v950, 1
        %vm971 = vcmp.eq.s32.totalorder %v951, 1
        %vm972 = vmpackc.low %vm952, %vm952
        %vm973 = vmpackc.low %vm953, %vm953
        %vm974 = vmpackc.low %vm954, %vm954
        %vm975 = vmpackc.low %vm955, %vm955
        %vm976 = vmpackc.low %vm956, %vm956
        %vm977 = vmpackc.low %vm957, %vm957
        %vm978 = vmpackc.low %vm958, %vm958
        %vm979 = vmpackc.low %vm959, %vm959
        %vm980 = vmpackc.low %vm960, %vm960
        %vm981 = vmpackc.low %vm961, %vm961
        %vm982 = vmpackc.low %vm962, %vm962
        %vm983 = vmpackc.low %vm963, %vm963
        %vm984 = vmpackc.low %vm964, %vm964
        %vm985 = vmpackc.low %vm965, %vm965
        %vm986 = vmpackc.low %vm966, %vm966
        %vm987 = vmpackc.low %vm967, %vm967
        %vm988 = vmpackc.low %vm968, %vm968
        %vm989 = vmpackc.low %vm969, %vm969
        %vm990 = vmpackc.low %vm970, %vm970
        %vm991 = vmpackc.low %vm971, %vm971
        %v992 = vsel %vm972, 65537, 0
        %v993 = vsel %vm973, 65537, 0
        %v994 = vsel %vm974, 65537, 0
        %v995 = vsel %vm975, 65537, 0
        %v996 = vsel %vm976, 65537, 0
        %v997 = vsel %vm977, 65537, 0
        %v998 = vsel %vm978, 65537, 0
        %v999 = vsel %vm979, 65537, 0
        %v1000 = vsel %vm980, 65537, 0
        %v1001 = vsel %vm981, 65537, 0
        %v1002 = vsel %vm982, 65537, 0
        %v1003 = vsel %vm983, 65537, 0
        %v1004 = vsel %vm984, 65537, 0
        %v1005 = vsel %vm985, 65537, 0
        %v1006 = vsel %vm986, 65537, 0
        %v1007 = vsel %vm987, 65537, 0
        %v1008 = vsel %vm988, 65537, 0
        %v1009 = vsel %vm989, 65537, 0
        %v1010 = vsel %vm990, 65537, 0
        %v1011 = vsel %vm991, 65537, 0
        %v1012 = vunpack.c.l.b16 %v992
        %v1013 = vunpack.c.l.b16 %v993
        %v1014 = vunpack.c.l.b16 %v994
        %v1015 = vunpack.c.l.b16 %v995
        %v1016 = vunpack.c.l.b16 %v996
        %v1017 = vunpack.c.l.b16 %v997
        %v1018 = vunpack.c.l.b16 %v998
        %v1019 = vunpack.c.l.b16 %v999
        %v1020 = vunpack.c.l.b16 %v1000
        %v1021 = vunpack.c.l.b16 %v1001
        %v1022 = vunpack.c.l.b16 %v1002
        %v1023 = vunpack.c.l.b16 %v1003
        %v1024 = vunpack.c.l.b16 %v1004
        %v1025 = vunpack.c.l.b16 %v1005
        %v1026 = vunpack.c.l.b16 %v1006
        %v1027 = vunpack.c.l.b16 %v1007
        %v1028 = vunpack.c.l.b16 %v1008
        %v1029 = vunpack.c.l.b16 %v1009
        %v1030 = vunpack.c.l.b16 %v1010
        %v1031 = vunpack.c.l.b16 %v1011
        %v1032 = vpack.c.b16 %v1013, %v1012
        %v1033 = vpack.c.b16 %v1015, %v1014
        %v1034 = vpack.c.b16 %v1017, %v1016
        %v1035 = vpack.c.b16 %v1019, %v1018
        %v1036 = vpack.c.b16 %v1021, %v1020
        %v1037 = vpack.c.b16 %v1023, %v1022
        %v1038 = vpack.c.b16 %v1025, %v1024
        %v1039 = vpack.c.b16 %v1027, %v1026
        %v1040 = vpack.c.b16 %v1029, %v1028
        %v1041 = vpack.c.b16 %v1031, %v1030
        %vm1042 = vcmp.ne.s16.totalorder %v1032, 0
        %vm1043 = vcmp.ne.s16.totalorder %v1033, 0
        %vm1044 = vcmp.ne.s16.totalorder %v1034, 0
        %vm1045 = vcmp.ne.s16.totalorder %v1035, 0
        %vm1046 = vcmp.ne.s16.totalorder %v1036, 0
        %vm1047 = vcmp.ne.s16.totalorder %v1037, 0
        %vm1048 = vcmp.ne.s16.totalorder %v1038, 0
        %vm1049 = vcmp.ne.s16.totalorder %v1039, 0
        %vm1050 = vcmp.ne.s16.totalorder %v1040, 0
        %vm1051 = vcmp.ne.s16.totalorder %v1041, 0
        %v1052 = vsel %vm1042, %v793, 0
        %v1053 = vsel %vm1043, %v794, 0
        %v1054 = vsel %vm1044, %v795, 0
        %v1055 = vsel %vm1045, %v796, 0
        %v1056 = vsel %vm1046, %v797, 0
        %v1057 = vsel %vm1047, %v798, 0
        %v1058 = vsel %vm1048, %v799, 0
        %v1059 = vsel %vm1049, %v800, 0
        %v1060 = vsel %vm1050, %v801, 0
        %v1061 = vsel %vm1051, %v802, 0
        %vm1062 = vcmp.lt.s32.totalorder %v804, 0
        %v1063 = vsub.s32 0, %v804
        %v1064 = vsel %vm1062, %v1063, %v804
        %v1065 = vshrl.u32 %v1064, 4
        %v1066 = vand.u32 %v1064, 15
        %v1067 = vsub.s32 0, %v1066
        %v1068 = vsel %vm1062, %v1067, %v1066
        %vm1069 = vcmp.lt.s32.totalorder %v805, 0
        %v1070 = vsub.s32 0, %v805
        %v1071 = vsel %vm1069, %v1070, %v805
        %v1072 = vshrl.u32 %v1071, 4
        %v1073 = vand.u32 %v1071, 15
        %v1074 = vsub.s32 0, %v1073
        %v1075 = vsel %vm1069, %v1074, %v1073
        %vm1076 = vcmp.lt.s32.totalorder %v806, 0
        %v1077 = vsub.s32 0, %v806
        %v1078 = vsel %vm1076, %v1077, %v806
        %v1079 = vshrl.u32 %v1078, 4
        %v1080 = vand.u32 %v1078, 15
        %v1081 = vsub.s32 0, %v1080
        %v1082 = vsel %vm1076, %v1081, %v1080
        %vm1083 = vcmp.lt.s32.totalorder %v807, 0
        %v1084 = vsub.s32 0, %v807
        %v1085 = vsel %vm1083, %v1084, %v807
        %v1086 = vshrl.u32 %v1085, 4
        %v1087 = vand.u32 %v1085, 15
        %v1088 = vsub.s32 0, %v1087
        %v1089 = vsel %vm1083, %v1088, %v1087
        %vm1090 = vcmp.lt.s32.totalorder %v808, 0
        %v1091 = vsub.s32 0, %v808
        %v1092 = vsel %vm1090, %v1091, %v808
        %v1093 = vshrl.u32 %v1092, 4
        %v1094 = vand.u32 %v1092, 15
        %v1095 = vsub.s32 0, %v1094
        %v1096 = vsel %vm1090, %v1095, %v1094
        %vm1097 = vcmp.lt.s32.totalorder %v809, 0
        %v1098 = vsub.s32 0, %v809
        %v1099 = vsel %vm1097, %v1098, %v809
        %v1100 = vshrl.u32 %v1099, 4
        %v1101 = vand.u32 %v1099, 15
        %v1102 = vsub.s32 0, %v1101
        %v1103 = vsel %vm1097, %v1102, %v1101
        %vm1104 = vcmp.lt.s32.totalorder %v810, 0
        %v1105 = vsub.s32 0, %v810
        %v1106 = vsel %vm1104, %v1105, %v810
        %v1107 = vshrl.u32 %v1106, 4
        %v1108 = vand.u32 %v1106, 15
        %v1109 = vsub.s32 0, %v1108
        %v1110 = vsel %vm1104, %v1109, %v1108
        %vm1111 = vcmp.lt.s32.totalorder %v811, 0
        %v1112 = vsub.s32 0, %v811
        %v1113 = vsel %vm1111, %v1112, %v811
        %v1114 = vshrl.u32 %v1113, 4
        %v1115 = vand.u32 %v1113, 15
        %v1116 = vsub.s32 0, %v1115
        %v1117 = vsel %vm1111, %v1116, %v1115
        %vm1118 = vcmp.lt.s32.totalorder %v812, 0
        %v1119 = vsub.s32 0, %v812
        %v1120 = vsel %vm1118, %v1119, %v812
        %v1121 = vshrl.u32 %v1120, 4
        %v1122 = vand.u32 %v1120, 15
        %v1123 = vsub.s32 0, %v1122
        %v1124 = vsel %vm1118, %v1123, %v1122
        %vm1125 = vcmp.lt.s32.totalorder %v813, 0
        %v1126 = vsub.s32 0, %v813
        %v1127 = vsel %vm1125, %v1126, %v813
        %v1128 = vshrl.u32 %v1127, 4
        %v1129 = vand.u32 %v1127, 15
        %v1130 = vsub.s32 0, %v1129
        %v1131 = vsel %vm1125, %v1130, %v1129
        %vm1132 = vcmp.lt.s32.totalorder %v814, 0
        %v1133 = vsub.s32 0, %v814
        %v1134 = vsel %vm1132, %v1133, %v814
        %v1135 = vshrl.u32 %v1134, 4
        %v1136 = vand.u32 %v1134, 15
        %v1137 = vsub.s32 0, %v1136
        %v1138 = vsel %vm1132, %v1137, %v1136
        %vm1139 = vcmp.lt.s32.totalorder %v815, 0
        %v1140 = vsub.s32 0, %v815
        %v1141 = vsel %vm1139, %v1140, %v815
        %v1142 = vshrl.u32 %v1141, 4
        %v1143 = vand.u32 %v1141, 15
        %v1144 = vsub.s32 0, %v1143
        %v1145 = vsel %vm1139, %v1144, %v1143
        %vm1146 = vcmp.lt.s32.totalorder %v816, 0
        %v1147 = vsub.s32 0, %v816
        %v1148 = vsel %vm1146, %v1147, %v816
        %v1149 = vshrl.u32 %v1148, 4
        %v1150 = vand.u32 %v1148, 15
        %v1151 = vsub.s32 0, %v1150
        %v1152 = vsel %vm1146, %v1151, %v1150
        %vm1153 = vcmp.lt.s32.totalorder %v817, 0
        %v1154 = vsub.s32 0, %v817
        %v1155 = vsel %vm1153, %v1154, %v817
        %v1156 = vshrl.u32 %v1155, 4
        %v1157 = vand.u32 %v1155, 15
        %v1158 = vsub.s32 0, %v1157
        %v1159 = vsel %vm1153, %v1158, %v1157
        %vm1160 = vcmp.lt.s32.totalorder %v818, 0
        %v1161 = vsub.s32 0, %v818
        %v1162 = vsel %vm1160, %v1161, %v818
        %v1163 = vshrl.u32 %v1162, 4
        %v1164 = vand.u32 %v1162, 15
        %v1165 = vsub.s32 0, %v1164
        %v1166 = vsel %vm1160, %v1165, %v1164
        %vm1167 = vcmp.lt.s32.totalorder %v819, 0
        %v1168 = vsub.s32 0, %v819
        %v1169 = vsel %vm1167, %v1168, %v819
        %v1170 = vshrl.u32 %v1169, 4
        %v1171 = vand.u32 %v1169, 15
        %v1172 = vsub.s32 0, %v1171
        %v1173 = vsel %vm1167, %v1172, %v1171
        %vm1174 = vcmp.lt.s32.totalorder %v820, 0
        %v1175 = vsub.s32 0, %v820
        %v1176 = vsel %vm1174, %v1175, %v820
        %v1177 = vshrl.u32 %v1176, 4
        %v1178 = vand.u32 %v1176, 15
        %v1179 = vsub.s32 0, %v1178
        %v1180 = vsel %vm1174, %v1179, %v1178
        %vm1181 = vcmp.lt.s32.totalorder %v821, 0
        %v1182 = vsub.s32 0, %v821
        %v1183 = vsel %vm1181, %v1182, %v821
        %v1184 = vshrl.u32 %v1183, 4
        %v1185 = vand.u32 %v1183, 15
        %v1186 = vsub.s32 0, %v1185
        %v1187 = vsel %vm1181, %v1186, %v1185
        %vm1188 = vcmp.lt.s32.totalorder %v822, 0
        %v1189 = vsub.s32 0, %v822
        %v1190 = vsel %vm1188, %v1189, %v822
        %v1191 = vshrl.u32 %v1190, 4
        %v1192 = vand.u32 %v1190, 15
        %v1193 = vsub.s32 0, %v1192
        %v1194 = vsel %vm1188, %v1193, %v1192
        %vm1195 = vcmp.lt.s32.totalorder %v823, 0
        %v1196 = vsub.s32 0, %v823
        %v1197 = vsel %vm1195, %v1196, %v823
        %v1198 = vshrl.u32 %v1197, 4
        %v1199 = vand.u32 %v1197, 15
        %v1200 = vsub.s32 0, %v1199
        %v1201 = vsel %vm1195, %v1200, %v1199
        %vm1202 = vcmp.ne.s32.totalorder %v1068, 0
        %vm1203 = vcmp.ne.s32.totalorder %v1075, 0
        %vm1204 = vcmp.ne.s32.totalorder %v1082, 0
        %vm1205 = vcmp.ne.s32.totalorder %v1089, 0
        %vm1206 = vcmp.ne.s32.totalorder %v1096, 0
        %vm1207 = vcmp.ne.s32.totalorder %v1103, 0
        %vm1208 = vcmp.ne.s32.totalorder %v1110, 0
        %vm1209 = vcmp.ne.s32.totalorder %v1117, 0
        %vm1210 = vcmp.ne.s32.totalorder %v1124, 0
        %vm1211 = vcmp.ne.s32.totalorder %v1131, 0
        %vm1212 = vcmp.ne.s32.totalorder %v1138, 0
        %vm1213 = vcmp.ne.s32.totalorder %v1145, 0
        %vm1214 = vcmp.ne.s32.totalorder %v1152, 0
        %vm1215 = vcmp.ne.s32.totalorder %v1159, 0
        %vm1216 = vcmp.ne.s32.totalorder %v1166, 0
        %vm1217 = vcmp.ne.s32.totalorder %v1173, 0
        %vm1218 = vcmp.ne.s32.totalorder %v1180, 0
        %vm1219 = vcmp.ne.s32.totalorder %v1187, 0
        %vm1220 = vcmp.ne.s32.totalorder %v1194, 0
        %vm1221 = vcmp.ne.s32.totalorder %v1201, 0
        %vm1222 = vcmp.lt.s32.totalorder %v1068, 0
        %vm1223 = vcmp.lt.s32.totalorder %v1075, 0
        %vm1224 = vcmp.lt.s32.totalorder %v1082, 0
        %vm1225 = vcmp.lt.s32.totalorder %v1089, 0
        %vm1226 = vcmp.lt.s32.totalorder %v1096, 0
        %vm1227 = vcmp.lt.s32.totalorder %v1103, 0
        %vm1228 = vcmp.lt.s32.totalorder %v1110, 0
        %vm1229 = vcmp.lt.s32.totalorder %v1117, 0
        %vm1230 = vcmp.lt.s32.totalorder %v1124, 0
        %vm1231 = vcmp.lt.s32.totalorder %v1131, 0
        %vm1232 = vcmp.lt.s32.totalorder %v1138, 0
        %vm1233 = vcmp.lt.s32.totalorder %v1145, 0
        %vm1234 = vcmp.lt.s32.totalorder %v1152, 0
        %vm1235 = vcmp.lt.s32.totalorder %v1159, 0
        %vm1236 = vcmp.lt.s32.totalorder %v1166, 0
        %vm1237 = vcmp.lt.s32.totalorder %v1173, 0
        %vm1238 = vcmp.lt.s32.totalorder %v1180, 0
        %vm1239 = vcmp.lt.s32.totalorder %v1187, 0
        %vm1240 = vcmp.lt.s32.totalorder %v1194, 0
        %vm1241 = vcmp.lt.s32.totalorder %v1201, 0
        %vm1242 = vmand %vm1222, %vm1202
        %vm1243 = vmand %vm1223, %vm1203
        %vm1244 = vmand %vm1224, %vm1204
        %vm1245 = vmand %vm1225, %vm1205
        %vm1246 = vmand %vm1226, %vm1206
        %vm1247 = vmand %vm1227, %vm1207
        %vm1248 = vmand %vm1228, %vm1208
        %vm1249 = vmand %vm1229, %vm1209
        %vm1250 = vmand %vm1230, %vm1210
        %vm1251 = vmand %vm1231, %vm1211
        %vm1252 = vmand %vm1232, %vm1212
        %vm1253 = vmand %vm1233, %vm1213
        %vm1254 = vmand %vm1234, %vm1214
        %vm1255 = vmand %vm1235, %vm1215
        %vm1256 = vmand %vm1236, %vm1216
        %vm1257 = vmand %vm1237, %vm1217
        %vm1258 = vmand %vm1238, %vm1218
        %vm1259 = vmand %vm1239, %vm1219
        %vm1260 = vmand %vm1240, %vm1220
        %vm1261 = vmand %vm1241, %vm1221
        %v1262 = vadd.s32 %v1068, 16
        %v1263 = vadd.s32 %v1075, 16
        %v1264 = vadd.s32 %v1082, 16
        %v1265 = vadd.s32 %v1089, 16
        %v1266 = vadd.s32 %v1096, 16
        %v1267 = vadd.s32 %v1103, 16
        %v1268 = vadd.s32 %v1110, 16
        %v1269 = vadd.s32 %v1117, 16
        %v1270 = vadd.s32 %v1124, 16
        %v1271 = vadd.s32 %v1131, 16
        %v1272 = vadd.s32 %v1138, 16
        %v1273 = vadd.s32 %v1145, 16
        %v1274 = vadd.s32 %v1152, 16
        %v1275 = vadd.s32 %v1159, 16
        %v1276 = vadd.s32 %v1166, 16
        %v1277 = vadd.s32 %v1173, 16
        %v1278 = vadd.s32 %v1180, 16
        %v1279 = vadd.s32 %v1187, 16
        %v1280 = vadd.s32 %v1194, 16
        %v1281 = vadd.s32 %v1201, 16
        %v1282 = vsel %vm1242, %v1262, %v1068
        %v1283 = vsel %vm1243, %v1263, %v1075
        %v1284 = vsel %vm1244, %v1264, %v1082
        %v1285 = vsel %vm1245, %v1265, %v1089
        %v1286 = vsel %vm1246, %v1266, %v1096
        %v1287 = vsel %vm1247, %v1267, %v1103
        %v1288 = vsel %vm1248, %v1268, %v1110
        %v1289 = vsel %vm1249, %v1269, %v1117
        %v1290 = vsel %vm1250, %v1270, %v1124
        %v1291 = vsel %vm1251, %v1271, %v1131
        %v1292 = vsel %vm1252, %v1272, %v1138
        %v1293 = vsel %vm1253, %v1273, %v1145
        %v1294 = vsel %vm1254, %v1274, %v1152
        %v1295 = vsel %vm1255, %v1275, %v1159
        %v1296 = vsel %vm1256, %v1276, %v1166
        %v1297 = vsel %vm1257, %v1277, %v1173
        %v1298 = vsel %vm1258, %v1278, %v1180
        %v1299 = vsel %vm1259, %v1279, %v1187
        %v1300 = vsel %vm1260, %v1280, %v1194
        %v1301 = vsel %vm1261, %v1281, %v1201
        %vm1302 = vcmp.ge.s32.totalorder %v1282, 1
        %vm1303 = vcmp.ge.s32.totalorder %v1283, 1
        %vm1304 = vcmp.ge.s32.totalorder %v1284, 1
        %vm1305 = vcmp.ge.s32.totalorder %v1285, 1
        %vm1306 = vcmp.ge.s32.totalorder %v1286, 1
        %vm1307 = vcmp.ge.s32.totalorder %v1287, 1
        %vm1308 = vcmp.ge.s32.totalorder %v1288, 1
        %vm1309 = vcmp.ge.s32.totalorder %v1289, 1
        %vm1310 = vcmp.ge.s32.totalorder %v1290, 1
        %vm1311 = vcmp.ge.s32.totalorder %v1291, 1
        %vm1312 = vcmp.ge.s32.totalorder %v1292, 1
        %vm1313 = vcmp.ge.s32.totalorder %v1293, 1
        %vm1314 = vcmp.ge.s32.totalorder %v1294, 1
        %vm1315 = vcmp.ge.s32.totalorder %v1295, 1
        %vm1316 = vcmp.ge.s32.totalorder %v1296, 1
        %vm1317 = vcmp.ge.s32.totalorder %v1297, 1
        %vm1318 = vcmp.ge.s32.totalorder %v1298, 1
        %vm1319 = vcmp.ge.s32.totalorder %v1299, 1
        %vm1320 = vcmp.ge.s32.totalorder %v1300, 1
        %vm1321 = vcmp.ge.s32.totalorder %v1301, 1
        %vm1322 = vsmask.f32 256
        %v1324 = vshrl.u32 %v1052, 16
        %v1326 = vrot.slane %v1324, 7
        %v1327 = vshll.u32 %v1052, 16
        %v1329 = vor.u32 %v1326, %v1327
        %v1331 = vshrl.u32 %v1053, 16
        %v1333 = vrot.slane %v1331, 7
        %v1334 = vshll.u32 %v1053, 16
        %v1336 = vor.u32 %v1333, %v1334
        %v1337 = vsel %vm1322, %v1326, %v1336
        %v1339 = vshrl.u32 %v1054, 16
        %v1341 = vrot.slane %v1339, 7
        %v1342 = vshll.u32 %v1054, 16
        %v1344 = vor.u32 %v1341, %v1342
        %v1345 = vsel %vm1322, %v1333, %v1344
        %v1347 = vshrl.u32 %v1055, 16
        %v1349 = vrot.slane %v1347, 7
        %v1350 = vshll.u32 %v1055, 16
        %v1352 = vor.u32 %v1349, %v1350
        %v1353 = vsel %vm1322, %v1341, %v1352
        %v1355 = vshrl.u32 %v1056, 16
        %v1357 = vrot.slane %v1355, 7
        %v1358 = vshll.u32 %v1056, 16
        %v1360 = vor.u32 %v1357, %v1358
        %v1361 = vsel %vm1322, %v1349, %v1360
        %v1363 = vshrl.u32 %v1057, 16
        %v1365 = vrot.slane %v1363, 7
        %v1366 = vshll.u32 %v1057, 16
        %v1368 = vor.u32 %v1365, %v1366
        %v1369 = vsel %vm1322, %v1357, %v1368
        %v1371 = vshrl.u32 %v1058, 16
        %v1373 = vrot.slane %v1371, 7
        %v1374 = vshll.u32 %v1058, 16
        %v1376 = vor.u32 %v1373, %v1374
        %v1377 = vsel %vm1322, %v1365, %v1376
        %v1379 = vshrl.u32 %v1059, 16
        %v1381 = vrot.slane %v1379, 7
        %v1382 = vshll.u32 %v1059, 16
        %v1384 = vor.u32 %v1381, %v1382
        %v1385 = vsel %vm1322, %v1373, %v1384
        %v1387 = vshrl.u32 %v1060, 16
        %v1389 = vrot.slane %v1387, 7
        %v1390 = vshll.u32 %v1060, 16
        %v1392 = vor.u32 %v1389, %v1390
        %v1393 = vsel %vm1322, %v1381, %v1392
        %v1395 = vshrl.u32 %v1061, 16
        %v1397 = vrot.slane %v1395, 7
        %v1398 = vshll.u32 %v1061, 16
        %v1400 = vor.u32 %v1397, %v1398
        %v1401 = vsel %vm1322, %v1389, %v1400
        %vm1412 = vcmask 1040384
        %vm1413 = vmand %vm1412, %vm1322
        %v1414 = vsel %vm1413, 0, %v1329
        %v1415 = vsel %vm1302, 1, 0
        %v1416 = vsel %vm1303, 1, 0
        %v1417 = vsel %vm1304, 1, 0
        %v1418 = vsel %vm1305, 1, 0
        %v1419 = vsel %vm1306, 1, 0
        %v1420 = vsel %vm1307, 1, 0
        %v1421 = vsel %vm1308, 1, 0
        %v1422 = vsel %vm1309, 1, 0
        %v1423 = vsel %vm1310, 1, 0
        %v1424 = vsel %vm1311, 1, 0
        %v1425 = vsel %vm1312, 1, 0
        %v1426 = vsel %vm1313, 1, 0
        %v1427 = vsel %vm1314, 1, 0
        %v1428 = vsel %vm1315, 1, 0
        %v1429 = vsel %vm1316, 1, 0
        %v1430 = vsel %vm1317, 1, 0
        %v1431 = vsel %vm1318, 1, 0
        %v1432 = vsel %vm1319, 1, 0
        %v1433 = vsel %vm1320, 1, 0
        %v1434 = vsel %vm1321, 1, 0
        %vm1435 = vcmp.eq.s32.totalorder %v1415, 1
        %vm1436 = vcmp.eq.s32.totalorder %v1416, 1
        %vm1437 = vcmp.eq.s32.totalorder %v1417, 1
        %vm1438 = vcmp.eq.s32.totalorder %v1418, 1
        %vm1439 = vcmp.eq.s32.totalorder %v1419, 1
        %vm1440 = vcmp.eq.s32.totalorder %v1420, 1
        %vm1441 = vcmp.eq.s32.totalorder %v1421, 1
        %vm1442 = vcmp.eq.s32.totalorder %v1422, 1
        %vm1443 = vcmp.eq.s32.totalorder %v1423, 1
        %vm1444 = vcmp.eq.s32.totalorder %v1424, 1
        %vm1445 = vcmp.eq.s32.totalorder %v1425, 1
        %vm1446 = vcmp.eq.s32.totalorder %v1426, 1
        %vm1447 = vcmp.eq.s32.totalorder %v1427, 1
        %vm1448 = vcmp.eq.s32.totalorder %v1428, 1
        %vm1449 = vcmp.eq.s32.totalorder %v1429, 1
        %vm1450 = vcmp.eq.s32.totalorder %v1430, 1
        %vm1451 = vcmp.eq.s32.totalorder %v1431, 1
        %vm1452 = vcmp.eq.s32.totalorder %v1432, 1
        %vm1453 = vcmp.eq.s32.totalorder %v1433, 1
        %vm1454 = vcmp.eq.s32.totalorder %v1434, 1
        %vm1455 = vmpackc.low %vm1435, %vm1435
        %vm1456 = vmpackc.low %vm1436, %vm1436
        %vm1457 = vmpackc.low %vm1437, %vm1437
        %vm1458 = vmpackc.low %vm1438, %vm1438
        %vm1459 = vmpackc.low %vm1439, %vm1439
        %vm1460 = vmpackc.low %vm1440, %vm1440
        %vm1461 = vmpackc.low %vm1441, %vm1441
        %vm1462 = vmpackc.low %vm1442, %vm1442
        %vm1463 = vmpackc.low %vm1443, %vm1443
        %vm1464 = vmpackc.low %vm1444, %vm1444
        %vm1465 = vmpackc.low %vm1445, %vm1445
        %vm1466 = vmpackc.low %vm1446, %vm1446
        %vm1467 = vmpackc.low %vm1447, %vm1447
        %vm1468 = vmpackc.low %vm1448, %vm1448
        %vm1469 = vmpackc.low %vm1449, %vm1449
        %vm1470 = vmpackc.low %vm1450, %vm1450
        %vm1471 = vmpackc.low %vm1451, %vm1451
        %vm1472 = vmpackc.low %vm1452, %vm1452
        %vm1473 = vmpackc.low %vm1453, %vm1453
        %vm1474 = vmpackc.low %vm1454, %vm1454
        %v1475 = vsel %vm1455, 65537, 0
        %v1476 = vsel %vm1456, 65537, 0
        %v1477 = vsel %vm1457, 65537, 0
        %v1478 = vsel %vm1458, 65537, 0
        %v1479 = vsel %vm1459, 65537, 0
        %v1480 = vsel %vm1460, 65537, 0
        %v1481 = vsel %vm1461, 65537, 0
        %v1482 = vsel %vm1462, 65537, 0
        %v1483 = vsel %vm1463, 65537, 0
        %v1484 = vsel %vm1464, 65537, 0
        %v1485 = vsel %vm1465, 65537, 0
        %v1486 = vsel %vm1466, 65537, 0
        %v1487 = vsel %vm1467, 65537, 0
        %v1488 = vsel %vm1468, 65537, 0
        %v1489 = vsel %vm1469, 65537, 0
        %v1490 = vsel %vm1470, 65537, 0
        %v1491 = vsel %vm1471, 65537, 0
        %v1492 = vsel %vm1472, 65537, 0
        %v1493 = vsel %vm1473, 65537, 0
        %v1494 = vsel %vm1474, 65537, 0
        %v1495 = vunpack.c.l.b16 %v1475
        %v1496 = vunpack.c.l.b16 %v1476
        %v1497 = vunpack.c.l.b16 %v1477
        %v1498 = vunpack.c.l.b16 %v1478
        %v1499 = vunpack.c.l.b16 %v1479
        %v1500 = vunpack.c.l.b16 %v1480
        %v1501 = vunpack.c.l.b16 %v1481
        %v1502 = vunpack.c.l.b16 %v1482
        %v1503 = vunpack.c.l.b16 %v1483
        %v1504 = vunpack.c.l.b16 %v1484
        %v1505 = vunpack.c.l.b16 %v1485
        %v1506 = vunpack.c.l.b16 %v1486
        %v1507 = vunpack.c.l.b16 %v1487
        %v1508 = vunpack.c.l.b16 %v1488
        %v1509 = vunpack.c.l.b16 %v1489
        %v1510 = vunpack.c.l.b16 %v1490
        %v1511 = vunpack.c.l.b16 %v1491
        %v1512 = vunpack.c.l.b16 %v1492
        %v1513 = vunpack.c.l.b16 %v1493
        %v1514 = vunpack.c.l.b16 %v1494
        %v1515 = vpack.c.b16 %v1496, %v1495
        %v1516 = vpack.c.b16 %v1498, %v1497
        %v1517 = vpack.c.b16 %v1500, %v1499
        %v1518 = vpack.c.b16 %v1502, %v1501
        %v1519 = vpack.c.b16 %v1504, %v1503
        %v1520 = vpack.c.b16 %v1506, %v1505
        %v1521 = vpack.c.b16 %v1508, %v1507
        %v1522 = vpack.c.b16 %v1510, %v1509
        %v1523 = vpack.c.b16 %v1512, %v1511
        %v1524 = vpack.c.b16 %v1514, %v1513
        %vm1525 = vcmp.ne.s16.totalorder %v1515, 0
        %vm1526 = vcmp.ne.s16.totalorder %v1516, 0
        %vm1527 = vcmp.ne.s16.totalorder %v1517, 0
        %vm1528 = vcmp.ne.s16.totalorder %v1518, 0
        %vm1529 = vcmp.ne.s16.totalorder %v1519, 0
        %vm1530 = vcmp.ne.s16.totalorder %v1520, 0
        %vm1531 = vcmp.ne.s16.totalorder %v1521, 0
        %vm1532 = vcmp.ne.s16.totalorder %v1522, 0
        %vm1533 = vcmp.ne.s16.totalorder %v1523, 0
        %vm1534 = vcmp.ne.s16.totalorder %v1524, 0
        %v1535 = vsel %vm1525, %v1414, 0
        %v1536 = vsel %vm1526, %v1337, 0
        %v1537 = vsel %vm1527, %v1345, 0
        %v1538 = vsel %vm1528, %v1353, 0
        %v1539 = vsel %vm1529, %v1361, 0
        %v1540 = vsel %vm1530, %v1369, 0
        %v1541 = vsel %vm1531, %v1377, 0
        %v1542 = vsel %vm1532, %v1385, 0
        %v1543 = vsel %vm1533, %v1393, 0
        %v1544 = vsel %vm1534, %v1401, 0
        %vm1545 = vcmp.le.s32.totalorder %v1282, 14
        %vm1546 = vcmp.le.s32.totalorder %v1283, 14
        %vm1547 = vcmp.le.s32.totalorder %v1284, 14
        %vm1548 = vcmp.le.s32.totalorder %v1285, 14
        %vm1549 = vcmp.le.s32.totalorder %v1286, 14
        %vm1550 = vcmp.le.s32.totalorder %v1287, 14
        %vm1551 = vcmp.le.s32.totalorder %v1288, 14
        %vm1552 = vcmp.le.s32.totalorder %v1289, 14
        %vm1553 = vcmp.le.s32.totalorder %v1290, 14
        %vm1554 = vcmp.le.s32.totalorder %v1291, 14
        %vm1555 = vcmp.le.s32.totalorder %v1292, 14
        %vm1556 = vcmp.le.s32.totalorder %v1293, 14
        %vm1557 = vcmp.le.s32.totalorder %v1294, 14
        %vm1558 = vcmp.le.s32.totalorder %v1295, 14
        %vm1559 = vcmp.le.s32.totalorder %v1296, 14
        %vm1560 = vcmp.le.s32.totalorder %v1297, 14
        %vm1561 = vcmp.le.s32.totalorder %v1298, 14
        %vm1562 = vcmp.le.s32.totalorder %v1299, 14
        %vm1563 = vcmp.le.s32.totalorder %v1300, 14
        %vm1564 = vcmp.le.s32.totalorder %v1301, 14
        %vm1565 = vsmask.f32 7424
        %v1566 = vrot.slane %v1327, 1
        %v1567 = vor.u32 %v1324, %v1566
        %v1568 = vrot.slane %v1334, 1
        %v1569 = vsel %vm1565, %v1567, %v1568
        %v1570 = vor.u32 %v1331, %v1568
        %v1571 = vrot.slane %v1342, 1
        %v1572 = vsel %vm1565, %v1570, %v1571
        %v1573 = vor.u32 %v1339, %v1571
        %v1574 = vrot.slane %v1350, 1
        %v1575 = vsel %vm1565, %v1573, %v1574
        %v1576 = vor.u32 %v1347, %v1574
        %v1577 = vrot.slane %v1358, 1
        %v1578 = vsel %vm1565, %v1576, %v1577
        %v1579 = vor.u32 %v1355, %v1577
        %v1580 = vrot.slane %v1366, 1
        %v1581 = vsel %vm1565, %v1579, %v1580
        %v1582 = vor.u32 %v1363, %v1580
        %v1583 = vrot.slane %v1374, 1
        %v1584 = vsel %vm1565, %v1582, %v1583
        %v1585 = vor.u32 %v1371, %v1583
        %v1586 = vrot.slane %v1382, 1
        %v1587 = vsel %vm1565, %v1585, %v1586
        %v1588 = vor.u32 %v1379, %v1586
        %v1589 = vrot.slane %v1390, 1
        %v1590 = vsel %vm1565, %v1588, %v1589
        %v1591 = vor.u32 %v1387, %v1589
        %v1592 = vrot.slane %v1398, 1
        %v1593 = vsel %vm1565, %v1591, %v1592
        %v1594 = vor.u32 %v1395, %v1592
        %vm1605 = vcmask 1047552
        %vm1606 = vmand %vm1605, %vm1565
        %v1607 = vsel %vm1606, %v1594, 0
        %v1608 = vsel %vm1545, 1, 0
        %v1609 = vsel %vm1546, 1, 0
        %v1610 = vsel %vm1547, 1, 0
        %v1611 = vsel %vm1548, 1, 0
        %v1612 = vsel %vm1549, 1, 0
        %v1613 = vsel %vm1550, 1, 0
        %v1614 = vsel %vm1551, 1, 0
        %v1615 = vsel %vm1552, 1, 0
        %v1616 = vsel %vm1553, 1, 0
        %v1617 = vsel %vm1554, 1, 0
        %v1618 = vsel %vm1555, 1, 0
        %v1619 = vsel %vm1556, 1, 0
        %v1620 = vsel %vm1557, 1, 0
        %v1621 = vsel %vm1558, 1, 0
        %v1622 = vsel %vm1559, 1, 0
        %v1623 = vsel %vm1560, 1, 0
        %v1624 = vsel %vm1561, 1, 0
        %v1625 = vsel %vm1562, 1, 0
        %v1626 = vsel %vm1563, 1, 0
        %v1627 = vsel %vm1564, 1, 0
        %vm1628 = vcmp.eq.s32.totalorder %v1608, 1
        %vm1629 = vcmp.eq.s32.totalorder %v1609, 1
        %vm1630 = vcmp.eq.s32.totalorder %v1610, 1
        %vm1631 = vcmp.eq.s32.totalorder %v1611, 1
        %vm1632 = vcmp.eq.s32.totalorder %v1612, 1
        %vm1633 = vcmp.eq.s32.totalorder %v1613, 1
        %vm1634 = vcmp.eq.s32.totalorder %v1614, 1
        %vm1635 = vcmp.eq.s32.totalorder %v1615, 1
        %vm1636 = vcmp.eq.s32.totalorder %v1616, 1
        %vm1637 = vcmp.eq.s32.totalorder %v1617, 1
        %vm1638 = vcmp.eq.s32.totalorder %v1618, 1
        %vm1639 = vcmp.eq.s32.totalorder %v1619, 1
        %vm1640 = vcmp.eq.s32.totalorder %v1620, 1
        %vm1641 = vcmp.eq.s32.totalorder %v1621, 1
        %vm1642 = vcmp.eq.s32.totalorder %v1622, 1
        %vm1643 = vcmp.eq.s32.totalorder %v1623, 1
        %vm1644 = vcmp.eq.s32.totalorder %v1624, 1
        %vm1645 = vcmp.eq.s32.totalorder %v1625, 1
        %vm1646 = vcmp.eq.s32.totalorder %v1626, 1
        %vm1647 = vcmp.eq.s32.totalorder %v1627, 1
        %vm1648 = vmpackc.low %vm1628, %vm1628
        %vm1649 = vmpackc.low %vm1629, %vm1629
        %vm1650 = vmpackc.low %vm1630, %vm1630
        %vm1651 = vmpackc.low %vm1631, %vm1631
        %vm1652 = vmpackc.low %vm1632, %vm1632
        %vm1653 = vmpackc.low %vm1633, %vm1633
        %vm1654 = vmpackc.low %vm1634, %vm1634
        %vm1655 = vmpackc.low %vm1635, %vm1635
        %vm1656 = vmpackc.low %vm1636, %vm1636
        %vm1657 = vmpackc.low %vm1637, %vm1637
        %vm1658 = vmpackc.low %vm1638, %vm1638
        %vm1659 = vmpackc.low %vm1639, %vm1639
        %vm1660 = vmpackc.low %vm1640, %vm1640
        %vm1661 = vmpackc.low %vm1641, %vm1641
        %vm1662 = vmpackc.low %vm1642, %vm1642
        %vm1663 = vmpackc.low %vm1643, %vm1643
        %vm1664 = vmpackc.low %vm1644, %vm1644
        %vm1665 = vmpackc.low %vm1645, %vm1645
        %vm1666 = vmpackc.low %vm1646, %vm1646
        %vm1667 = vmpackc.low %vm1647, %vm1647
        %v1668 = vsel %vm1648, 65537, 0
        %v1669 = vsel %vm1649, 65537, 0
        %v1670 = vsel %vm1650, 65537, 0
        %v1671 = vsel %vm1651, 65537, 0
        %v1672 = vsel %vm1652, 65537, 0
        %v1673 = vsel %vm1653, 65537, 0
        %v1674 = vsel %vm1654, 65537, 0
        %v1675 = vsel %vm1655, 65537, 0
        %v1676 = vsel %vm1656, 65537, 0
        %v1677 = vsel %vm1657, 65537, 0
        %v1678 = vsel %vm1658, 65537, 0
        %v1679 = vsel %vm1659, 65537, 0
        %v1680 = vsel %vm1660, 65537, 0
        %v1681 = vsel %vm1661, 65537, 0
        %v1682 = vsel %vm1662, 65537, 0
        %v1683 = vsel %vm1663, 65537, 0
        %v1684 = vsel %vm1664, 65537, 0
        %v1685 = vsel %vm1665, 65537, 0
        %v1686 = vsel %vm1666, 65537, 0
        %v1687 = vsel %vm1667, 65537, 0
        %v1688 = vunpack.c.l.b16 %v1668
        %v1689 = vunpack.c.l.b16 %v1669
        %v1690 = vunpack.c.l.b16 %v1670
        %v1691 = vunpack.c.l.b16 %v1671
        %v1692 = vunpack.c.l.b16 %v1672
        %v1693 = vunpack.c.l.b16 %v1673
        %v1694 = vunpack.c.l.b16 %v1674
        %v1695 = vunpack.c.l.b16 %v1675
        %v1696 = vunpack.c.l.b16 %v1676
        %v1697 = vunpack.c.l.b16 %v1677
        %v1698 = vunpack.c.l.b16 %v1678
        %v1699 = vunpack.c.l.b16 %v1679
        %v1700 = vunpack.c.l.b16 %v1680
        %v1701 = vunpack.c.l.b16 %v1681
        %v1702 = vunpack.c.l.b16 %v1682
        %v1703 = vunpack.c.l.b16 %v1683
        %v1704 = vunpack.c.l.b16 %v1684
        %v1705 = vunpack.c.l.b16 %v1685
        %v1706 = vunpack.c.l.b16 %v1686
        %v1707 = vunpack.c.l.b16 %v1687
        %v1708 = vpack.c.b16 %v1689, %v1688
        %v1709 = vpack.c.b16 %v1691, %v1690
        %v1710 = vpack.c.b16 %v1693, %v1692
        %v1711 = vpack.c.b16 %v1695, %v1694
        %v1712 = vpack.c.b16 %v1697, %v1696
        %v1713 = vpack.c.b16 %v1699, %v1698
        %v1714 = vpack.c.b16 %v1701, %v1700
        %v1715 = vpack.c.b16 %v1703, %v1702
        %v1716 = vpack.c.b16 %v1705, %v1704
        %v1717 = vpack.c.b16 %v1707, %v1706
        %vm1718 = vcmp.ne.s16.totalorder %v1708, 0
        %vm1719 = vcmp.ne.s16.totalorder %v1709, 0
        %vm1720 = vcmp.ne.s16.totalorder %v1710, 0
        %vm1721 = vcmp.ne.s16.totalorder %v1711, 0
        %vm1722 = vcmp.ne.s16.totalorder %v1712, 0
        %vm1723 = vcmp.ne.s16.totalorder %v1713, 0
        %vm1724 = vcmp.ne.s16.totalorder %v1714, 0
        %vm1725 = vcmp.ne.s16.totalorder %v1715, 0
        %vm1726 = vcmp.ne.s16.totalorder %v1716, 0
        %vm1727 = vcmp.ne.s16.totalorder %v1717, 0
        %v1728 = vsel %vm1718, %v1569, 0
        %v1729 = vsel %vm1719, %v1572, 0
        %v1730 = vsel %vm1720, %v1575, 0
        %v1731 = vsel %vm1721, %v1578, 0
        %v1732 = vsel %vm1722, %v1581, 0
        %v1733 = vsel %vm1723, %v1584, 0
        %v1734 = vsel %vm1724, %v1587, 0
        %v1735 = vsel %vm1725, %v1590, 0
        %v1736 = vsel %vm1726, %v1593, 0
        %v1737 = vsel %vm1727, %v1607, 0
        %v1738 = vld [vmem:[#allocation7] sm:$0xf]
        %v1739 = vld [vmem:[#allocation7 + $0x4] sm:$0xf]
        %v1740 = vld [vmem:[#allocation7 + $0x8] sm:$0xf]
        %v1741 = vld [vmem:[#allocation7 + $0xc] sm:$0xf]
        %v1742 = vld [vmem:[#allocation7 + $0x10] sm:$0xf]
        %v1743 = vld [vmem:[#allocation7 + $0x14] sm:$0xf]
        %v1744 = vld [vmem:[#allocation7 + $0x18] sm:$0xf]
        %v1745 = vld [vmem:[#allocation7 + $0x1c] sm:$0xf]
        %v1746 = vld [vmem:[#allocation7 + $0x20] sm:$0xf]
        %v1747 = vld [vmem:[#allocation7 + $0x24] sm:$0xf]
        %v1748 = vld [vmem:[#allocation7 + $0x28] sm:$0xf]
        %v1749 = vld [vmem:[#allocation7 + $0x2c] sm:$0xf]
        %v1750 = vld [vmem:[#allocation7 + $0x30] sm:$0xf]
        %v1751 = vld [vmem:[#allocation7 + $0x34] sm:$0xf]
        %v1752 = vld [vmem:[#allocation7 + $0x38] sm:$0xf]
        %v1753 = vld [vmem:[#allocation7 + $0x3c] sm:$0xf]
        %v1754 = vld [vmem:[#allocation7 + $0x40] sm:$0xf]
        %v1755 = vld [vmem:[#allocation7 + $0x44] sm:$0xf]
        %v1756 = vld [vmem:[#allocation7 + $0x48] sm:$0xf]
        %v1757 = vld [vmem:[#allocation7 + $0x4c] sm:$0xf]
        %v1758 = vld [vmem:[#allocation7 + $0x50] sm:$0xf]
        %v1759 = vld [vmem:[#allocation7 + $0x54] sm:$0xf]
        %v1760 = vld [vmem:[#allocation7 + $0x58] sm:$0xf]
        %v1761 = vld [vmem:[#allocation7 + $0x5c] sm:$0xf]
        %v1762 = vld [vmem:[#allocation7 + $0x60] sm:$0xf]
        %v1763 = vld [vmem:[#allocation7 + $0x64] sm:$0xf]
        %v1764 = vld [vmem:[#allocation7 + $0x68] sm:$0xf]
        %v1765 = vld [vmem:[#allocation7 + $0x6c] sm:$0xf]
        %v1766 = vld [vmem:[#allocation7 + $0x70] sm:$0xf]
        %v1767 = vld [vmem:[#allocation7 + $0x74] sm:$0xf]
        %v1768 = vld [vmem:[#allocation7 + $0x78] sm:$0xf]
        %v1769 = vld [vmem:[#allocation7 + $0x7c] sm:$0xf]
        %v1770 = vld [vmem:[#allocation7 + $0x80] sm:$0xf]
        %v1771 = vld [vmem:[#allocation7 + $0x84] sm:$0xf]
        %v1772 = vld [vmem:[#allocation7 + $0x88] sm:$0xf]
        %v1773 = vld [vmem:[#allocation7 + $0x8c] sm:$0xf]
        %v1774 = vld [vmem:[#allocation7 + $0x90] sm:$0xf]
        %v1775 = vld [vmem:[#allocation7 + $0x94] sm:$0xf]
        %v1776 = vld [vmem:[#allocation7 + $0x98] sm:$0xf]
        %v1777 = vld [vmem:[#allocation7 + $0x9c] sm:$0xf]
        %v1778 = vld [vmem:[#allocation7 + $0xa0] sm:$0xf]
        %v1779 = vld [vmem:[#allocation7 + $0xa4] sm:$0xf]
        %v1780 = vld [vmem:[#allocation7 + $0xa8] sm:$0xf]
        %v1781 = vld [vmem:[#allocation7 + $0xac] sm:$0xf]
        %v1782 = vld [vmem:[#allocation7 + $0xb0] sm:$0xf]
        %v1783 = vld [vmem:[#allocation7 + $0xb4] sm:$0xf]
        %v1784 = vld [vmem:[#allocation7 + $0xb8] sm:$0xf]
        %v1785 = vld [vmem:[#allocation7 + $0xbc] sm:$0xf]
        %v1786 = vld [vmem:[#allocation7 + $0xc0] sm:$0xf]
        %v1787 = vld [vmem:[#allocation7 + $0xc4] sm:$0xf]
        %v1788 = vld [vmem:[#allocation7 + $0xc8] sm:$0xf]
        %v1789 = vld [vmem:[#allocation7 + $0xcc] sm:$0xf]
        %v1790 = vld [vmem:[#allocation7 + $0xd0] sm:$0xf]
        %v1791 = vld [vmem:[#allocation7 + $0xd4] sm:$0xf]
        %v1792 = vld [vmem:[#allocation7 + $0xd8] sm:$0xf]
        %v1793 = vld [vmem:[#allocation7 + $0xdc] sm:$0xf]
        %v1794 = vld [vmem:[#allocation7 + $0xe0] sm:$0xf]
        %v1795 = vld [vmem:[#allocation7 + $0xe4] sm:$0xf]
        %v1796 = vld [vmem:[#allocation7 + $0xe8] sm:$0xf]
        %v1797 = vld [vmem:[#allocation7 + $0xec] sm:$0xf]
        %v1798 = vld [vmem:[#allocation7 + $0xf0] sm:$0xf]
        %v1799 = vld [vmem:[#allocation7 + $0xf4] sm:$0xf]
        %v1800 = vld [vmem:[#allocation7 + $0xf8] sm:$0xf]
        %v1801 = vld [vmem:[#allocation7 + $0xfc] sm:$0xf]
        %v1802 = vld [vmem:[#allocation7 + $0x100] sm:$0xf]
        %v1803 = vld [vmem:[#allocation7 + $0x104] sm:$0xf]
        %v1804 = vld [vmem:[#allocation7 + $0x108] sm:$0xf]
        %v1805 = vld [vmem:[#allocation7 + $0x10c] sm:$0xf]
        %v1806 = vld [vmem:[#allocation7 + $0x110] sm:$0xf]
        %v1807 = vld [vmem:[#allocation7 + $0x114] sm:$0xf]
        %v1808 = vld [vmem:[#allocation7 + $0x118] sm:$0xf]
        %v1809 = vld [vmem:[#allocation7 + $0x11c] sm:$0xf]
        %v1810 = vld [vmem:[#allocation7 + $0x120] sm:$0xf]
        %v1811 = vld [vmem:[#allocation7 + $0x124] sm:$0xf]
        %v1812 = vld [vmem:[#allocation7 + $0x128] sm:$0xf]
        %v1813 = vld [vmem:[#allocation7 + $0x12c] sm:$0xf]
        %v1814 = vld [vmem:[#allocation7 + $0x130] sm:$0xf]
        %v1815 = vld [vmem:[#allocation7 + $0x134] sm:$0xf]
        %v1816 = vld [vmem:[#allocation7 + $0x138] sm:$0xf]
        %v1817 = vld [vmem:[#allocation7 + $0x13c] sm:$0xf]
        %v1818 = vld [vmem:[#allocation7 + $0x140] sm:$0xf]
        %v1819 = vld [vmem:[#allocation7 + $0x144] sm:$0xf]
        %v1820 = vld [vmem:[#allocation7 + $0x148] sm:$0xf]
        %v1821 = vld [vmem:[#allocation7 + $0x14c] sm:$0xf]
        %v1822 = vld [vmem:[#allocation7 + $0x150] sm:$0xf]
        %v1823 = vld [vmem:[#allocation7 + $0x154] sm:$0xf]
        %v1824 = vld [vmem:[#allocation7 + $0x158] sm:$0xf]
        %v1825 = vld [vmem:[#allocation7 + $0x15c] sm:$0xf]
        %v1826 = vld [vmem:[#allocation7 + $0x160] sm:$0xf]
        %v1827 = vld [vmem:[#allocation7 + $0x164] sm:$0xf]
        %v1828 = vld [vmem:[#allocation7 + $0x168] sm:$0xf]
        %v1829 = vld [vmem:[#allocation7 + $0x16c] sm:$0xf]
        %v1830 = vld [vmem:[#allocation7 + $0x170] sm:$0xf]
        %v1831 = vld [vmem:[#allocation7 + $0x174] sm:$0xf]
        %v1832 = vld [vmem:[#allocation7 + $0x178] sm:$0xf]
        %v1833 = vld [vmem:[#allocation7 + $0x17c] sm:$0xf]
        %v1834 = vld [vmem:[#allocation7 + $0x180] sm:$0xf]
        %v1835 = vld [vmem:[#allocation7 + $0x184] sm:$0xf]
        %v1836 = vld [vmem:[#allocation7 + $0x188] sm:$0xf]
        %v1837 = vld [vmem:[#allocation7 + $0x18c] sm:$0xf]
        %v1838 = vld [vmem:[#allocation7 + $0x190] sm:$0xf]
        %v1839 = vld [vmem:[#allocation7 + $0x194] sm:$0xf]
        %v1840 = vld [vmem:[#allocation7 + $0x198] sm:$0xf]
        %v1841 = vld [vmem:[#allocation7 + $0x19c] sm:$0xf]
        %v1842 = vld [vmem:[#allocation7 + $0x1a0] sm:$0xf]
        %v1843 = vld [vmem:[#allocation7 + $0x1a4] sm:$0xf]
        %v1844 = vld [vmem:[#allocation7 + $0x1a8] sm:$0xf]
        %v1845 = vld [vmem:[#allocation7 + $0x1ac] sm:$0xf]
        %v1846 = vld [vmem:[#allocation7 + $0x1b0] sm:$0xf]
        %v1847 = vld [vmem:[#allocation7 + $0x1b4] sm:$0xf]
        %v1848 = vld [vmem:[#allocation7 + $0x1b8] sm:$0xf]
        %v1849 = vld [vmem:[#allocation7 + $0x1bc] sm:$0xf]
        %v1850 = vld [vmem:[#allocation7 + $0x1c0] sm:$0xf]
        %v1851 = vld [vmem:[#allocation7 + $0x1c4] sm:$0xf]
        %v1852 = vld [vmem:[#allocation7 + $0x1c8] sm:$0xf]
        %v1853 = vld [vmem:[#allocation7 + $0x1cc] sm:$0xf]
        %v1854 = vld [vmem:[#allocation7 + $0x1d0] sm:$0xf]
        %v1855 = vld [vmem:[#allocation7 + $0x1d4] sm:$0xf]
        %v1856 = vld [vmem:[#allocation7 + $0x1d8] sm:$0xf]
        %v1857 = vld [vmem:[#allocation7 + $0x1dc] sm:$0xf]
        %v1858 = vld [vmem:[#allocation7 + $0x1e0] sm:$0xf]
        %v1859 = vld [vmem:[#allocation7 + $0x1e4] sm:$0xf]
        %v1860 = vld [vmem:[#allocation7 + $0x1e8] sm:$0xf]
        %v1861 = vld [vmem:[#allocation7 + $0x1ec] sm:$0xf]
        %v1862 = vld [vmem:[#allocation7 + $0x1f0] sm:$0xf]
        %v1863 = vld [vmem:[#allocation7 + $0x1f4] sm:$0xf]
        %v1864 = vld [vmem:[#allocation7 + $0x1f8] sm:$0xf]
        %v1865 = vld [vmem:[#allocation7 + $0x1fc] sm:$0xf]
        %v1866 = vld [vmem:[#allocation7 + $0x200] sm:$0xf]
        %v1867 = vld [vmem:[#allocation7 + $0x204] sm:$0xf]
        %v1868 = vld [vmem:[#allocation7 + $0x208] sm:$0xf]
        %v1869 = vld [vmem:[#allocation7 + $0x20c] sm:$0xf]
        %v1870 = vld [vmem:[#allocation7 + $0x210] sm:$0xf]
        %v1871 = vld [vmem:[#allocation7 + $0x214] sm:$0xf]
        %v1872 = vld [vmem:[#allocation7 + $0x218] sm:$0xf]
        %v1873 = vld [vmem:[#allocation7 + $0x21c] sm:$0xf]
        %v1874 = vld [vmem:[#allocation7 + $0x220] sm:$0xf]
        %v1875 = vld [vmem:[#allocation7 + $0x224] sm:$0xf]
        %v1876 = vld [vmem:[#allocation7 + $0x228] sm:$0xf]
        %v1877 = vld [vmem:[#allocation7 + $0x22c] sm:$0xf]
        %v1878 = vld [vmem:[#allocation7 + $0x230] sm:$0xf]
        %v1879 = vld [vmem:[#allocation7 + $0x234] sm:$0xf]
        %v1880 = vld [vmem:[#allocation7 + $0x238] sm:$0xf]
        %v1881 = vld [vmem:[#allocation7 + $0x23c] sm:$0xf]
        %v2026 = vunpack.c.l.b16 %v1738
        %v2027 = vunpack.c.l.b16 %v1739
        %v2028 = vunpack.c.l.b16 %v1740
        %v2029 = vunpack.c.l.b16 %v1741
        %v2030 = vunpack.c.l.b16 %v1742
        %v2031 = vunpack.c.l.b16 %v1743
        %v2032 = vunpack.c.l.b16 %v1744
        %v2033 = vunpack.c.l.b16 %v1745
        %v2034 = vunpack.c.l.b16 %v1746
        %v2035 = vunpack.c.l.b16 %v1747
        %v2036 = vunpack.c.l.b16 %v1748
        %v2037 = vunpack.c.l.b16 %v1749
        %v2038 = vunpack.c.l.b16 %v1750
        %v2039 = vunpack.c.l.b16 %v1751
        %v2040 = vunpack.c.l.b16 %v1752
        %v2041 = vunpack.c.l.b16 %v1753
        %v2042 = vunpack.c.l.b16 %v1754
        %v2043 = vunpack.c.l.b16 %v1755
        %v2044 = vunpack.c.l.b16 %v1756
        %v2045 = vunpack.c.l.b16 %v1757
        %v2046 = vunpack.c.l.b16 %v1758
        %v2047 = vunpack.c.l.b16 %v1759
        %v2048 = vunpack.c.l.b16 %v1760
        %v2049 = vunpack.c.l.b16 %v1761
        %v2050 = vunpack.c.l.b16 %v1762
        %v2051 = vunpack.c.l.b16 %v1763
        %v2052 = vunpack.c.l.b16 %v1764
        %v2053 = vunpack.c.l.b16 %v1765
        %v2054 = vunpack.c.l.b16 %v1766
        %v2055 = vunpack.c.l.b16 %v1767
        %v2056 = vunpack.c.l.b16 %v1768
        %v2057 = vunpack.c.l.b16 %v1769
        %v2058 = vunpack.c.l.b16 %v1770
        %v2059 = vunpack.c.l.b16 %v1771
        %v2060 = vunpack.c.l.b16 %v1772
        %v2061 = vunpack.c.l.b16 %v1773
        %v2062 = vunpack.c.l.b16 %v1774
        %v2063 = vunpack.c.l.b16 %v1775
        %v2064 = vunpack.c.l.b16 %v1776
        %v2065 = vunpack.c.l.b16 %v1777
        %v2066 = vunpack.c.l.b16 %v1778
        %v2067 = vunpack.c.l.b16 %v1779
        %v2068 = vunpack.c.l.b16 %v1780
        %v2069 = vunpack.c.l.b16 %v1781
        %v2070 = vunpack.c.l.b16 %v1782
        %v2071 = vunpack.c.l.b16 %v1783
        %v2072 = vunpack.c.l.b16 %v1784
        %v2073 = vunpack.c.l.b16 %v1785
        %v2074 = vunpack.c.l.b16 %v1786
        %v2075 = vunpack.c.l.b16 %v1787
        %v2076 = vunpack.c.l.b16 %v1788
        %v2077 = vunpack.c.l.b16 %v1789
        %v2078 = vunpack.c.l.b16 %v1790
        %v2079 = vunpack.c.l.b16 %v1791
        %v2080 = vunpack.c.l.b16 %v1792
        %v2081 = vunpack.c.l.b16 %v1793
        %v2082 = vunpack.c.l.b16 %v1794
        %v2083 = vunpack.c.l.b16 %v1795
        %v2084 = vunpack.c.l.b16 %v1796
        %v2085 = vunpack.c.l.b16 %v1797
        %v2086 = vunpack.c.l.b16 %v1798
        %v2087 = vunpack.c.l.b16 %v1799
        %v2088 = vunpack.c.l.b16 %v1800
        %v2089 = vunpack.c.l.b16 %v1801
        %v2090 = vunpack.c.l.b16 %v1802
        %v2091 = vunpack.c.l.b16 %v1803
        %v2092 = vunpack.c.l.b16 %v1804
        %v2093 = vunpack.c.l.b16 %v1805
        %v2094 = vunpack.c.l.b16 %v1806
        %v2095 = vunpack.c.l.b16 %v1807
        %v2096 = vunpack.c.l.b16 %v1808
        %v2097 = vunpack.c.l.b16 %v1809
        %v2098 = vunpack.c.l.b16 %v1810
        %v2099 = vunpack.c.l.b16 %v1811
        %v2100 = vunpack.c.l.b16 %v1812
        %v2101 = vunpack.c.l.b16 %v1813
        %v2102 = vunpack.c.l.b16 %v1814
        %v2103 = vunpack.c.l.b16 %v1815
        %v2104 = vunpack.c.l.b16 %v1816
        %v2105 = vunpack.c.l.b16 %v1817
        %v2106 = vunpack.c.l.b16 %v1818
        %v2107 = vunpack.c.l.b16 %v1819
        %v2108 = vunpack.c.l.b16 %v1820
        %v2109 = vunpack.c.l.b16 %v1821
        %v2110 = vunpack.c.l.b16 %v1822
        %v2111 = vunpack.c.l.b16 %v1823
        %v2112 = vunpack.c.l.b16 %v1824
        %v2113 = vunpack.c.l.b16 %v1825
        %v2114 = vunpack.c.l.b16 %v1826
        %v2115 = vunpack.c.l.b16 %v1827
        %v2116 = vunpack.c.l.b16 %v1828
        %v2117 = vunpack.c.l.b16 %v1829
        %v2118 = vunpack.c.l.b16 %v1830
        %v2119 = vunpack.c.l.b16 %v1831
        %v2120 = vunpack.c.l.b16 %v1832
        %v2121 = vunpack.c.l.b16 %v1833
        %v2122 = vunpack.c.l.b16 %v1834
        %v2123 = vunpack.c.l.b16 %v1835
        %v2124 = vunpack.c.l.b16 %v1836
        %v2125 = vunpack.c.l.b16 %v1837
        %v2126 = vunpack.c.l.b16 %v1838
        %v2127 = vunpack.c.l.b16 %v1839
        %v2128 = vunpack.c.l.b16 %v1840
        %v2129 = vunpack.c.l.b16 %v1841
        %v2130 = vunpack.c.l.b16 %v1842
        %v2131 = vunpack.c.l.b16 %v1843
        %v2132 = vunpack.c.l.b16 %v1844
        %v2133 = vunpack.c.l.b16 %v1845
        %v2134 = vunpack.c.l.b16 %v1846
        %v2135 = vunpack.c.l.b16 %v1847
        %v2136 = vunpack.c.l.b16 %v1848
        %v2137 = vunpack.c.l.b16 %v1849
        %v2138 = vunpack.c.l.b16 %v1850
        %v2139 = vunpack.c.l.b16 %v1851
        %v2140 = vunpack.c.l.b16 %v1852
        %v2141 = vunpack.c.l.b16 %v1853
        %v2142 = vunpack.c.l.b16 %v1854
        %v2143 = vunpack.c.l.b16 %v1855
        %v2144 = vunpack.c.l.b16 %v1856
        %v2145 = vunpack.c.l.b16 %v1857
        %v2146 = vunpack.c.l.b16 %v1858
        %v2147 = vunpack.c.l.b16 %v1859
        %v2148 = vunpack.c.l.b16 %v1860
        %v2149 = vunpack.c.l.b16 %v1861
        %v2150 = vunpack.c.l.b16 %v1862
        %v2151 = vunpack.c.l.b16 %v1863
        %v2152 = vunpack.c.l.b16 %v1864
        %v2153 = vunpack.c.l.b16 %v1865
        %v2154 = vunpack.c.l.b16 %v1866
        %v2155 = vunpack.c.l.b16 %v1867
        %v2156 = vunpack.c.l.b16 %v1868
        %v2157 = vunpack.c.l.b16 %v1869
        %v2158 = vunpack.c.l.b16 %v1870
        %v2159 = vunpack.c.l.b16 %v1871
        %v2160 = vunpack.c.l.b16 %v1872
        %v2161 = vunpack.c.l.b16 %v1873
        %v2162 = vunpack.c.l.b16 %v1874
        %v2163 = vunpack.c.l.b16 %v1875
        %v2164 = vunpack.c.l.b16 %v1876
        %v2165 = vunpack.c.l.b16 %v1877
        %v2166 = vunpack.c.l.b16 %v1878
        %v2167 = vunpack.c.l.b16 %v1879
        %v2168 = vunpack.c.l.b16 %v1880
        %v2169 = vunpack.c.l.b16 %v1881
        %v2170 = vpack.c.b16 %v2027, %v2026
        %v2171 = vpack.c.b16 %v2029, %v2028
        %v2172 = vpack.c.b16 %v2031, %v2030
        %v2173 = vpack.c.b16 %v2033, %v2032
        %v2174 = vpack.c.b16 %v2035, %v2034
        %v2175 = vpack.c.b16 %v2037, %v2036
        %v2176 = vpack.c.b16 %v2039, %v2038
        %v2177 = vpack.c.b16 %v2041, %v2040
        %v2178 = vpack.c.b16 %v2043, %v2042
        %v2179 = vpack.c.b16 %v2045, %v2044
        %v2180 = vpack.c.b16 %v2047, %v2046
        %v2181 = vpack.c.b16 %v2049, %v2048
        %v2182 = vpack.c.b16 %v2051, %v2050
        %v2183 = vpack.c.b16 %v2053, %v2052
        %v2184 = vpack.c.b16 %v2055, %v2054
        %v2185 = vpack.c.b16 %v2057, %v2056
        %v2186 = vpack.c.b16 %v2059, %v2058
        %v2187 = vpack.c.b16 %v2061, %v2060
        %v2188 = vpack.c.b16 %v2063, %v2062
        %v2189 = vpack.c.b16 %v2065, %v2064
        %v2190 = vpack.c.b16 %v2067, %v2066
        %v2191 = vpack.c.b16 %v2069, %v2068
        %v2192 = vpack.c.b16 %v2071, %v2070
        %v2193 = vpack.c.b16 %v2073, %v2072
        %v2194 = vpack.c.b16 %v2075, %v2074
        %v2195 = vpack.c.b16 %v2077, %v2076
        %v2196 = vpack.c.b16 %v2079, %v2078
        %v2197 = vpack.c.b16 %v2081, %v2080
        %v2198 = vpack.c.b16 %v2083, %v2082
        %v2199 = vpack.c.b16 %v2085, %v2084
        %v2200 = vpack.c.b16 %v2087, %v2086
        %v2201 = vpack.c.b16 %v2089, %v2088
        %v2202 = vpack.c.b16 %v2091, %v2090
        %v2203 = vpack.c.b16 %v2093, %v2092
        %v2204 = vpack.c.b16 %v2095, %v2094
        %v2205 = vpack.c.b16 %v2097, %v2096
        %v2206 = vpack.c.b16 %v2099, %v2098
        %v2207 = vpack.c.b16 %v2101, %v2100
        %v2208 = vpack.c.b16 %v2103, %v2102
        %v2209 = vpack.c.b16 %v2105, %v2104
        %v2210 = vpack.c.b16 %v2107, %v2106
        %v2211 = vpack.c.b16 %v2109, %v2108
        %v2212 = vpack.c.b16 %v2111, %v2110
        %v2213 = vpack.c.b16 %v2113, %v2112
        %v2214 = vpack.c.b16 %v2115, %v2114
        %v2215 = vpack.c.b16 %v2117, %v2116
        %v2216 = vpack.c.b16 %v2119, %v2118
        %v2217 = vpack.c.b16 %v2121, %v2120
        %v2218 = vpack.c.b16 %v2123, %v2122
        %v2219 = vpack.c.b16 %v2125, %v2124
        %v2220 = vpack.c.b16 %v2127, %v2126
        %v2221 = vpack.c.b16 %v2129, %v2128
        %v2222 = vpack.c.b16 %v2131, %v2130
        %v2223 = vpack.c.b16 %v2133, %v2132
        %v2224 = vpack.c.b16 %v2135, %v2134
        %v2225 = vpack.c.b16 %v2137, %v2136
        %v2226 = vpack.c.b16 %v2139, %v2138
        %v2227 = vpack.c.b16 %v2141, %v2140
        %v2228 = vpack.c.b16 %v2143, %v2142
        %v2229 = vpack.c.b16 %v2145, %v2144
        %v2230 = vpack.c.b16 %v2147, %v2146
        %v2231 = vpack.c.b16 %v2149, %v2148
        %v2232 = vpack.c.b16 %v2151, %v2150
        %v2233 = vpack.c.b16 %v2153, %v2152
        %v2234 = vpack.c.b16 %v2155, %v2154
        %v2235 = vpack.c.b16 %v2157, %v2156
        %v2236 = vpack.c.b16 %v2159, %v2158
        %v2237 = vpack.c.b16 %v2161, %v2160
        %v2238 = vpack.c.b16 %v2163, %v2162
        %v2239 = vpack.c.b16 %v2165, %v2164
        %v2240 = vpack.c.b16 %v2167, %v2166
        %v2241 = vpack.c.b16 %v2169, %v2168
        %2314 = vmatprep.subr.bf16.mxu0 0
        %2315 = vmatpush1.bf16.msra.mxu0 %v2177
        %2316 = vmatprep.subr.bf16.mxu0 0
        %2317 = vmatpush1.bf16.msra.mxu0 %v2176
        %2318 = vmatprep.subr.bf16.mxu0 0
        %2319 = vmatpush1.bf16.msra.mxu0 %v2175
        %2320 = vmatprep.subr.bf16.mxu0 0
        %2321 = vmatpush1.bf16.msra.mxu0 %v2174
        %2322 = vmatprep.subr.bf16.mxu0 0
        %2323 = vmatpush1.bf16.msra.mxu0 %v2173
        %2324 = vmatprep.subr.bf16.mxu0 0
        %2325 = vmatpush1.bf16.msra.mxu0 %v2172
        %2326 = vmatprep.subr.bf16.mxu0 0
        %2327 = vmatpush1.bf16.msra.mxu0 %v2171
        %2328 = vmatprep.subr.bf16.mxu0 0
        %2329 = vmatpush1.bf16.msra.mxu0 %v2170
        %2330 = vmatprep.subr.bf16.mxu0 0
        %2331 = vmatpush2.bf16.msra.mxu0 %v2185
        %2332 = vmatprep.subr.bf16.mxu0 0
        %2333 = vmatpush2.bf16.msra.mxu0 %v2184
        %2334 = vmatprep.subr.bf16.mxu0 0
        %2335 = vmatpush2.bf16.msra.mxu0 %v2183
        %2336 = vmatprep.subr.bf16.mxu0 0
        %2337 = vmatpush2.bf16.msra.mxu0 %v2182
        %2338 = vmatprep.subr.bf16.mxu0 0
        %2339 = vmatpush2.bf16.msra.mxu0 %v2181
        %2340 = vmatprep.subr.bf16.mxu0 0
        %2341 = vmatpush2.bf16.msra.mxu0 %v2180
        %2342 = vmatprep.subr.bf16.mxu0 0
        %2343 = vmatpush2.bf16.msra.mxu0 %v2179
        %2344 = vmatprep.subr.bf16.mxu0 0
        %2345 = vmatpush2.bf16.msra.mxu0 %v2178
        %2346 = vmatprep.mubr.bf16.mxu0 %v1052
        %2347 = vmatmul.mubr.bf16.gmra.mxu0 %v1535
        %v2348 = vpop.f32.mrf.mxu0
        %v2349 = vadd.f32 0.0, %v2348
        %v2350 = vpop.f32.mrf.mxu0
        %v2351 = vpop.f32.mrf.mxu0
        %v2352 = vadd.f32 0.0, %v2351
        %v2353 = vpop.f32.mrf.mxu0
        %2354 = vmatprep.mubr.bf16.mxu0 %v1053
        %2355 = vmatmul.mubr.bf16.gmra.mxu0 %v1536
        %v2356 = vpop.f32.mrf.mxu0
        %v2357 = vadd.f32 0.0, %v2356
        %v2358 = vpop.f32.mrf.mxu0
        %v2359 = vpop.f32.mrf.mxu0
        %v2360 = vadd.f32 0.0, %v2359
        %v2361 = vpop.f32.mrf.mxu0
        %2362 = vmatprep.mubr.bf16.mxu0 %v1054
        %2363 = vmatmul.mubr.bf16.gmra.mxu0 %v1537
        %v2364 = vpop.f32.mrf.mxu0
        %v2365 = vadd.f32 0.0, %v2364
        %v2366 = vpop.f32.mrf.mxu0
        %v2367 = vpop.f32.mrf.mxu0
        %v2368 = vadd.f32 0.0, %v2367
        %v2369 = vpop.f32.mrf.mxu0
        %2370 = vmatprep.mubr.bf16.mxu0 %v1055
        %2371 = vmatmul.mubr.bf16.gmra.mxu0 %v1538
        %v2372 = vpop.f32.mrf.mxu0
        %v2373 = vadd.f32 0.0, %v2372
        %v2374 = vpop.f32.mrf.mxu0
        %v2375 = vpop.f32.mrf.mxu0
        %v2376 = vadd.f32 0.0, %v2375
        %v2377 = vpop.f32.mrf.mxu0
        %2378 = vmatprep.mubr.bf16.mxu0 %v1056
        %2379 = vmatmul.mubr.bf16.gmra.mxu0 %v1539
        %v2380 = vpop.f32.mrf.mxu0
        %v2381 = vadd.f32 0.0, %v2380
        %v2382 = vpop.f32.mrf.mxu0
        %v2383 = vpop.f32.mrf.mxu0
        %v2384 = vadd.f32 0.0, %v2383
        %v2385 = vpop.f32.mrf.mxu0
        %2386 = vmatprep.mubr.bf16.mxu0 %v1057
        %2387 = vmatmul.mubr.bf16.gmra.mxu0 %v1540
        %v2388 = vpop.f32.mrf.mxu0
        %v2389 = vadd.f32 0.0, %v2388
        %v2390 = vpop.f32.mrf.mxu0
        %v2391 = vpop.f32.mrf.mxu0
        %v2392 = vadd.f32 0.0, %v2391
        %v2393 = vpop.f32.mrf.mxu0
        %2394 = vmatprep.mubr.bf16.mxu0 %v1058
        %2395 = vmatmul.mubr.bf16.gmra.mxu0 %v1541
        %v2396 = vpop.f32.mrf.mxu0
        %v2397 = vadd.f32 0.0, %v2396
        %v2398 = vpop.f32.mrf.mxu0
        %v2399 = vpop.f32.mrf.mxu0
        %v2400 = vadd.f32 0.0, %v2399
        %v2401 = vpop.f32.mrf.mxu0
        %2402 = vmatprep.mubr.bf16.mxu0 %v1059
        %2403 = vmatmul.mubr.bf16.gmra.mxu0 %v1542
        %v2404 = vpop.f32.mrf.mxu0
        %v2405 = vadd.f32 0.0, %v2404
        %v2406 = vpop.f32.mrf.mxu0
        %v2407 = vpop.f32.mrf.mxu0
        %v2408 = vadd.f32 0.0, %v2407
        %v2409 = vpop.f32.mrf.mxu0
        %2410 = vdwg.mxu0
        %2411 = vmatprep.subr.bf16.mxu0 0
        %2412 = vmatpush1.bf16.msra.mxu0 %v2193
        %2413 = vmatprep.subr.bf16.mxu0 0
        %2414 = vmatpush1.bf16.msra.mxu0 %v2192
        %2415 = vmatprep.subr.bf16.mxu0 0
        %2416 = vmatpush1.bf16.msra.mxu0 %v2191
        %2417 = vmatprep.subr.bf16.mxu0 0
        %2418 = vmatpush1.bf16.msra.mxu0 %v2190
        %2419 = vmatprep.subr.bf16.mxu0 0
        %2420 = vmatpush1.bf16.msra.mxu0 %v2189
        %2421 = vmatprep.subr.bf16.mxu0 0
        %2422 = vmatpush1.bf16.msra.mxu0 %v2188
        %2423 = vmatprep.subr.bf16.mxu0 0
        %2424 = vmatpush1.bf16.msra.mxu0 %v2187
        %2425 = vmatprep.subr.bf16.mxu0 0
        %2426 = vmatpush1.bf16.msra.mxu0 %v2186
        %2427 = vmatprep.subr.bf16.mxu0 0
        %2428 = vmatpush2.bf16.msra.mxu0 %v2201
        %2429 = vmatprep.subr.bf16.mxu0 0
        %2430 = vmatpush2.bf16.msra.mxu0 %v2200
        %2431 = vmatprep.subr.bf16.mxu0 0
        %2432 = vmatpush2.bf16.msra.mxu0 %v2199
        %2433 = vmatprep.subr.bf16.mxu0 0
        %2434 = vmatpush2.bf16.msra.mxu0 %v2198
        %2435 = vmatprep.subr.bf16.mxu0 0
        %2436 = vmatpush2.bf16.msra.mxu0 %v2197
        %2437 = vmatprep.subr.bf16.mxu0 0
        %2438 = vmatpush2.bf16.msra.mxu0 %v2196
        %2439 = vmatprep.subr.bf16.mxu0 0
        %2440 = vmatpush2.bf16.msra.mxu0 %v2195
        %2441 = vmatprep.subr.bf16.mxu0 0
        %2442 = vmatpush2.bf16.msra.mxu0 %v2194
        %2443 = vmatprep.mubr.bf16.mxu0 %v1536
        %2444 = vmatmul.mubr.bf16.gmra.mxu0 %v1728
        %v2445 = vpop.f32.mrf.mxu0
        %v2446 = vadd.f32 %v2349, %v2445
        %v2447 = vpop.f32.mrf.mxu0
        %v2448 = vpop.f32.mrf.mxu0
        %v2449 = vadd.f32 %v2352, %v2448
        %v2450 = vpop.f32.mrf.mxu0
        %2451 = vmatprep.mubr.bf16.mxu0 %v1537
        %2452 = vmatmul.mubr.bf16.gmra.mxu0 %v1729
        %v2453 = vpop.f32.mrf.mxu0
        %v2454 = vadd.f32 %v2357, %v2453
        %v2455 = vpop.f32.mrf.mxu0
        %v2456 = vpop.f32.mrf.mxu0
        %v2457 = vadd.f32 %v2360, %v2456
        %v2458 = vpop.f32.mrf.mxu0
        %2459 = vmatprep.mubr.bf16.mxu0 %v1538
        %2460 = vmatmul.mubr.bf16.gmra.mxu0 %v1730
        %v2461 = vpop.f32.mrf.mxu0
        %v2462 = vadd.f32 %v2365, %v2461
        %v2463 = vpop.f32.mrf.mxu0
        %v2464 = vpop.f32.mrf.mxu0
        %v2465 = vadd.f32 %v2368, %v2464
        %v2466 = vpop.f32.mrf.mxu0
        %2467 = vmatprep.mubr.bf16.mxu0 %v1539
        %2468 = vmatmul.mubr.bf16.gmra.mxu0 %v1731
        %v2469 = vpop.f32.mrf.mxu0
        %v2470 = vadd.f32 %v2373, %v2469
        %v2471 = vpop.f32.mrf.mxu0
        %v2472 = vpop.f32.mrf.mxu0
        %v2473 = vadd.f32 %v2376, %v2472
        %v2474 = vpop.f32.mrf.mxu0
        %2475 = vmatprep.mubr.bf16.mxu0 %v1540
        %2476 = vmatmul.mubr.bf16.gmra.mxu0 %v1732
        %v2477 = vpop.f32.mrf.mxu0
        %v2478 = vadd.f32 %v2381, %v2477
        %v2479 = vpop.f32.mrf.mxu0
        %v2480 = vpop.f32.mrf.mxu0
        %v2481 = vadd.f32 %v2384, %v2480
        %v2482 = vpop.f32.mrf.mxu0
        %2483 = vmatprep.mubr.bf16.mxu0 %v1541
        %2484 = vmatmul.mubr.bf16.gmra.mxu0 %v1733
        %v2485 = vpop.f32.mrf.mxu0
        %v2486 = vadd.f32 %v2389, %v2485
        %v2487 = vpop.f32.mrf.mxu0
        %v2488 = vpop.f32.mrf.mxu0
        %v2489 = vadd.f32 %v2392, %v2488
        %v2490 = vpop.f32.mrf.mxu0
        %2491 = vmatprep.mubr.bf16.mxu0 %v1542
        %2492 = vmatmul.mubr.bf16.gmra.mxu0 %v1734
        %v2493 = vpop.f32.mrf.mxu0
        %v2494 = vadd.f32 %v2397, %v2493
        %v2495 = vpop.f32.mrf.mxu0
        %v2496 = vpop.f32.mrf.mxu0
        %v2497 = vadd.f32 %v2400, %v2496
        %v2498 = vpop.f32.mrf.mxu0
        %2499 = vmatprep.mubr.bf16.mxu0 %v1543
        %2500 = vmatmul.mubr.bf16.gmra.mxu0 %v1735
        %v2501 = vpop.f32.mrf.mxu0
        %v2502 = vadd.f32 %v2405, %v2501
        %v2503 = vpop.f32.mrf.mxu0
        %v2504 = vpop.f32.mrf.mxu0
        %v2505 = vadd.f32 %v2408, %v2504
        %v2506 = vpop.f32.mrf.mxu0
        %2507 = vdwg.mxu0
        %2508 = vmatprep.subr.bf16.mxu0 0
        %2509 = vmatpush1.bf16.msra.mxu0 %v2209
        %2510 = vmatprep.subr.bf16.mxu0 0
        %2511 = vmatpush1.bf16.msra.mxu0 %v2208
        %2512 = vmatprep.subr.bf16.mxu0 0
        %2513 = vmatpush1.bf16.msra.mxu0 %v2207
        %2514 = vmatprep.subr.bf16.mxu0 0
        %2515 = vmatpush1.bf16.msra.mxu0 %v2206
        %2516 = vmatprep.subr.bf16.mxu0 0
        %2517 = vmatpush1.bf16.msra.mxu0 %v2205
        %2518 = vmatprep.subr.bf16.mxu0 0
        %2519 = vmatpush1.bf16.msra.mxu0 %v2204
        %2520 = vmatprep.subr.bf16.mxu0 0
        %2521 = vmatpush1.bf16.msra.mxu0 %v2203
        %2522 = vmatprep.subr.bf16.mxu0 0
        %2523 = vmatpush1.bf16.msra.mxu0 %v2202
        %2524 = vmatprep.subr.bf16.mxu0 0
        %2525 = vmatpush2.bf16.msra.mxu0 %v2217
        %2526 = vmatprep.subr.bf16.mxu0 0
        %2527 = vmatpush2.bf16.msra.mxu0 %v2216
        %2528 = vmatprep.subr.bf16.mxu0 0
        %2529 = vmatpush2.bf16.msra.mxu0 %v2215
        %2530 = vmatprep.subr.bf16.mxu0 0
        %2531 = vmatpush2.bf16.msra.mxu0 %v2214
        %2532 = vmatprep.subr.bf16.mxu0 0
        %2533 = vmatpush2.bf16.msra.mxu0 %v2213
        %2534 = vmatprep.subr.bf16.mxu0 0
        %2535 = vmatpush2.bf16.msra.mxu0 %v2212
        %2536 = vmatprep.subr.bf16.mxu0 0
        %2537 = vmatpush2.bf16.msra.mxu0 %v2211
        %2538 = vmatprep.subr.bf16.mxu0 0
        %2539 = vmatpush2.bf16.msra.mxu0 %v2210
        %2540 = vmatprep.mubr.bf16.mxu0 %v1729
        %2541 = vmatmul.mubr.bf16.gmra.mxu0 %v1053
        %v2542 = vpop.f32.mrf.mxu0
        %v2543 = vadd.f32 %v2446, %v2542
        %v2544 = vpop.f32.mrf.mxu0
        %v2545 = vpop.f32.mrf.mxu0
        %v2546 = vadd.f32 %v2449, %v2545
        %v2547 = vpop.f32.mrf.mxu0
        %2548 = vmatprep.mubr.bf16.mxu0 %v1730
        %2549 = vmatmul.mubr.bf16.gmra.mxu0 %v1054
        %v2550 = vpop.f32.mrf.mxu0
        %v2551 = vadd.f32 %v2454, %v2550
        %v2552 = vpop.f32.mrf.mxu0
        %v2553 = vpop.f32.mrf.mxu0
        %v2554 = vadd.f32 %v2457, %v2553
        %v2555 = vpop.f32.mrf.mxu0
        %2556 = vmatprep.mubr.bf16.mxu0 %v1731
        %2557 = vmatmul.mubr.bf16.gmra.mxu0 %v1055
        %v2558 = vpop.f32.mrf.mxu0
        %v2559 = vadd.f32 %v2462, %v2558
        %v2560 = vpop.f32.mrf.mxu0
        %v2561 = vpop.f32.mrf.mxu0
        %v2562 = vadd.f32 %v2465, %v2561
        %v2563 = vpop.f32.mrf.mxu0
        %2564 = vmatprep.mubr.bf16.mxu0 %v1732
        %2565 = vmatmul.mubr.bf16.gmra.mxu0 %v1056
        %v2566 = vpop.f32.mrf.mxu0
        %v2567 = vadd.f32 %v2470, %v2566
        %v2568 = vpop.f32.mrf.mxu0
        %v2569 = vpop.f32.mrf.mxu0
        %v2570 = vadd.f32 %v2473, %v2569
        %v2571 = vpop.f32.mrf.mxu0
        %2572 = vmatprep.mubr.bf16.mxu0 %v1733
        %2573 = vmatmul.mubr.bf16.gmra.mxu0 %v1057
        %v2574 = vpop.f32.mrf.mxu0
        %v2575 = vadd.f32 %v2478, %v2574
        %v2576 = vpop.f32.mrf.mxu0
        %v2577 = vpop.f32.mrf.mxu0
        %v2578 = vadd.f32 %v2481, %v2577
        %v2579 = vpop.f32.mrf.mxu0
        %2580 = vmatprep.mubr.bf16.mxu0 %v1734
        %2581 = vmatmul.mubr.bf16.gmra.mxu0 %v1058
        %v2582 = vpop.f32.mrf.mxu0
        %v2583 = vadd.f32 %v2486, %v2582
        %v2584 = vpop.f32.mrf.mxu0
        %v2585 = vpop.f32.mrf.mxu0
        %v2586 = vadd.f32 %v2489, %v2585
        %v2587 = vpop.f32.mrf.mxu0
        %2588 = vmatprep.mubr.bf16.mxu0 %v1735
        %2589 = vmatmul.mubr.bf16.gmra.mxu0 %v1059
        %v2590 = vpop.f32.mrf.mxu0
        %v2591 = vadd.f32 %v2494, %v2590
        %v2592 = vpop.f32.mrf.mxu0
        %v2593 = vpop.f32.mrf.mxu0
        %v2594 = vadd.f32 %v2497, %v2593
        %v2595 = vpop.f32.mrf.mxu0
        %2596 = vmatprep.mubr.bf16.mxu0 %v1736
        %2597 = vmatmul.mubr.bf16.gmra.mxu0 %v1060
        %v2598 = vpop.f32.mrf.mxu0
        %v2599 = vadd.f32 %v2502, %v2598
        %v2600 = vpop.f32.mrf.mxu0
        %v2601 = vpop.f32.mrf.mxu0
        %v2602 = vadd.f32 %v2505, %v2601
        %v2603 = vpop.f32.mrf.mxu0
        %2604 = vdwg.mxu0
        %2605 = vmatprep.subr.bf16.mxu0 0
        %2606 = vmatpush1.bf16.msra.mxu0 %v2225
        %2607 = vmatprep.subr.bf16.mxu0 0
        %2608 = vmatpush1.bf16.msra.mxu0 %v2224
        %2609 = vmatprep.subr.bf16.mxu0 0
        %2610 = vmatpush1.bf16.msra.mxu0 %v2223
        %2611 = vmatprep.subr.bf16.mxu0 0
        %2612 = vmatpush1.bf16.msra.mxu0 %v2222
        %2613 = vmatprep.subr.bf16.mxu0 0
        %2614 = vmatpush1.bf16.msra.mxu0 %v2221
        %2615 = vmatprep.subr.bf16.mxu0 0
        %2616 = vmatpush1.bf16.msra.mxu0 %v2220
        %2617 = vmatprep.subr.bf16.mxu0 0
        %2618 = vmatpush1.bf16.msra.mxu0 %v2219
        %2619 = vmatprep.subr.bf16.mxu0 0
        %2620 = vmatpush1.bf16.msra.mxu0 %v2218
        %2621 = vmatprep.subr.bf16.mxu0 0
        %2622 = vmatpush2.bf16.msra.mxu0 %v2233
        %2623 = vmatprep.subr.bf16.mxu0 0
        %2624 = vmatpush2.bf16.msra.mxu0 %v2232
        %2625 = vmatprep.subr.bf16.mxu0 0
        %2626 = vmatpush2.bf16.msra.mxu0 %v2231
        %2627 = vmatprep.subr.bf16.mxu0 0
        %2628 = vmatpush2.bf16.msra.mxu0 %v2230
        %2629 = vmatprep.subr.bf16.mxu0 0
        %2630 = vmatpush2.bf16.msra.mxu0 %v2229
        %2631 = vmatprep.subr.bf16.mxu0 0
        %2632 = vmatpush2.bf16.msra.mxu0 %v2228
        %2633 = vmatprep.subr.bf16.mxu0 0
        %2634 = vmatpush2.bf16.msra.mxu0 %v2227
        %2635 = vmatprep.subr.bf16.mxu0 0
        %2636 = vmatpush2.bf16.msra.mxu0 %v2226
        %2637 = vmatprep.mubr.bf16.mxu0 %v1054
        %2638 = vmatmul.mubr.bf16.gmra.mxu0 %v1537
        %v2639 = vpop.f32.mrf.mxu0
        %v2640 = vadd.f32 %v2543, %v2639
        %v2641 = vpop.f32.mrf.mxu0
        %v2642 = vpop.f32.mrf.mxu0
        %v2643 = vadd.f32 %v2546, %v2642
        %v2644 = vpop.f32.mrf.mxu0
        %2645 = vmatprep.mubr.bf16.mxu0 %v1055
        %2646 = vmatmul.mubr.bf16.gmra.mxu0 %v1538
        %v2647 = vpop.f32.mrf.mxu0
        %v2648 = vadd.f32 %v2551, %v2647
        %v2649 = vpop.f32.mrf.mxu0
        %v2650 = vpop.f32.mrf.mxu0
        %v2651 = vadd.f32 %v2554, %v2650
        %v2652 = vpop.f32.mrf.mxu0
        %2653 = vmatprep.mubr.bf16.mxu0 %v1056
        %2654 = vmatmul.mubr.bf16.gmra.mxu0 %v1539
        %v2655 = vpop.f32.mrf.mxu0
        %v2656 = vadd.f32 %v2559, %v2655
        %v2657 = vpop.f32.mrf.mxu0
        %v2658 = vpop.f32.mrf.mxu0
        %v2659 = vadd.f32 %v2562, %v2658
        %v2660 = vpop.f32.mrf.mxu0
        %2661 = vmatprep.mubr.bf16.mxu0 %v1057
        %2662 = vmatmul.mubr.bf16.gmra.mxu0 %v1540
        %v2663 = vpop.f32.mrf.mxu0
        %v2664 = vadd.f32 %v2567, %v2663
        %v2665 = vpop.f32.mrf.mxu0
        %v2666 = vpop.f32.mrf.mxu0
        %v2667 = vadd.f32 %v2570, %v2666
        %v2668 = vpop.f32.mrf.mxu0
        %2669 = vmatprep.mubr.bf16.mxu0 %v1058
        %2670 = vmatmul.mubr.bf16.gmra.mxu0 %v1541
        %v2671 = vpop.f32.mrf.mxu0
        %v2672 = vadd.f32 %v2575, %v2671
        %v2673 = vpop.f32.mrf.mxu0
        %v2674 = vpop.f32.mrf.mxu0
        %v2675 = vadd.f32 %v2578, %v2674
        %v2676 = vpop.f32.mrf.mxu0
        %2677 = vmatprep.mubr.bf16.mxu0 %v1059
        %2678 = vmatmul.mubr.bf16.gmra.mxu0 %v1542
        %v2679 = vpop.f32.mrf.mxu0
        %v2680 = vadd.f32 %v2583, %v2679
        %v2681 = vpop.f32.mrf.mxu0
        %v2682 = vpop.f32.mrf.mxu0
        %v2683 = vadd.f32 %v2586, %v2682
        %v2684 = vpop.f32.mrf.mxu0
        %2685 = vmatprep.mubr.bf16.mxu0 %v1060
        %2686 = vmatmul.mubr.bf16.gmra.mxu0 %v1543
        %v2687 = vpop.f32.mrf.mxu0
        %v2688 = vadd.f32 %v2591, %v2687
        %v2689 = vpop.f32.mrf.mxu0
        %v2690 = vpop.f32.mrf.mxu0
        %v2691 = vadd.f32 %v2594, %v2690
        %v2692 = vpop.f32.mrf.mxu0
        %2693 = vmatprep.mubr.bf16.mxu0 %v1061
        %2694 = vmatmul.mubr.bf16.gmra.mxu0 %v1544
        %v2695 = vpop.f32.mrf.mxu0
        %v2696 = vadd.f32 %v2599, %v2695
        %v2697 = vpop.f32.mrf.mxu0
        %v2698 = vpop.f32.mrf.mxu0
        %v2699 = vadd.f32 %v2602, %v2698
        %v2700 = vpop.f32.mrf.mxu0
        %2701 = vdwg.mxu0
        %2702 = vmatprep.subr.bf16.mxu0 0
        %2703 = vmatpush1.bf16.msra.mxu0 %v2241
        %2704 = vmatprep.subr.bf16.mxu0 0
        %2705 = vmatpush1.bf16.msra.mxu0 %v2240
        %2706 = vmatprep.subr.bf16.mxu0 0
        %2707 = vmatpush1.bf16.msra.mxu0 %v2239
        %2708 = vmatprep.subr.bf16.mxu0 0
        %2709 = vmatpush1.bf16.msra.mxu0 %v2238
        %2710 = vmatprep.subr.bf16.mxu0 0
        %2711 = vmatpush1.bf16.msra.mxu0 %v2237
        %2712 = vmatprep.subr.bf16.mxu0 0
        %2713 = vmatpush1.bf16.msra.mxu0 %v2236
        %2714 = vmatprep.subr.bf16.mxu0 0
        %2715 = vmatpush1.bf16.msra.mxu0 %v2235
        %2716 = vmatprep.subr.bf16.mxu0 0
        %2717 = vmatpush1.bf16.msra.mxu0 %v2234
        %2718 = vmatprep.subr.bf16.mxu0 0
        %2719 = vmatpush2.bf16.msra.mxu0 0
        %2720 = vmatprep.subr.bf16.mxu0 0
        %2721 = vmatpush2.bf16.msra.mxu0 0
        %2722 = vmatprep.subr.bf16.mxu0 0
        %2723 = vmatpush2.bf16.msra.mxu0 0
        %2724 = vmatprep.subr.bf16.mxu0 0
        %2725 = vmatpush2.bf16.msra.mxu0 0
        %2726 = vmatprep.subr.bf16.mxu0 0
        %2727 = vmatpush2.bf16.msra.mxu0 0
        %2728 = vmatprep.subr.bf16.mxu0 0
        %2729 = vmatpush2.bf16.msra.mxu0 0
        %2730 = vmatprep.subr.bf16.mxu0 0
        %2731 = vmatpush2.bf16.msra.mxu0 0
        %2732 = vmatprep.subr.bf16.mxu0 0
        %2733 = vmatpush2.bf16.msra.mxu0 0
        %2734 = vmatprep.mubr.bf16.mxu0 0
        %2735 = vmatmul.mubr.bf16.gmra.mxu0 %v1730
        %v2736 = vpop.f32.mrf.mxu0
        %v2737 = vadd.f32 %v2640, %v2736
        %v2738 = vpop.f32.mrf.mxu0
        %v2739 = vpop.f32.mrf.mxu0
        %v2740 = vadd.f32 %v2643, %v2739
        %v2741 = vpop.f32.mrf.mxu0
        %2742 = vmatprep.mubr.bf16.mxu0 0
        %2743 = vmatmul.mubr.bf16.gmra.mxu0 %v1731
        %v2744 = vpop.f32.mrf.mxu0
        %v2745 = vadd.f32 %v2648, %v2744
        %v2746 = vpop.f32.mrf.mxu0
        %v2747 = vpop.f32.mrf.mxu0
        %v2748 = vadd.f32 %v2651, %v2747
        %v2749 = vpop.f32.mrf.mxu0
        %2750 = vmatprep.mubr.bf16.mxu0 0
        %2751 = vmatmul.mubr.bf16.gmra.mxu0 %v1732
        %v2752 = vpop.f32.mrf.mxu0
        %v2753 = vadd.f32 %v2656, %v2752
        %v2754 = vpop.f32.mrf.mxu0
        %v2755 = vpop.f32.mrf.mxu0
        %v2756 = vadd.f32 %v2659, %v2755
        %v2757 = vpop.f32.mrf.mxu0
        %2758 = vmatprep.mubr.bf16.mxu0 0
        %2759 = vmatmul.mubr.bf16.gmra.mxu0 %v1733
        %v2760 = vpop.f32.mrf.mxu0
        %v2761 = vadd.f32 %v2664, %v2760
        %v2762 = vpop.f32.mrf.mxu0
        %v2763 = vpop.f32.mrf.mxu0
        %v2764 = vadd.f32 %v2667, %v2763
        %v2765 = vpop.f32.mrf.mxu0
        %2766 = vmatprep.mubr.bf16.mxu0 0
        %2767 = vmatmul.mubr.bf16.gmra.mxu0 %v1734
        %v2768 = vpop.f32.mrf.mxu0
        %v2769 = vadd.f32 %v2672, %v2768
        %v2770 = vpop.f32.mrf.mxu0
        %v2771 = vpop.f32.mrf.mxu0
        %v2772 = vadd.f32 %v2675, %v2771
        %v2773 = vpop.f32.mrf.mxu0
        %2774 = vmatprep.mubr.bf16.mxu0 0
        %2775 = vmatmul.mubr.bf16.gmra.mxu0 %v1735
        %v2776 = vpop.f32.mrf.mxu0
        %v2777 = vadd.f32 %v2680, %v2776
        %v2778 = vpop.f32.mrf.mxu0
        %v2779 = vpop.f32.mrf.mxu0
        %v2780 = vadd.f32 %v2683, %v2779
        %v2781 = vpop.f32.mrf.mxu0
        %2782 = vmatprep.mubr.bf16.mxu0 0
        %2783 = vmatmul.mubr.bf16.gmra.mxu0 %v1736
        %v2784 = vpop.f32.mrf.mxu0
        %v2785 = vadd.f32 %v2688, %v2784
        %v2786 = vpop.f32.mrf.mxu0
        %v2787 = vpop.f32.mrf.mxu0
        %v2788 = vadd.f32 %v2691, %v2787
        %v2789 = vpop.f32.mrf.mxu0
        %2790 = vmatprep.mubr.bf16.mxu0 0
        %2791 = vmatmul.mubr.bf16.gmra.mxu0 %v1737
        %v2792 = vpop.f32.mrf.mxu0
        %v2793 = vadd.f32 %v2696, %v2792
        %v2794 = vpop.f32.mrf.mxu0
        %v2795 = vpop.f32.mrf.mxu0
        %v2796 = vadd.f32 %v2699, %v2795
        %v2797 = vpop.f32.mrf.mxu0
        %2798 = vdwg.mxu0
        %v2799 = vld [vmem:[%s6] sm:$0x1]
        %v2801 = vlaneseq
        %v2802 = vshrl.u32 %v2801, 7
        %v2803 = vsub.s32 0, %v2802
        %v2804 = vrot.slane %v2799, %v2803
        %v2806 = vmul.f32 %v2737, %v2804
        %v2807 = vmul.f32 %v2740, %v2804
        %v2808 = vmul.f32 %v2745, %v2804
        %v2809 = vmul.f32 %v2748, %v2804
        %v2810 = vmul.f32 %v2753, %v2804
        %v2811 = vmul.f32 %v2756, %v2804
        %v2812 = vmul.f32 %v2761, %v2804
        %v2813 = vmul.f32 %v2764, %v2804
        %v2814 = vmul.f32 %v2769, %v2804
        %v2815 = vmul.f32 %v2772, %v2804
        %v2816 = vmul.f32 %v2777, %v2804
        %v2817 = vmul.f32 %v2780, %v2804
        %v2818 = vmul.f32 %v2785, %v2804
        %v2819 = vmul.f32 %v2788, %v2804
        %v2820 = vmul.f32 %v2793, %v2804
        %v2821 = vmul.f32 %v2796, %v2804
        %v2822 = vld [vmem:[%s7] sm:$0x1]
        %v2824 = vlaneseq
        %v2825 = vshrl.u32 %v2824, 7
        %v2826 = vsub.s32 0, %v2825
        %v2827 = vrot.slane %v2822, %v2826
        %v2829 = vadd.f32 %v2806, %v2827
        %v2830 = vadd.f32 %v2807, %v2827
        %v2831 = vadd.f32 %v2808, %v2827
        %v2832 = vadd.f32 %v2809, %v2827
        %v2833 = vadd.f32 %v2810, %v2827
        %v2834 = vadd.f32 %v2811, %v2827
        %v2835 = vadd.f32 %v2812, %v2827
        %v2836 = vadd.f32 %v2813, %v2827
        %v2837 = vadd.f32 %v2814, %v2827
        %v2838 = vadd.f32 %v2815, %v2827
        %v2839 = vadd.f32 %v2816, %v2827
        %v2840 = vadd.f32 %v2817, %v2827
        %v2841 = vadd.f32 %v2818, %v2827
        %v2842 = vadd.f32 %v2819, %v2827
        %v2843 = vadd.f32 %v2820, %v2827
        %v2844 = vadd.f32 %v2821, %v2827
        %v2845 = vmax.f32 %v2829, 0.0
        %v2846 = vmax.f32 %v2830, 0.0
        %v2847 = vmax.f32 %v2831, 0.0
        %v2848 = vmax.f32 %v2832, 0.0
        %v2849 = vmax.f32 %v2833, 0.0
        %v2850 = vmax.f32 %v2834, 0.0
        %v2851 = vmax.f32 %v2835, 0.0
        %v2852 = vmax.f32 %v2836, 0.0
        %v2853 = vmax.f32 %v2837, 0.0
        %v2854 = vmax.f32 %v2838, 0.0
        %v2855 = vmax.f32 %v2839, 0.0
        %v2856 = vmax.f32 %v2840, 0.0
        %v2857 = vmax.f32 %v2841, 0.0
        %v2858 = vmax.f32 %v2842, 0.0
        %v2859 = vmax.f32 %v2843, 0.0
        %v2860 = vmax.f32 %v2844, 0.0
        %v2861 = vpack.c.bf16 %v2846, %v2845
        %v2862 = vpack.c.bf16 %v2848, %v2847
        %v2863 = vpack.c.bf16 %v2850, %v2849
        %v2864 = vpack.c.bf16 %v2852, %v2851
        %v2865 = vpack.c.bf16 %v2854, %v2853
        %v2866 = vpack.c.bf16 %v2856, %v2855
        %v2867 = vpack.c.bf16 %v2858, %v2857
        %v2868 = vpack.c.bf16 %v2860, %v2859
        %v2869 = vld [vmem:[#allocation8] sm:$0xf]
        %v2870 = vld [vmem:[#allocation8 + $0x4] sm:$0xf]
        %v2871 = vld [vmem:[#allocation8 + $0x8] sm:$0xf]
        %v2872 = vld [vmem:[#allocation8 + $0xc] sm:$0xf]
        %v2873 = vld [vmem:[#allocation8 + $0x10] sm:$0xf]
        %v2874 = vld [vmem:[#allocation8 + $0x14] sm:$0xf]
        %v2875 = vld [vmem:[#allocation8 + $0x18] sm:$0xf]
        %v2876 = vld [vmem:[#allocation8 + $0x1c] sm:$0xf]
        %v2877 = vld [vmem:[#allocation8 + $0x20] sm:$0xf]
        %v2878 = vld [vmem:[#allocation8 + $0x24] sm:$0xf]
        %v2879 = vld [vmem:[#allocation8 + $0x28] sm:$0xf]
        %v2880 = vld [vmem:[#allocation8 + $0x2c] sm:$0xf]
        %v2881 = vld [vmem:[#allocation8 + $0x30] sm:$0xf]
        %v2882 = vld [vmem:[#allocation8 + $0x34] sm:$0xf]
        %v2883 = vld [vmem:[#allocation8 + $0x38] sm:$0xf]
        %v2884 = vld [vmem:[#allocation8 + $0x3c] sm:$0xf]
        %v2901 = vunpack.c.l.b16 %v2869
        %v2902 = vunpack.c.l.b16 %v2870
        %v2903 = vunpack.c.l.b16 %v2871
        %v2904 = vunpack.c.l.b16 %v2872
        %v2905 = vunpack.c.l.b16 %v2873
        %v2906 = vunpack.c.l.b16 %v2874
        %v2907 = vunpack.c.l.b16 %v2875
        %v2908 = vunpack.c.l.b16 %v2876
        %v2909 = vunpack.c.l.b16 %v2877
        %v2910 = vunpack.c.l.b16 %v2878
        %v2911 = vunpack.c.l.b16 %v2879
        %v2912 = vunpack.c.l.b16 %v2880
        %v2913 = vunpack.c.l.b16 %v2881
        %v2914 = vunpack.c.l.b16 %v2882
        %v2915 = vunpack.c.l.b16 %v2883
        %v2916 = vunpack.c.l.b16 %v2884
        %v2917 = vpack.c.b16 %v2902, %v2901
        %v2918 = vpack.c.b16 %v2904, %v2903
        %v2919 = vpack.c.b16 %v2906, %v2905
        %v2920 = vpack.c.b16 %v2908, %v2907
        %v2921 = vpack.c.b16 %v2910, %v2909
        %v2922 = vpack.c.b16 %v2912, %v2911
        %v2923 = vpack.c.b16 %v2914, %v2913
        %v2924 = vpack.c.b16 %v2916, %v2915
        %2933 = vmatprep.subr.bf16.mxu0 0
        %2934 = vmatpush1.bf16.msra.mxu0 %v2924
        %2935 = vmatprep.subr.bf16.mxu0 0
        %2936 = vmatpush1.bf16.msra.mxu0 %v2923
        %2937 = vmatprep.subr.bf16.mxu0 0
        %2938 = vmatpush1.bf16.msra.mxu0 %v2922
        %2939 = vmatprep.subr.bf16.mxu0 0
        %2940 = vmatpush1.bf16.msra.mxu0 %v2921
        %2941 = vmatprep.subr.bf16.mxu0 0
        %2942 = vmatpush1.bf16.msra.mxu0 %v2920
        %2943 = vmatprep.subr.bf16.mxu0 0
        %2944 = vmatpush1.bf16.msra.mxu0 %v2919
        %2945 = vmatprep.subr.bf16.mxu0 0
        %2946 = vmatpush1.bf16.msra.mxu0 %v2918
        %2947 = vmatprep.subr.bf16.mxu0 0
        %2948 = vmatpush1.bf16.msra.mxu0 %v2917
        %2949 = vmatprep.subr.bf16.mxu0 0
        %2950 = vmatpush2.bf16.msra.mxu0 0
        %2951 = vmatprep.subr.bf16.mxu0 0
        %2952 = vmatpush2.bf16.msra.mxu0 0
        %2953 = vmatprep.subr.bf16.mxu0 0
        %2954 = vmatpush2.bf16.msra.mxu0 0
        %2955 = vmatprep.subr.bf16.mxu0 0
        %2956 = vmatpush2.bf16.msra.mxu0 0
        %2957 = vmatprep.subr.bf16.mxu0 0
        %2958 = vmatpush2.bf16.msra.mxu0 0
        %2959 = vmatprep.subr.bf16.mxu0 0
        %2960 = vmatpush2.bf16.msra.mxu0 0
        %2961 = vmatprep.subr.bf16.mxu0 0
        %2962 = vmatpush2.bf16.msra.mxu0 0
        %2963 = vmatprep.subr.bf16.mxu0 0
        %2964 = vmatpush2.bf16.msra.mxu0 0
        %2965 = vmatprep.mubr.bf16.mxu0 0
        %2966 = vmatmul.mubr.bf16.gmra.mxu0 %v2861
        %v2967 = vpop.f32.mrf.mxu0
        %v2968 = vadd.f32 0.0, %v2967
        %v2969 = vpop.f32.mrf.mxu0
        %v2970 = vpop.f32.mrf.mxu0
        %v2971 = vadd.f32 0.0, %v2970
        %v2972 = vpop.f32.mrf.mxu0
        %2973 = vmatprep.mubr.bf16.mxu0 0
        %2974 = vmatmul.mubr.bf16.gmra.mxu0 %v2862
        %v2975 = vpop.f32.mrf.mxu0
        %v2976 = vadd.f32 0.0, %v2975
        %v2977 = vpop.f32.mrf.mxu0
        %v2978 = vpop.f32.mrf.mxu0
        %v2979 = vadd.f32 0.0, %v2978
        %v2980 = vpop.f32.mrf.mxu0
        %2981 = vmatprep.mubr.bf16.mxu0 0
        %2982 = vmatmul.mubr.bf16.gmra.mxu0 %v2863
        %v2983 = vpop.f32.mrf.mxu0
        %v2984 = vadd.f32 0.0, %v2983
        %v2985 = vpop.f32.mrf.mxu0
        %v2986 = vpop.f32.mrf.mxu0
        %v2987 = vadd.f32 0.0, %v2986
        %v2988 = vpop.f32.mrf.mxu0
        %2989 = vmatprep.mubr.bf16.mxu0 0
        %2990 = vmatmul.mubr.bf16.gmra.mxu0 %v2864
        %v2991 = vpop.f32.mrf.mxu0
        %v2992 = vadd.f32 0.0, %v2991
        %v2993 = vpop.f32.mrf.mxu0
        %v2994 = vpop.f32.mrf.mxu0
        %v2995 = vadd.f32 0.0, %v2994
        %v2996 = vpop.f32.mrf.mxu0
        %2997 = vmatprep.mubr.bf16.mxu0 0
        %2998 = vmatmul.mubr.bf16.gmra.mxu0 %v2865
        %v2999 = vpop.f32.mrf.mxu0
        %v3000 = vadd.f32 0.0, %v2999
        %v3001 = vpop.f32.mrf.mxu0
        %v3002 = vpop.f32.mrf.mxu0
        %v3003 = vadd.f32 0.0, %v3002
        %v3004 = vpop.f32.mrf.mxu0
        %3005 = vmatprep.mubr.bf16.mxu0 0
        %3006 = vmatmul.mubr.bf16.gmra.mxu0 %v2866
        %v3007 = vpop.f32.mrf.mxu0
        %v3008 = vadd.f32 0.0, %v3007
        %v3009 = vpop.f32.mrf.mxu0
        %v3010 = vpop.f32.mrf.mxu0
        %v3011 = vadd.f32 0.0, %v3010
        %v3012 = vpop.f32.mrf.mxu0
        %3013 = vmatprep.mubr.bf16.mxu0 0
        %3014 = vmatmul.mubr.bf16.gmra.mxu0 %v2867
        %v3015 = vpop.f32.mrf.mxu0
        %v3016 = vadd.f32 0.0, %v3015
        %v3017 = vpop.f32.mrf.mxu0
        %v3018 = vpop.f32.mrf.mxu0
        %v3019 = vadd.f32 0.0, %v3018
        %v3020 = vpop.f32.mrf.mxu0
        %3021 = vmatprep.mubr.bf16.mxu0 0
        %3022 = vmatmul.mubr.bf16.gmra.mxu0 %v2868
        %v3023 = vpop.f32.mrf.mxu0
        %v3024 = vadd.f32 0.0, %v3023
        %v3025 = vpop.f32.mrf.mxu0
        %v3026 = vpop.f32.mrf.mxu0
        %v3027 = vadd.f32 0.0, %v3026
        %v3028 = vpop.f32.mrf.mxu0
        %3029 = vdwg.mxu0
        %v3030 = vunpack.c.l.bf16 %v460
        %v3031 = vunpack.c.l.bf16 %v461
        %v3032 = vunpack.c.l.bf16 %v462
        %v3033 = vunpack.c.l.bf16 %v463
        %v3034 = vunpack.c.l.bf16 %v464
        %v3035 = vunpack.c.l.bf16 %v465
        %v3036 = vunpack.c.l.bf16 %v466
        %v3037 = vunpack.c.l.bf16 %v467
        %v3038 = vunpack.c.l.bf16 %v468
        %v3039 = vunpack.c.l.bf16 %v469
        %v3040 = vunpack.c.l.bf16 %v470
        %v3041 = vunpack.c.l.bf16 %v471
        %v3042 = vunpack.c.l.bf16 %v472
        %v3043 = vunpack.c.l.bf16 %v473
        %v3044 = vunpack.c.l.bf16 %v474
        %v3045 = vunpack.c.l.bf16 %v475
        %v3046 = vld [vmem:[%s8] sm:$0x1]
        %v3048 = vlaneseq
        %v3049 = vshrl.u32 %v3048, 7
        %v3050 = vsub.s32 0, %v3049
        %v3051 = vrot.slane %v3046, %v3050
        %v3053 = vmul.f32 %v2968, %v3051
        %v3054 = vmul.f32 %v2971, %v3051
        %v3055 = vmul.f32 %v2976, %v3051
        %v3056 = vmul.f32 %v2979, %v3051
        %v3057 = vmul.f32 %v2984, %v3051
        %v3058 = vmul.f32 %v2987, %v3051
        %v3059 = vmul.f32 %v2992, %v3051
        %v3060 = vmul.f32 %v2995, %v3051
        %v3061 = vmul.f32 %v3000, %v3051
        %v3062 = vmul.f32 %v3003, %v3051
        %v3063 = vmul.f32 %v3008, %v3051
        %v3064 = vmul.f32 %v3011, %v3051
        %v3065 = vmul.f32 %v3016, %v3051
        %v3066 = vmul.f32 %v3019, %v3051
        %v3067 = vmul.f32 %v3024, %v3051
        %v3068 = vmul.f32 %v3027, %v3051
        %v3069 = vld [vmem:[%s9] sm:$0x1]
        %v3071 = vlaneseq
        %v3072 = vshrl.u32 %v3071, 7
        %v3073 = vsub.s32 0, %v3072
        %v3074 = vrot.slane %v3069, %v3073
        %v3076 = vadd.f32 %v3053, %v3074
        %v3077 = vadd.f32 %v3054, %v3074
        %v3078 = vadd.f32 %v3055, %v3074
        %v3079 = vadd.f32 %v3056, %v3074
        %v3080 = vadd.f32 %v3057, %v3074
        %v3081 = vadd.f32 %v3058, %v3074
        %v3082 = vadd.f32 %v3059, %v3074
        %v3083 = vadd.f32 %v3060, %v3074
        %v3084 = vadd.f32 %v3061, %v3074
        %v3085 = vadd.f32 %v3062, %v3074
        %v3086 = vadd.f32 %v3063, %v3074
        %v3087 = vadd.f32 %v3064, %v3074
        %v3088 = vadd.f32 %v3065, %v3074
        %v3089 = vadd.f32 %v3066, %v3074
        %v3090 = vadd.f32 %v3067, %v3074
        %v3091 = vadd.f32 %v3068, %v3074
        %v3092 = vadd.f32 %v3076, %v3030
        %v3093 = vadd.f32 %v3077, %v3031
        %v3094 = vadd.f32 %v3078, %v3032
        %v3095 = vadd.f32 %v3079, %v3033
        %v3096 = vadd.f32 %v3080, %v3034
        %v3097 = vadd.f32 %v3081, %v3035
        %v3098 = vadd.f32 %v3082, %v3036
        %v3099 = vadd.f32 %v3083, %v3037
        %v3100 = vadd.f32 %v3084, %v3038
        %v3101 = vadd.f32 %v3085, %v3039
        %v3102 = vadd.f32 %v3086, %v3040
        %v3103 = vadd.f32 %v3087, %v3041
        %v3104 = vadd.f32 %v3088, %v3042
        %v3105 = vadd.f32 %v3089, %v3043
        %v3106 = vadd.f32 %v3090, %v3044
        %v3107 = vadd.f32 %v3091, %v3045
        %v3108 = vmax.f32 %v3092, 0.0
        %v3109 = vmax.f32 %v3093, 0.0
        %v3110 = vmax.f32 %v3094, 0.0
        %v3111 = vmax.f32 %v3095, 0.0
        %v3112 = vmax.f32 %v3096, 0.0
        %v3113 = vmax.f32 %v3097, 0.0
        %v3114 = vmax.f32 %v3098, 0.0
        %v3115 = vmax.f32 %v3099, 0.0
        %v3116 = vmax.f32 %v3100, 0.0
        %v3117 = vmax.f32 %v3101, 0.0
        %v3118 = vmax.f32 %v3102, 0.0
        %v3119 = vmax.f32 %v3103, 0.0
        %v3120 = vmax.f32 %v3104, 0.0
        %v3121 = vmax.f32 %v3105, 0.0
        %v3122 = vmax.f32 %v3106, 0.0
        %v3123 = vmax.f32 %v3107, 0.0
        %v3124 = vpack.c.bf16 %v3109, %v3108
        %v3125 = vpack.c.bf16 %v3111, %v3110
        %v3126 = vpack.c.bf16 %v3113, %v3112
        %v3127 = vpack.c.bf16 %v3115, %v3114
        %v3128 = vpack.c.bf16 %v3117, %v3116
        %v3129 = vpack.c.bf16 %v3119, %v3118
        %v3130 = vpack.c.bf16 %v3121, %v3120
        %v3131 = vpack.c.bf16 %v3123, %v3122
        %v3140 = vunpack.c.l.b16 %v3124
        %v3141 = vunpack.c.h.b16 %v3124
        %v3142 = vunpack.c.l.b16 %v3125
        %v3143 = vunpack.c.h.b16 %v3125
        %v3144 = vunpack.c.l.b16 %v3126
        %v3145 = vunpack.c.h.b16 %v3126
        %v3146 = vunpack.c.l.b16 %v3127
        %v3147 = vunpack.c.h.b16 %v3127
        %v3148 = vunpack.c.l.b16 %v3128
        %v3149 = vunpack.c.h.b16 %v3128
        %v3150 = vunpack.c.l.b16 %v3129
        %v3151 = vunpack.c.h.b16 %v3129
        %v3152 = vunpack.c.l.b16 %v3130
        %v3153 = vunpack.c.h.b16 %v3130
        %v3154 = vunpack.c.l.b16 %v3131
        %v3155 = vunpack.c.h.b16 %v3131
        %v3156 = vpack.c.b16 %v3140, %v3140
        %v3157 = vpack.c.b16 %v3141, %v3141
        %v3158 = vpack.c.b16 %v3142, %v3142
        %v3159 = vpack.c.b16 %v3143, %v3143
        %v3160 = vpack.c.b16 %v3144, %v3144
        %v3161 = vpack.c.b16 %v3145, %v3145
        %v3162 = vpack.c.b16 %v3146, %v3146
        %v3163 = vpack.c.b16 %v3147, %v3147
        %v3164 = vpack.c.b16 %v3148, %v3148
        %v3165 = vpack.c.b16 %v3149, %v3149
        %v3166 = vpack.c.b16 %v3150, %v3150
        %v3167 = vpack.c.b16 %v3151, %v3151
        %v3168 = vpack.c.b16 %v3152, %v3152
        %v3169 = vpack.c.b16 %v3153, %v3153
        %v3170 = vpack.c.b16 %v3154, %v3154
        %v3171 = vpack.c.b16 %v3155, %v3155
        %3188 = vst [vmem:[%s435] sm:$0xf] %v3156
        %3189 = vst [vmem:[%s435 + $0x4] sm:$0xf] %v3157
        %3190 = vst [vmem:[%s435 + $0x8] sm:$0xf] %v3158
        %3191 = vst [vmem:[%s435 + $0xc] sm:$0xf] %v3159
        %3192 = vst [vmem:[%s435 + $0x10] sm:$0xf] %v3160
        %3193 = vst [vmem:[%s435 + $0x14] sm:$0xf] %v3161
        %3194 = vst [vmem:[%s435 + $0x18] sm:$0xf] %v3162
        %3195 = vst [vmem:[%s435 + $0x1c] sm:$0xf] %v3163
        %3196 = vst [vmem:[%s435 + $0x20] sm:$0xf] %v3164
        %3197 = vst [vmem:[%s435 + $0x24] sm:$0xf] %v3165
        %3198 = vst [vmem:[%s435 + $0x28] sm:$0xf] %v3166
        %3199 = vst [vmem:[%s435 + $0x2c] sm:$0xf] %v3167
        %3200 = vst [vmem:[%s435 + $0x30] sm:$0xf] %v3168
        %3201 = vst [vmem:[%s435 + $0x34] sm:$0xf] %v3169
        %3202 = vst [vmem:[%s435 + $0x38] sm:$0xf] %v3170
        %3203 = vst [vmem:[%s435 + $0x3c] sm:$0xf] %v3171
        %s3204 = sand.u32 %s266, 1
        %s3205 = scalar_lea.sflag [#allocation4], %s3204
        %s3206 = sand.u32 %s266, 1
        %s3207 = smul.addr %s3206, 64
        %s3208 = scalar_lea.vmem [#allocation10], %s3207
        // Predicated region
        $region77: #{tpu_custom_call.1} parent=59 // pred_check
          %p3209 = pneg %p276
        $region78: #{tpu_custom_call.1} parent=59 // pred_check_branch
          %3211 = sbr.rel (%p3209) target = $region80
        $region79: #{tpu_custom_call.1} parent=59 // pred_region
          %s3212 = smul.u32 16, %s34
          %s3214 = ssub.s32 1024, 1024
          %3215 = vsyncadd %s3205, %s3214
          %s3216 = smul.addr %s33, 32
          %s3217 = sadd.s32 %s3212, %s3216
          %s3218 = smul.addr %s3217, 64
          %s3219 = scalar_lea.hbm %s10, %s3218
          %s3220 = sshll.u32 %s3208, 4
          %s3221 = int_to_ptr.vmem [resolvable:$true] %s3220
          %3226 = dma.vmem_to_hbm [thread:$0]  %s3221, 1024, %s3219, %s3205, 64, 64, 4
        $region80: #{tpu_custom_call.1} parent=59 // pred_fallthru
          _
      $region60: #{tpu_custom_call.1} parent=5 // pred_fallthru
        _
      %p3227 = scmp.le.s32.totalorder 2, %s24
      // Predicated region
      $region81: #{tpu_custom_call.1} parent=5 // pred_check
        %p3228 = pneg %p3227
      $region82: #{tpu_custom_call.1} parent=5 // pred_check_branch
        %3230 = sbr.rel (%p3228) target = $region84
      $region83: #{tpu_custom_call.1} parent=5 // pred_region
        %s3231 = ssub.s32 %s24, 2
        // Predicated region
        $region85: #{tpu_custom_call.1} parent=83 // pred_check
          %p3232 = pneg %p282
        $region86: #{tpu_custom_call.1} parent=83 // pred_check_branch
          %3234 = sbr.rel (%p3232) target = $region88
        $region87: #{tpu_custom_call.1} parent=83 // pred_region
          %s3235 = sand.u32 %s267, 1
          %s3236 = scalar_lea.sflag [#allocation4], %s3235
          %s3237 = sand.u32 %s267, 1
          %s3238 = smul.addr %s3237, 64
          %s3239 = scalar_lea.vmem [#allocation10], %s3238
          %3240 = dma.done %s3236, 1024
        $region88: #{tpu_custom_call.1} parent=83 // pred_fallthru
          _
      $region84: #{tpu_custom_call.1} parent=5 // pred_fallthru
        _
    $region6: #{tpu_custom_call.1} parent=1 // loop_footer
      %s28 = sadd.s32 1, %s24
    $region7: #{tpu_custom_call.1} parent=1 // loop_footer_branch
      %23 = sbr.rel target = $region3
    $region8: #{tpu_custom_call.1} parent=1 // loop_exit
      _
    %3241 = vsyncpa [#allocation3], 1
    %s3242 = scalar_lea.sflag [#allocation3], 1
    %3243 = vsyncpa %s3242, 1
    %3244 = vsyncpa [#allocation6], 1
    %3245 = vsyncpa [#allocation9], 1
    %3246 = vsyncpa [#allocation4], 1
    %s3247 = scalar_lea.sflag [#allocation4], 1
    %3248 = vsyncpa %s3247, 1

</llo_original>
